<compile_context>
chip_gen: v6e
topology: v6e:2x2x1
jax: 0.10.0
libtpu: 0.0.40
codegen_flags: <defaults>
</compile_context>

<pallas_src>
import functools

import jax
import jax.numpy as jnp
from jax.experimental import pallas as pl
from jax.experimental.pallas import tpu as pltpu


# --------------------------------------------------------------------------------------
# Kernel 1: tiny, input-independent preamble — concept-memory MLP + norm_concept.
# --------------------------------------------------------------------------------------
def _concept_memory_kernel(cv_ref, w1_ref, b1_ref, w2_ref, b2_ref, w3_ref, b3_ref,
                           w4_ref, b4_ref, out_ref):
    f32 = jnp.float32
    h = cv_ref[...].astype(f32)                                   # (nb*P, bd), block-major rows
    h = jnp.maximum(jnp.dot(h, w1_ref[...], preferred_element_type=f32) + b1_ref[...], 0.0)
    h = jnp.maximum(jnp.dot(h, w2_ref[...], preferred_element_type=f32) + b2_ref[...], 0.0)
    h = jnp.maximum(jnp.dot(h, w3_ref[...], preferred_element_type=f32) + b3_ref[...], 0.0)
    h = jnp.dot(h, w4_ref[...], preferred_element_type=f32) + b4_ref[...]
    # norm_concept == BlockLayerNorm: per-(block, prototype) row LN, no affine, eps=1e-5.
    m = jnp.mean(h, axis=-1, keepdims=True)
    d = h - m
    out_ref[...] = (d * jax.lax.rsqrt(jnp.mean(d * d, axis=-1, keepdims=True) + 1e-5)
                    ).astype(out_ref.dtype)


# --------------------------------------------------------------------------------------
# Kernel 2: fused SysBinder forward — norm_input + to_k/to_v + full refinement loop,
#           one grid step per batch tile (B_T batch elements).
# --------------------------------------------------------------------------------------
def _sysbinder_kernel(x_ref, s0_ref, cm_ref,
                      lnig_ref, lnib_ref,
                      wk_ref, bk_ref, wv_ref, bv_ref,
                      lnsg_ref, lnsb_ref,
                      wq_ref, bq_ref,
                      wih_ref, whh_ref, bih_ref, bhh_ref,
                      w1_ref, b1_ref, w2_ref, b2_ref,
                      slots_ref, attn_ref,
                      *, iters, num_blocks, block_dim, dim, eps):
    f32 = jnp.float32
    mdt = wq_ref.dtype                              # MXU operand dtype (f32 or bf16)
    nb, bd = num_blocks, block_dim
    B_T, n, d_in = x_ref.shape
    ns = s0_ref.shape[1]
    rows = B_T * ns

    # ---------------- fused preamble: norm_input + to_k / to_v (k, v stay on-chip) ------
    x = x_ref[...].reshape(B_T * n, d_in).astype(f32)
    mu = jnp.mean(x, axis=-1, keepdims=True)
    var = jnp.mean(jnp.square(x - mu), axis=-1, keepdims=True)
    xn = ((x - mu) * jax.lax.rsqrt(var + 1e-5) * lnig_ref[...].astype(f32)
          + lnib_ref[...].astype(f32)).astype(mdt)
    k_m = (jnp.dot(xn, wk_ref[...], preferred_element_type=f32)
           + bk_ref[...].astype(f32)).astype(mdt)                 # (B_T*n, dim)
    v_m = (jnp.dot(xn, wv_ref[...], preferred_element_type=f32)
           + bv_ref[...].astype(f32)).astype(mdt)                 # (B_T*n, dim)

    # ---------------- loop-invariant operands (resident across grid steps & iters) ------
    cm = cm_ref[...]                                              # (nb, P, bd), mdt
    ln_g = lnsg_ref[...].astype(f32)
    ln_b = lnsb_ref[...].astype(f32)
    wq = wq_ref[...]
    bq = bq_ref[...].astype(f32)
    wih = wih_ref[...]                                            # (nb, bd, 3*bd) gates [r|z|n]
    whh = whh_ref[...]
    bih = bih_ref[...].astype(f32)                                # (nb, 1, 3*bd)
    bhh = bhh_ref[...].astype(f32)
    w1 = w1_ref[...]                                              # (nb, bd, hid_b)
    b1 = b1_ref[...].astype(f32)                                  # (nb, 1, hid_b)
    w2 = w2_ref[...]                                              # (nb, hid_b, bd)
    b2 = b2_ref[...].astype(f32)                                  # (nb, 1, bd)

    slots_init = s0_ref[...].reshape(rows, dim).astype(f32)

    scale_slot = float(dim) ** -0.5
    scale_blk = float(bd) ** -0.5

    def row_ln(t):  # per-row LayerNorm over the last axis, no affine, eps=1e-5
        m_ = jnp.mean(t, axis=-1, keepdims=True)
        d_ = t - m_
        return d_ * jax.lax.rsqrt(jnp.mean(d_ * d_, axis=-1, keepdims=True) + 1e-5)

    def one_iter(_, carry):
        slots, _attn = carry                                      # slots: (rows, dim) f32

        # ---- norm_slots + to_q (shared-weight matmul on all B_T*ns rows at once) ------
        mu_s = jnp.mean(slots, axis=-1, keepdims=True)
        d_s = slots - mu_s
        sn = d_s * jax.lax.rsqrt(jnp.mean(d_s * d_s, axis=-1, keepdims=True) + 1e-5) \
            * ln_g + ln_b
        q = jnp.dot(sn.astype(mdt), wq, preferred_element_type=f32) + bq     # (rows, dim)

        # ---- slot attention.  Reference: dots (b, n, ns), softmax AND +eps renorm both
        # ---- over dim=1 (the input axis n).  Here dots are (ns, n): reduce over axis -1.
        # ---- Per-batch 2-D dots (B_T is a small static constant; a B_T-batched einsum
        # ---- is equivalent) — no explicit kᵀ transpose (contract last axes).
        attn_list, upd_list = [], []
        for bb in range(B_T):
            q_b = q[bb * ns:(bb + 1) * ns, :].astype(mdt)                     # (ns, dim)
            k_b = k_m[bb * n:(bb + 1) * n, :]                                 # (n, dim)
            v_b = v_m[bb * n:(bb + 1) * n, :]                                 # (n, dim)
            d_b = scale_slot * jax.lax.dot_general(
                q_b, k_b, (((1,), (1,)), ((), ())), preferred_element_type=f32)  # (ns, n)
            d_b = d_b - jnp.max(d_b, axis=-1, keepdims=True)
            e_b = jnp.exp(d_b)
            a_b = e_b / jnp.sum(e_b, axis=-1, keepdims=True) + eps
            a_b = a_b / jnp.sum(a_b, axis=-1, keepdims=True)
            attn_list.append(a_b)
            upd_list.append(jnp.dot(a_b.astype(mdt), v_b,
                                    preferred_element_type=f32))              # (ns, dim)
        attn = jnp.stack(attn_list, axis=0)                                   # (B_T, ns, n)
        upd = jnp.concatenate(upd_list, axis=0)                               # (rows, dim)

        # ---- block-local tail: BlockGRU -> norm_pre_ff -> block MLP (+res) -> norm_bq
        # ---- -> block-wise concept attention.  Per-block bd-wide 2-D matmuls with
        # ---- compressed block-diagonal weights (no dense block-diag, no lane masks).
        new_blocks = []
        for kb in range(nb):
            lo, hi = kb * bd, (kb + 1) * bd
            u_k = upd[:, lo:hi]                                               # (rows, bd)
            h_k = slots[:, lo:hi]                                             # (rows, bd)

            # BlockGRU (GRUCell with block-diagonal gate weights); 3 gates fused per matmul.
            gi = jnp.dot(u_k.astype(mdt), wih[kb], preferred_element_type=f32) + bih[kb]
            gh = jnp.dot(h_k.astype(mdt), whh[kb], preferred_element_type=f32) + bhh[kb]
            r = jax.nn.sigmoid(gi[:, :bd] + gh[:, :bd])
            z = jax.nn.sigmoid(gi[:, bd:2 * bd] + gh[:, bd:2 * bd])
            c = jnp.tanh(gi[:, 2 * bd:] + r * gh[:, 2 * bd:])
            s_k = (1.0 - z) * c + z * h_k                                     # (rows, bd)

            # norm_pre_ff + residual block MLP.
            pre = row_ln(s_k)
            hdd = jnp.maximum(
                jnp.dot(pre.astype(mdt), w1[kb], preferred_element_type=f32) + b1[kb], 0.0)
            s_k = s_k + jnp.dot(hdd.astype(mdt), w2[kb], preferred_element_type=f32) + b2[kb]

            # norm_bq + block-wise attention over concept prototypes (softmax over P).
            sq = row_ln(s_k) * scale_blk
            cm_k = cm[kb]                                                     # (P, bd)
            lg = jax.lax.dot_general(sq.astype(mdt), cm_k,
                                     (((1,), (1,)), ((), ())),
                                     preferred_element_type=f32)              # (rows, P)
            lg = lg - jnp.max(lg, axis=-1, keepdims=True)
            el = jnp.exp(lg)
            aw = el / jnp.sum(el, axis=-1, keepdims=True)
            new_blocks.append(jnp.dot(aw.astype(mdt), cm_k,
                                      preferred_element_type=f32))            # (rows, bd)

        slots_new = jnp.concatenate(new_blocks, axis=-1)                      # (rows, dim)
        return slots_new, attn

    attn0 = jnp.zeros((B_T, ns, n), f32)
    slots_f, attn_f = jax.lax.fori_loop(0, iters, one_iter, (slots_init, attn0))

    slots_ref[...] = slots_f.reshape(B_T, ns, dim).astype(slots_ref.dtype)
    attn_ref[...] = attn_f.astype(attn_ref.dtype)                 # (B_T, ns, n) lane-dense n


# --------------------------------------------------------------------------------------
# Parameter construction (forward semantics identical to the PyTorch module; block-
# structured weights are kept in their compressed per-block form).
# --------------------------------------------------------------------------------------
def init_params(key, in_features, num_blocks, num_prototypes, dim, hidden_dim=128):
    bd = dim // num_blocks
    hid = max(dim, hidden_dim)
    hid_b = hid // num_blocks
    P = num_prototypes
    keys = iter(jax.random.split(key, 64))

    def uni(shape, fan_in):
        bound = 1.0 / (fan_in ** 0.5)
        return jax.random.uniform(next(keys), shape, jnp.float32, -bound, bound)

    p = {}
    p['slots_mu'] = uni((1, 1, dim), dim)
    p['slots_logsigma'] = uni((1, 1, dim), dim) * 0.1

    p['ln_in_g'] = jnp.ones((1, in_features), jnp.float32)
    p['ln_in_b'] = jnp.zeros((1, in_features), jnp.float32)
    p['ln_slots_g'] = jnp.ones((1, dim), jnp.float32)
    p['ln_slots_b'] = jnp.zeros((1, dim), jnp.float32)

    p['to_q_wt'] = uni((dim, dim), dim);                 p['to_q_b'] = uni((1, dim), dim)
    p['to_k_wt'] = uni((in_features, dim), in_features); p['to_k_b'] = uni((1, dim), in_features)
    p['to_v_wt'] = uni((in_features, dim), in_features); p['to_v_b'] = uni((1, dim), in_features)

    # BlockGRU: GRUCell whose per-gate weights are block-diagonal.  Stored compressed:
    # (nb, bd, 3*bd), gates [r|z|n] fused on the per-block output axis.
    p['gru_wih'] = uni((num_blocks, bd, 3 * bd), dim)
    p['gru_whh'] = uni((num_blocks, bd, 3 * bd), dim)
    p['gru_bih'] = uni((num_blocks, 1, 3 * bd), dim)
    p['gru_bhh'] = uni((num_blocks, 1, 3 * bd), dim)

    # MLP of two BlockLinears, compressed per-block weights.
    p['mlp_w1'] = uni((num_blocks, bd, hid_b), bd)
    p['mlp_b1'] = jnp.zeros((num_blocks, 1, hid_b), jnp.float32)
    p['mlp_w2'] = uni((num_blocks, hid_b, bd), hid_b)
    p['mlp_b2'] = jnp.zeros((num_blocks, 1, bd), jnp.float32)

    # Concept prototypes + concept-memory MLP (acts on block_dim features).
    p['concept_vector'] = jax.random.truncated_normal(
        next(keys), -2.0, 2.0, (1, P, num_blocks, bd), jnp.float32)
    p['cm_w1t'] = uni((bd, 4 * bd), bd);          p['cm_b1'] = uni((1, 4 * bd), bd)
    p['cm_w2t'] = uni((4 * bd, 4 * bd), 4 * bd);  p['cm_b2'] = uni((1, 4 * bd), 4 * bd)
    p['cm_w3t'] = uni((4 * bd, 4 * bd), 4 * bd);  p['cm_b3'] = uni((1, 4 * bd), 4 * bd)
    p['cm_w4t'] = uni((4 * bd, bd), 4 * bd);      p['cm_b4'] = uni((1, bd), 4 * bd)
    return p


# --------------------------------------------------------------------------------------
# Forward wrapper.
# --------------------------------------------------------------------------------------
def sysbinder_forward(params, inputs, noise_key, *, num_slots, num_blocks, num_prototypes,
                      dim, iters=3, eps=1e-8, batch_tile=1, mxu_dtype=jnp.float32,
                      vmem_limit_bytes=48 * 1024 * 1024):
    b, n, d_in = inputs.shape
    nb = num_blocks
    bd = dim // nb
    ns = num_slots
    P = num_prototypes
    assert b % batch_tile == 0, "batch_tile must divide the batch"
    B_T = batch_tile  # at real sizes pick B_T so B_T*ns >= 128 (v5e) / >= 256 (v6e/v7x)

    # Slot initialisation: mu + exp(logsigma) * N(0,1)
    # (torch.randn -> jax.random.normal: same distribution, different RNG stream.)
    noise = jax.random.normal(noise_key, (b, ns, dim), dtype=jnp.float32)
    slots0 = params['slots_mu'] + jnp.exp(params['slots_logsigma']) * noise     # (b, ns, dim)

    # ---- tiny, input-independent preamble: concept-memory MLP + norm_concept ----------
    cv = params['concept_vector'].reshape(P, nb, bd)
    cv_bm = jnp.swapaxes(cv, 0, 1).reshape(nb * P, bd)          # block-major rows
    cm_rows = pl.pallas_call(
        _concept_memory_kernel,
        out_shape=jax.ShapeDtypeStruct((nb * P, bd), jnp.float32),
    )(cv_bm, params['cm_w1t'], params['cm_b1'], params['cm_w2t'], params['cm_b2'],
      params['cm_w3t'], params['cm_b3'], params['cm_w4t'], params['cm_b4'])
    cm = cm_rows.reshape(nb, P, bd).astype(mxu_dtype)           # shared across the batch

    # ---- fused main kernel: one grid step per batch tile -------------------------------
    cast = lambda a: a.astype(mxu_dtype)
    args = (inputs, slots0, cm,
            params['ln_in_g'], params['ln_in_b'],
            cast(params['to_k_wt']), params['to_k_b'],
            cast(params['to_v_wt']), params['to_v_b'],
            params['ln_slots_g'], params['ln_slots_b'],
            cast(params['to_q_wt']), params['to_q_b'],
            cast(params['gru_wih']), cast(params['gru_whh']),
            params['gru_bih'], params['gru_bhh'],
            cast(params['mlp_w1']), params['mlp_b1'],
            cast(params['mlp_w2']), params['mlp_b2'])

    def const_spec(a):
        nd = a.ndim
        return pl.BlockSpec(a.shape, lambda i, _nd=nd: (0,) * _nd)

    in_specs = [
        pl.BlockSpec((B_T, n, d_in), lambda i: (i, 0, 0)),      # raw inputs (per batch tile)
        pl.BlockSpec((B_T, ns, dim), lambda i: (i, 0, 0)),      # initial slots
    ] + [const_spec(a) for a in args[2:]]                       # cm + weights: resident

    kern = functools.partial(_sysbinder_kernel, iters=iters, num_blocks=nb,
                             block_dim=bd, dim=dim, eps=eps)

    slots_out, attn_t = pl.pallas_call(
        kern,
        grid=(b // B_T,),
        in_specs=in_specs,
        out_specs=(pl.BlockSpec((B_T, ns, dim), lambda i: (i, 0, 0)),
                   pl.BlockSpec((B_T, ns, n), lambda i: (i, 0, 0))),
        out_shape=(jax.ShapeDtypeStruct((b, ns, dim), jnp.float32),
                   jax.ShapeDtypeStruct((b, ns, n), jnp.float32)),
        compiler_params=pltpu.CompilerParams(
            dimension_semantics=("parallel",),                  # megacore / 2-TC v7x
            vmem_limit_bytes=vmem_limit_bytes),
    )(*args)

    # NOTE: at very large n (>~4k tokens) k/v of one batch tile would need an inner
    # pipeline over n; at typical SysBinder sizes they fit VMEM per tile.
    attn = jnp.swapaxes(attn_t, 1, 2)                           # -> (b, n, ns) PyTorch layout
    return slots_out, attn


# --------------------------------------------------------------------------------------
if __name__ == "__main__":
    in_features = 8
    num_slots = 4
    num_blocks = 4
    num_prototypes = 8
    dim = 32
    iters = 3
    b, n = 2, 16

    key = jax.random.PRNGKey(0)
    pkey, ikey, skey = jax.random.split(key, 3)

    params = init_params(pkey, in_features, num_blocks, num_prototypes, dim)
    inputs = jax.random.normal(ikey, (b, n, in_features), jnp.float32)

    fwd = jax.jit(functools.partial(
        sysbinder_forward, num_slots=num_slots, num_blocks=num_blocks,
        num_prototypes=num_prototypes, dim=dim, iters=iters,
        batch_tile=1,                # grid=(2,): even & >=2 (keeps both v7x TCs busy)
        mxu_dtype=jnp.float32))      # use jnp.bfloat16 at production sizes

    slots, attn = fwd(params, inputs, skey)
    jax.block_until_ready((slots, attn))

    assert slots.shape == (b, num_slots, dim)
    assert attn.shape == (b, n, num_slots)
    assert bool(jnp.isfinite(slots).all()) and bool(jnp.isfinite(attn).all())
    # attn is renormalised over the input axis (dim=1 of (b, n, ns)) exactly as in the
    # reference, so it must sum to 1 over that axis.
    assert bool(jnp.allclose(attn.sum(axis=1), 1.0, atol=1e-3))
    print("KERNEL_OK")
</pallas_src>

<mosaic_0001>
module attributes {stable_mosaic.version = 11 : i64} {
  func.func @_concept_memory_kernel(%arg0: memref<32x8xf32, #tpu.memory_space<vmem>>, %arg1: memref<8x32xf32, #tpu.memory_space<vmem>>, %arg2: memref<1x32xf32, #tpu.memory_space<vmem>>, %arg3: memref<32x32xf32, #tpu.memory_space<vmem>>, %arg4: memref<1x32xf32, #tpu.memory_space<vmem>>, %arg5: memref<32x32xf32, #tpu.memory_space<vmem>>, %arg6: memref<1x32xf32, #tpu.memory_space<vmem>>, %arg7: memref<32x8xf32, #tpu.memory_space<vmem>>, %arg8: memref<1x8xf32, #tpu.memory_space<vmem>>, %arg9: memref<32x8xf32, #tpu.memory_space<vmem>>) attributes {dimension_semantics = [], scalar_prefetch = 0 : i64, scratch_operands = 0 : i64, tpu.core_type = #tpu.core_type<tc>} {
    %c0 = arith.constant 0 : index
    %c0_0 = arith.constant 0 : index
    %0 = vector.load %arg0[%c0, %c0_0] : memref<32x8xf32, #tpu.memory_space<vmem>>, vector<32x8xf32>
    %c0_1 = arith.constant 0 : index
    %c0_2 = arith.constant 0 : index
    %1 = vector.load %arg1[%c0_1, %c0_2] : memref<8x32xf32, #tpu.memory_space<vmem>>, vector<8x32xf32>
    %cst = arith.constant dense<0.000000e+00> : vector<32x32xf32>
    %2 = tpu.matmul %0, %1, %cst {dimension_numbers = #tpu.dot_dimension_numbers<[1], [0], [0], [1], [0, 0, 1, 1], [], []>} : vector<32x8xf32>, vector<8x32xf32>, vector<32x32xf32> -> vector<32x32xf32>
    %c0_3 = arith.constant 0 : index
    %c0_4 = arith.constant 0 : index
    %3 = vector.load %arg2[%c0_3, %c0_4] : memref<1x32xf32, #tpu.memory_space<vmem>>, vector<1x32xf32>
    %4 = vector.broadcast %3 : vector<1x32xf32> to vector<32x32xf32>
    %5 = arith.addf %2, %4 : vector<32x32xf32>
    %cst_5 = arith.constant 0.000000e+00 : f32
    %6 = vector.broadcast %cst_5 : f32 to vector<32x32xf32>
    %7 = arith.maximumf %5, %6 : vector<32x32xf32>
    %c0_6 = arith.constant 0 : index
    %c0_7 = arith.constant 0 : index
    %8 = vector.load %arg3[%c0_6, %c0_7] : memref<32x32xf32, #tpu.memory_space<vmem>>, vector<32x32xf32>
    %cst_8 = arith.constant dense<0.000000e+00> : vector<32x32xf32>
    %9 = tpu.matmul %7, %8, %cst_8 {dimension_numbers = #tpu.dot_dimension_numbers<[1], [0], [0], [1], [0, 0, 1, 1], [], []>} : vector<32x32xf32>, vector<32x32xf32>, vector<32x32xf32> -> vector<32x32xf32>
    %c0_9 = arith.constant 0 : index
    %c0_10 = arith.constant 0 : index
    %10 = vector.load %arg4[%c0_9, %c0_10] : memref<1x32xf32, #tpu.memory_space<vmem>>, vector<1x32xf32>
    %11 = vector.broadcast %10 : vector<1x32xf32> to vector<32x32xf32>
    %12 = arith.addf %9, %11 : vector<32x32xf32>
    %cst_11 = arith.constant 0.000000e+00 : f32
    %13 = vector.broadcast %cst_11 : f32 to vector<32x32xf32>
    %14 = arith.maximumf %12, %13 : vector<32x32xf32>
    %c0_12 = arith.constant 0 : index
    %c0_13 = arith.constant 0 : index
    %15 = vector.load %arg5[%c0_12, %c0_13] : memref<32x32xf32, #tpu.memory_space<vmem>>, vector<32x32xf32>
    %cst_14 = arith.constant dense<0.000000e+00> : vector<32x32xf32>
    %16 = tpu.matmul %14, %15, %cst_14 {dimension_numbers = #tpu.dot_dimension_numbers<[1], [0], [0], [1], [0, 0, 1, 1], [], []>} : vector<32x32xf32>, vector<32x32xf32>, vector<32x32xf32> -> vector<32x32xf32>
    %c0_15 = arith.constant 0 : index
    %c0_16 = arith.constant 0 : index
    %17 = vector.load %arg6[%c0_15, %c0_16] : memref<1x32xf32, #tpu.memory_space<vmem>>, vector<1x32xf32>
    %18 = vector.broadcast %17 : vector<1x32xf32> to vector<32x32xf32>
    %19 = arith.addf %16, %18 : vector<32x32xf32>
    %cst_17 = arith.constant 0.000000e+00 : f32
    %20 = vector.broadcast %cst_17 : f32 to vector<32x32xf32>
    %21 = arith.maximumf %19, %20 : vector<32x32xf32>
    %c0_18 = arith.constant 0 : index
    %c0_19 = arith.constant 0 : index
    %22 = vector.load %arg7[%c0_18, %c0_19] : memref<32x8xf32, #tpu.memory_space<vmem>>, vector<32x8xf32>
    %cst_20 = arith.constant dense<0.000000e+00> : vector<32x8xf32>
    %23 = tpu.matmul %21, %22, %cst_20 {dimension_numbers = #tpu.dot_dimension_numbers<[1], [0], [0], [1], [0, 0, 1, 1], [], []>} : vector<32x32xf32>, vector<32x8xf32>, vector<32x8xf32> -> vector<32x8xf32>
    %c0_21 = arith.constant 0 : index
    %c0_22 = arith.constant 0 : index
    %24 = vector.load %arg8[%c0_21, %c0_22] : memref<1x8xf32, #tpu.memory_space<vmem>>, vector<1x8xf32>
    %25 = vector.broadcast %24 : vector<1x8xf32> to vector<32x8xf32>
    %26 = arith.addf %23, %25 : vector<32x8xf32>
    %cst_23 = arith.constant dense<0.000000e+00> : vector<32xf32>
    %27 = vector.multi_reduction <add>, %26, %cst_23 [1] : vector<32x8xf32> to vector<32xf32>
    %28 = vector.shape_cast %27 : vector<32xf32> to vector<32x1xf32>
    %cst_24 = arith.constant 8.000000e+00 : f32
    %29 = vector.broadcast %cst_24 : f32 to vector<32x1xf32>
    %30 = arith.divf %28, %29 : vector<32x1xf32>
    %31 = vector.broadcast %30 : vector<32x1xf32> to vector<32x8xf32>
    %32 = arith.subf %26, %31 : vector<32x8xf32>
    %33 = arith.mulf %32, %32 : vector<32x8xf32>
    %cst_25 = arith.constant dense<0.000000e+00> : vector<32xf32>
    %34 = vector.multi_reduction <add>, %33, %cst_25 [1] : vector<32x8xf32> to vector<32xf32>
    %35 = vector.shape_cast %34 : vector<32xf32> to vector<32x1xf32>
    %cst_26 = arith.constant 8.000000e+00 : f32
    %36 = vector.broadcast %cst_26 : f32 to vector<32x1xf32>
    %37 = arith.divf %35, %36 : vector<32x1xf32>
    %cst_27 = arith.constant 9.99999974E-6 : f32
    %38 = vector.broadcast %cst_27 : f32 to vector<32x1xf32>
    %39 = arith.addf %37, %38 : vector<32x1xf32>
    %40 = math.rsqrt %39 : vector<32x1xf32>
    %41 = vector.broadcast %40 : vector<32x1xf32> to vector<32x8xf32>
    %42 = arith.mulf %32, %41 : vector<32x8xf32>
    %c0_28 = arith.constant 0 : index
    %c0_29 = arith.constant 0 : index
    %43 = vector.load %arg9[%c0_28, %c0_29] : memref<32x8xf32, #tpu.memory_space<vmem>>, vector<32x8xf32>
    tpu.vector_store %arg9[%c0_28, %c0_29], %42 {strides = array<i32>} : memref<32x8xf32, #tpu.memory_space<vmem>>, vector<32x8xf32>,
    return
  }
}

module attributes {stable_mosaic.version = 11 : i64} {
  func.func @_sysbinder_kernel(%arg0: i32, %arg1: memref<1x16x8xf32, #tpu.memory_space<vmem>>, %arg2: memref<1x4x32xf32, #tpu.memory_space<vmem>>, %arg3: memref<4x8x8xf32, #tpu.memory_space<vmem>>, %arg4: memref<1x8xf32, #tpu.memory_space<vmem>>, %arg5: memref<1x8xf32, #tpu.memory_space<vmem>>, %arg6: memref<8x32xf32, #tpu.memory_space<vmem>>, %arg7: memref<1x32xf32, #tpu.memory_space<vmem>>, %arg8: memref<8x32xf32, #tpu.memory_space<vmem>>, %arg9: memref<1x32xf32, #tpu.memory_space<vmem>>, %arg10: memref<1x32xf32, #tpu.memory_space<vmem>>, %arg11: memref<1x32xf32, #tpu.memory_space<vmem>>, %arg12: memref<32x32xf32, #tpu.memory_space<vmem>>, %arg13: memref<1x32xf32, #tpu.memory_space<vmem>>, %arg14: memref<4x8x24xf32, #tpu.memory_space<vmem>>, %arg15: memref<4x8x24xf32, #tpu.memory_space<vmem>>, %arg16: memref<4x1x24xf32, #tpu.memory_space<vmem>>, %arg17: memref<4x1x24xf32, #tpu.memory_space<vmem>>, %arg18: memref<4x8x32xf32, #tpu.memory_space<vmem>>, %arg19: memref<4x1x32xf32, #tpu.memory_space<vmem>>, %arg20: memref<4x32x8xf32, #tpu.memory_space<vmem>>, %arg21: memref<4x1x8xf32, #tpu.memory_space<vmem>>, %arg22: memref<1x4x32xf32, #tpu.memory_space<vmem>>, %arg23: memref<1x4x16xf32, #tpu.memory_space<vmem>>) attributes {dimension_semantics = [#tpu.dimension_semantics<parallel>], iteration_bounds = array<i64: 2>, scalar_prefetch = 0 : i64, scratch_operands = 0 : i64, tpu.core_type = #tpu.core_type<tc>, window_params = [{transform_indices = @transform_0, window_bounds = array<i64: 1, 16, 8>}, {transform_indices = @transform_1, window_bounds = array<i64: 1, 4, 32>}, {pipeline_mode = #tpu.pipeline_mode<synchronous>, transform_indices = @transform_2, window_bounds = array<i64: 4, 8, 8>}, {pipeline_mode = #tpu.pipeline_mode<synchronous>, transform_indices = @transform_3, window_bounds = array<i64: 1, 8>}, {pipeline_mode = #tpu.pipeline_mode<synchronous>, transform_indices = @transform_4, window_bounds = array<i64: 1, 8>}, {pipeline_mode = #tpu.pipeline_mode<synchronous>, transform_indices = @transform_5, window_bounds = array<i64: 8, 32>}, {pipeline_mode = #tpu.pipeline_mode<synchronous>, transform_indices = @transform_6, window_bounds = array<i64: 1, 32>}, {pipeline_mode = #tpu.pipeline_mode<synchronous>, transform_indices = @transform_7, window_bounds = array<i64: 8, 32>}, {pipeline_mode = #tpu.pipeline_mode<synchronous>, transform_indices = @transform_8, window_bounds = array<i64: 1, 32>}, {pipeline_mode = #tpu.pipeline_mode<synchronous>, transform_indices = @transform_9, window_bounds = array<i64: 1, 32>}, {pipeline_mode = #tpu.pipeline_mode<synchronous>, transform_indices = @transform_10, window_bounds = array<i64: 1, 32>}, {pipeline_mode = #tpu.pipeline_mode<synchronous>, transform_indices = @transform_11, window_bounds = array<i64: 32, 32>}, {pipeline_mode = #tpu.pipeline_mode<synchronous>, transform_indices = @transform_12, window_bounds = array<i64: 1, 32>}, {pipeline_mode = #tpu.pipeline_mode<synchronous>, transform_indices = @transform_13, window_bounds = array<i64: 4, 8, 24>}, {pipeline_mode = #tpu.pipeline_mode<synchronous>, transform_indices = @transform_14, window_bounds = array<i64: 4, 8, 24>}, {pipeline_mode = #tpu.pipeline_mode<synchronous>, transform_indices = @transform_15, window_bounds = array<i64: 4, 1, 24>}, {pipeline_mode = #tpu.pipeline_mode<synchronous>, transform_indices = @transform_16, window_bounds = array<i64: 4, 1, 24>}, {pipeline_mode = #tpu.pipeline_mode<synchronous>, transform_indices = @transform_17, window_bounds = array<i64: 4, 8, 32>}, {pipeline_mode = #tpu.pipeline_mode<synchronous>, transform_indices = @transform_18, window_bounds = array<i64: 4, 1, 32>}, {pipeline_mode = #tpu.pipeline_mode<synchronous>, transform_indices = @transform_19, window_bounds = array<i64: 4, 32, 8>}, {pipeline_mode = #tpu.pipeline_mode<synchronous>, transform_indices = @transform_20, window_bounds = array<i64: 4, 1, 8>}, {transform_indices = @transform_21, window_bounds = array<i64: 1, 4, 32>}, {transform_indices = @transform_22, window_bounds = array<i64: 1, 4, 16>}]} {
    %c0 = arith.constant 0 : index
    %c0_0 = arith.constant 0 : index
    %c0_1 = arith.constant 0 : index
    %0 = vector.load %arg1[%c0, %c0_0, %c0_1] : memref<1x16x8xf32, #tpu.memory_space<vmem>>, vector<1x16x8xf32>
    %1 = vector.shape_cast %0 : vector<1x16x8xf32> to vector<16x8xf32>
    %cst = arith.constant dense<0.000000e+00> : vector<16xf32>
    %2 = vector.multi_reduction <add>, %1, %cst [1] : vector<16x8xf32> to vector<16xf32>
    %3 = vector.shape_cast %2 : vector<16xf32> to vector<16x1xf32>
    %cst_2 = arith.constant 8.000000e+00 : f32
    %4 = vector.broadcast %cst_2 : f32 to vector<16x1xf32>
    %5 = arith.divf %3, %4 : vector<16x1xf32>
    %6 = vector.broadcast %5 : vector<16x1xf32> to vector<16x8xf32>
    %7 = arith.subf %1, %6 : vector<16x8xf32>
    %8 = arith.mulf %7, %7 : vector<16x8xf32>
    %cst_3 = arith.constant dense<0.000000e+00> : vector<16xf32>
    %9 = vector.multi_reduction <add>, %8, %cst_3 [1] : vector<16x8xf32> to vector<16xf32>
    %10 = vector.shape_cast %9 : vector<16xf32> to vector<16x1xf32>
    %cst_4 = arith.constant 8.000000e+00 : f32
    %11 = vector.broadcast %cst_4 : f32 to vector<16x1xf32>
    %12 = arith.divf %10, %11 : vector<16x1xf32>
    %13 = vector.broadcast %5 : vector<16x1xf32> to vector<16x8xf32>
    %14 = arith.subf %1, %13 : vector<16x8xf32>
    %cst_5 = arith.constant 9.99999974E-6 : f32
    %15 = vector.broadcast %cst_5 : f32 to vector<16x1xf32>
    %16 = arith.addf %12, %15 : vector<16x1xf32>
    %17 = math.rsqrt %16 : vector<16x1xf32>
    %18 = vector.broadcast %17 : vector<16x1xf32> to vector<16x8xf32>
    %19 = arith.mulf %14, %18 : vector<16x8xf32>
    %c0_6 = arith.constant 0 : index
    %c0_7 = arith.constant 0 : index
    %20 = vector.load %arg4[%c0_6, %c0_7] : memref<1x8xf32, #tpu.memory_space<vmem>>, vector<1x8xf32>
    %21 = vector.broadcast %20 : vector<1x8xf32> to vector<16x8xf32>
    %22 = arith.mulf %19, %21 : vector<16x8xf32>
    %c0_8 = arith.constant 0 : index
    %c0_9 = arith.constant 0 : index
    %23 = vector.load %arg5[%c0_8, %c0_9] : memref<1x8xf32, #tpu.memory_space<vmem>>, vector<1x8xf32>
    %24 = vector.broadcast %23 : vector<1x8xf32> to vector<16x8xf32>
    %25 = arith.addf %22, %24 : vector<16x8xf32>
    %c0_10 = arith.constant 0 : index
    %c0_11 = arith.constant 0 : index
    %26 = vector.load %arg6[%c0_10, %c0_11] : memref<8x32xf32, #tpu.memory_space<vmem>>, vector<8x32xf32>
    %cst_12 = arith.constant dense<0.000000e+00> : vector<16x32xf32>
    %27 = tpu.matmul %25, %26, %cst_12 {dimension_numbers = #tpu.dot_dimension_numbers<[1], [0], [0], [1], [0, 0, 1, 1], [], []>} : vector<16x8xf32>, vector<8x32xf32>, vector<16x32xf32> -> vector<16x32xf32>
    %c0_13 = arith.constant 0 : index
    %c0_14 = arith.constant 0 : index
    %28 = vector.load %arg7[%c0_13, %c0_14] : memref<1x32xf32, #tpu.memory_space<vmem>>, vector<1x32xf32>
    %29 = vector.broadcast %28 : vector<1x32xf32> to vector<16x32xf32>
    %30 = arith.addf %27, %29 : vector<16x32xf32>
    %c0_15 = arith.constant 0 : index
    %c0_16 = arith.constant 0 : index
    %31 = vector.load %arg8[%c0_15, %c0_16] : memref<8x32xf32, #tpu.memory_space<vmem>>, vector<8x32xf32>
    %cst_17 = arith.constant dense<0.000000e+00> : vector<16x32xf32>
    %32 = tpu.matmul %25, %31, %cst_17 {dimension_numbers = #tpu.dot_dimension_numbers<[1], [0], [0], [1], [0, 0, 1, 1], [], []>} : vector<16x8xf32>, vector<8x32xf32>, vector<16x32xf32> -> vector<16x32xf32>
    %c0_18 = arith.constant 0 : index
    %c0_19 = arith.constant 0 : index
    %33 = vector.load %arg9[%c0_18, %c0_19] : memref<1x32xf32, #tpu.memory_space<vmem>>, vector<1x32xf32>
    %34 = vector.broadcast %33 : vector<1x32xf32> to vector<16x32xf32>
    %35 = arith.addf %32, %34 : vector<16x32xf32>
    %c0_20 = arith.constant 0 : index
    %c0_21 = arith.constant 0 : index
    %c0_22 = arith.constant 0 : index
    %36 = vector.load %arg3[%c0_20, %c0_21, %c0_22] : memref<4x8x8xf32, #tpu.memory_space<vmem>>, vector<4x8x8xf32>
    %c0_23 = arith.constant 0 : index
    %c0_24 = arith.constant 0 : index
    %37 = vector.load %arg10[%c0_23, %c0_24] : memref<1x32xf32, #tpu.memory_space<vmem>>, vector<1x32xf32>
    %c0_25 = arith.constant 0 : index
    %c0_26 = arith.constant 0 : index
    %38 = vector.load %arg11[%c0_25, %c0_26] : memref<1x32xf32, #tpu.memory_space<vmem>>, vector<1x32xf32>
    %c0_27 = arith.constant 0 : index
    %c0_28 = arith.constant 0 : index
    %39 = vector.load %arg12[%c0_27, %c0_28] : memref<32x32xf32, #tpu.memory_space<vmem>>, vector<32x32xf32>
    %c0_29 = arith.constant 0 : index
    %c0_30 = arith.constant 0 : index
    %40 = vector.load %arg13[%c0_29, %c0_30] : memref<1x32xf32, #tpu.memory_space<vmem>>, vector<1x32xf32>
    %c0_31 = arith.constant 0 : index
    %c0_32 = arith.constant 0 : index
    %c0_33 = arith.constant 0 : index
    %41 = vector.load %arg14[%c0_31, %c0_32, %c0_33] : memref<4x8x24xf32, #tpu.memory_space<vmem>>, vector<4x8x24xf32>
    %c0_34 = arith.constant 0 : index
    %c0_35 = arith.constant 0 : index
    %c0_36 = arith.constant 0 : index
    %42 = vector.load %arg15[%c0_34, %c0_35, %c0_36] : memref<4x8x24xf32, #tpu.memory_space<vmem>>, vector<4x8x24xf32>
    %c0_37 = arith.constant 0 : index
    %c0_38 = arith.constant 0 : index
    %c0_39 = arith.constant 0 : index
    %43 = vector.load %arg16[%c0_37, %c0_38, %c0_39] : memref<4x1x24xf32, #tpu.memory_space<vmem>>, vector<4x1x24xf32>
    %c0_40 = arith.constant 0 : index
    %c0_41 = arith.constant 0 : index
    %c0_42 = arith.constant 0 : index
    %44 = vector.load %arg17[%c0_40, %c0_41, %c0_42] : memref<4x1x24xf32, #tpu.memory_space<vmem>>, vector<4x1x24xf32>
    %c0_43 = arith.constant 0 : index
    %c0_44 = arith.constant 0 : index
    %c0_45 = arith.constant 0 : index
    %45 = vector.load %arg18[%c0_43, %c0_44, %c0_45] : memref<4x8x32xf32, #tpu.memory_space<vmem>>, vector<4x8x32xf32>
    %c0_46 = arith.constant 0 : index
    %c0_47 = arith.constant 0 : index
    %c0_48 = arith.constant 0 : index
    %46 = vector.load %arg19[%c0_46, %c0_47, %c0_48] : memref<4x1x32xf32, #tpu.memory_space<vmem>>, vector<4x1x32xf32>
    %c0_49 = arith.constant 0 : index
    %c0_50 = arith.constant 0 : index
    %c0_51 = arith.constant 0 : index
    %47 = vector.load %arg20[%c0_49, %c0_50, %c0_51] : memref<4x32x8xf32, #tpu.memory_space<vmem>>, vector<4x32x8xf32>
    %c0_52 = arith.constant 0 : index
    %c0_53 = arith.constant 0 : index
    %c0_54 = arith.constant 0 : index
    %48 = vector.load %arg21[%c0_52, %c0_53, %c0_54] : memref<4x1x8xf32, #tpu.memory_space<vmem>>, vector<4x1x8xf32>
    %c0_55 = arith.constant 0 : index
    %c0_56 = arith.constant 0 : index
    %c0_57 = arith.constant 0 : index
    %49 = vector.load %arg2[%c0_55, %c0_56, %c0_57] : memref<1x4x32xf32, #tpu.memory_space<vmem>>, vector<1x4x32xf32>
    %50 = vector.shape_cast %49 : vector<1x4x32xf32> to vector<4x32xf32>
    %cst_58 = arith.constant 0.000000e+00 : f32
    %51 = vector.broadcast %cst_58 : f32 to vector<1x4x16xf32>
    %c0_i32 = arith.constant 0 : i32
    %c3_i32 = arith.constant 3 : i32
    %52 = arith.addi %c0_i32, %c3_i32 : i32
    %c1_i32 = arith.constant 1 : i32
    %53:2 = scf.for %arg24 = %c0_i32 to %52 step %c1_i32 iter_args(%arg25 = %50, %arg26 = %51) -> (vector<4x32xf32>, vector<1x4x16xf32>)  : i32 {
      %cst_65 = arith.constant dense<0.000000e+00> : vector<4xf32>
      %57 = vector.multi_reduction <add>, %arg25, %cst_65 [1] : vector<4x32xf32> to vector<4xf32>
      %58 = vector.shape_cast %57 : vector<4xf32> to vector<4x1xf32>
      %cst_66 = arith.constant 3.200000e+01 : f32
      %59 = vector.broadcast %cst_66 : f32 to vector<4x1xf32>
      %60 = arith.divf %58, %59 : vector<4x1xf32>
      %61 = vector.broadcast %60 : vector<4x1xf32> to vector<4x32xf32>
      %62 = arith.subf %arg25, %61 : vector<4x32xf32>
      %63 = arith.mulf %62, %62 : vector<4x32xf32>
      %cst_67 = arith.constant dense<0.000000e+00> : vector<4xf32>
      %64 = vector.multi_reduction <add>, %63, %cst_67 [1] : vector<4x32xf32> to vector<4xf32>
      %65 = vector.shape_cast %64 : vector<4xf32> to vector<4x1xf32>
      %cst_68 = arith.constant 3.200000e+01 : f32
      %66 = vector.broadcast %cst_68 : f32 to vector<4x1xf32>
      %67 = arith.divf %65, %66 : vector<4x1xf32>
      %cst_69 = arith.constant 9.99999974E-6 : f32
      %68 = vector.broadcast %cst_69 : f32 to vector<4x1xf32>
      %69 = arith.addf %67, %68 : vector<4x1xf32>
      %70 = math.rsqrt %69 : vector<4x1xf32>
      %71 = vector.broadcast %70 : vector<4x1xf32> to vector<4x32xf32>
      %72 = arith.mulf %62, %71 : vector<4x32xf32>
      %73 = vector.broadcast %37 : vector<1x32xf32> to vector<4x32xf32>
      %74 = arith.mulf %72, %73 : vector<4x32xf32>
      %75 = vector.broadcast %38 : vector<1x32xf32> to vector<4x32xf32>
      %76 = arith.addf %74, %75 : vector<4x32xf32>
      %cst_70 = arith.constant dense<0.000000e+00> : vector<4x32xf32>
      %77 = tpu.matmul %76, %39, %cst_70 {dimension_numbers = #tpu.dot_dimension_numbers<[1], [0], [0], [1], [0, 0, 1, 1], [], []>} : vector<4x32xf32>, vector<32x32xf32>, vector<4x32xf32> -> vector<4x32xf32>
      %78 = vector.broadcast %40 : vector<1x32xf32> to vector<4x32xf32>
      %79 = arith.addf %77, %78 : vector<4x32xf32>
      %cst_71 = arith.constant dense<0.000000e+00> : vector<4x16xf32>
      %80 = tpu.matmul %79, %30, %cst_71 {dimension_numbers = #tpu.dot_dimension_numbers<[1], [1], [0], [0], [0, 0, 1, 0], [], []>} : vector<4x32xf32>, vector<16x32xf32>, vector<4x16xf32> -> vector<4x16xf32>
      %cst_72 = arith.constant 0.176776692 : f32
      %81 = vector.broadcast %cst_72 : f32 to vector<4x16xf32>
      %82 = arith.mulf %81, %80 : vector<4x16xf32>
      %cst_73 = arith.constant dense<0xFF800000> : vector<4xf32>
      %83 = vector.multi_reduction <maximumf>, %82, %cst_73 [1] : vector<4x16xf32> to vector<4xf32>
      %84 = vector.shape_cast %83 : vector<4xf32> to vector<4x1xf32>
      %85 = vector.broadcast %84 : vector<4x1xf32> to vector<4x16xf32>
      %86 = arith.subf %82, %85 : vector<4x16xf32>
      %87 = math.exp %86 : vector<4x16xf32>
      %cst_74 = arith.constant dense<0.000000e+00> : vector<4xf32>
      %88 = vector.multi_reduction <add>, %87, %cst_74 [1] : vector<4x16xf32> to vector<4xf32>
      %89 = vector.shape_cast %88 : vector<4xf32> to vector<4x1xf32>
      %90 = vector.broadcast %89 : vector<4x1xf32> to vector<4x16xf32>
      %91 = arith.divf %87, %90 : vector<4x16xf32>
      %cst_75 = arith.constant 9.99999993E-9 : f32
      %92 = vector.broadcast %cst_75 : f32 to vector<4x16xf32>
      %93 = arith.addf %91, %92 : vector<4x16xf32>
      %cst_76 = arith.constant dense<0.000000e+00> : vector<4xf32>
      %94 = vector.multi_reduction <add>, %93, %cst_76 [1] : vector<4x16xf32> to vector<4xf32>
      %95 = vector.shape_cast %94 : vector<4xf32> to vector<4x1xf32>
      %96 = vector.broadcast %95 : vector<4x1xf32> to vector<4x16xf32>
      %97 = arith.divf %93, %96 : vector<4x16xf32>
      %cst_77 = arith.constant dense<0.000000e+00> : vector<4x32xf32>
      %98 = tpu.matmul %97, %35, %cst_77 {dimension_numbers = #tpu.dot_dimension_numbers<[1], [0], [0], [1], [0, 0, 1, 1], [], []>} : vector<4x16xf32>, vector<16x32xf32>, vector<4x32xf32> -> vector<4x32xf32>
      %99 = vector.shape_cast %97 : vector<4x16xf32> to vector<1x4x16xf32>
      %100 = vector.extract_strided_slice %98 {offsets = [0, 0], sizes = [4, 8], strides = [1, 1]} : vector<4x32xf32> to vector<4x8xf32>
      %101 = vector.extract_strided_slice %arg25 {offsets = [0, 0], sizes = [4, 8], strides = [1, 1]} : vector<4x32xf32> to vector<4x8xf32>
      %102 = vector.extract_strided_slice %41 {offsets = [0, 0, 0], sizes = [1, 8, 24], strides = [1, 1, 1]} : vector<4x8x24xf32> to vector<1x8x24xf32>
      %103 = vector.shape_cast %102 : vector<1x8x24xf32> to vector<8x24xf32>
      %cst_78 = arith.constant dense<0.000000e+00> : vector<4x24xf32>
      %104 = tpu.matmul %100, %103, %cst_78 {dimension_numbers = #tpu.dot_dimension_numbers<[1], [0], [0], [1], [0, 0, 1, 1], [], []>} : vector<4x8xf32>, vector<8x24xf32>, vector<4x24xf32> -> vector<4x24xf32>
      %105 = vector.extract_strided_slice %43 {offsets = [0, 0, 0], sizes = [1, 1, 24], strides = [1, 1, 1]} : vector<4x1x24xf32> to vector<1x1x24xf32>
      %106 = vector.shape_cast %105 : vector<1x1x24xf32> to vector<1x24xf32>
      %107 = vector.broadcast %106 : vector<1x24xf32> to vector<4x24xf32>
      %108 = arith.addf %104, %107 : vector<4x24xf32>
      %109 = vector.extract_strided_slice %42 {offsets = [0, 0, 0], sizes = [1, 8, 24], strides = [1, 1, 1]} : vector<4x8x24xf32> to vector<1x8x24xf32>
      %110 = vector.shape_cast %109 : vector<1x8x24xf32> to vector<8x24xf32>
      %cst_79 = arith.constant dense<0.000000e+00> : vector<4x24xf32>
      %111 = tpu.matmul %101, %110, %cst_79 {dimension_numbers = #tpu.dot_dimension_numbers<[1], [0], [0], [1], [0, 0, 1, 1], [], []>} : vector<4x8xf32>, vector<8x24xf32>, vector<4x24xf32> -> vector<4x24xf32>
      %112 = vector.extract_strided_slice %44 {offsets = [0, 0, 0], sizes = [1, 1, 24], strides = [1, 1, 1]} : vector<4x1x24xf32> to vector<1x1x24xf32>
      %113 = vector.shape_cast %112 : vector<1x1x24xf32> to vector<1x24xf32>
      %114 = vector.broadcast %113 : vector<1x24xf32> to vector<4x24xf32>
      %115 = arith.addf %111, %114 : vector<4x24xf32>
      %116 = vector.extract_strided_slice %108 {offsets = [0, 0], sizes = [4, 8], strides = [1, 1]} : vector<4x24xf32> to vector<4x8xf32>
      %117 = vector.extract_strided_slice %115 {offsets = [0, 0], sizes = [4, 8], strides = [1, 1]} : vector<4x24xf32> to vector<4x8xf32>
      %118 = arith.addf %116, %117 : vector<4x8xf32>
      %119 = arith.negf %118 : vector<4x8xf32>
      %120 = math.exp %119 : vector<4x8xf32>
      %cst_80 = arith.constant 1.000000e+00 : f32
      %121 = vector.broadcast %cst_80 : f32 to vector<4x8xf32>
      %122 = arith.addf %121, %120 : vector<4x8xf32>
      %123 = arith.divf %121, %122 : vector<4x8xf32>
      %124 = vector.extract_strided_slice %108 {offsets = [0, 8], sizes = [4, 8], strides = [1, 1]} : vector<4x24xf32> to vector<4x8xf32>
      %125 = vector.extract_strided_slice %115 {offsets = [0, 8], sizes = [4, 8], strides = [1, 1]} : vector<4x24xf32> to vector<4x8xf32>
      %126 = arith.addf %124, %125 : vector<4x8xf32>
      %127 = arith.negf %126 : vector<4x8xf32>
      %128 = math.exp %127 : vector<4x8xf32>
      %cst_81 = arith.constant 1.000000e+00 : f32
      %129 = vector.broadcast %cst_81 : f32 to vector<4x8xf32>
      %130 = arith.addf %129, %128 : vector<4x8xf32>
      %131 = arith.divf %129, %130 : vector<4x8xf32>
      %132 = vector.extract_strided_slice %108 {offsets = [0, 16], sizes = [4, 8], strides = [1, 1]} : vector<4x24xf32> to vector<4x8xf32>
      %133 = vector.extract_strided_slice %115 {offsets = [0, 16], sizes = [4, 8], strides = [1, 1]} : vector<4x24xf32> to vector<4x8xf32>
      %134 = arith.mulf %123, %133 : vector<4x8xf32>
      %135 = arith.addf %132, %134 : vector<4x8xf32>
      %136 = math.tanh %135 : vector<4x8xf32>
      %cst_82 = arith.constant 1.000000e+00 : f32
      %137 = vector.broadcast %cst_82 : f32 to vector<4x8xf32>
      %138 = arith.subf %137, %131 : vector<4x8xf32>
      %139 = arith.mulf %138, %136 : vector<4x8xf32>
      %140 = arith.mulf %131, %101 : vector<4x8xf32>
      %141 = arith.addf %139, %140 : vector<4x8xf32>
      %cst_83 = arith.constant dense<0.000000e+00> : vector<4xf32>
      %142 = vector.multi_reduction <add>, %141, %cst_83 [1] : vector<4x8xf32> to vector<4xf32>
      %143 = vector.shape_cast %142 : vector<4xf32> to vector<4x1xf32>
      %cst_84 = arith.constant 8.000000e+00 : f32
      %144 = vector.broadcast %cst_84 : f32 to vector<4x1xf32>
      %145 = arith.divf %143, %144 : vector<4x1xf32>
      %146 = vector.broadcast %145 : vector<4x1xf32> to vector<4x8xf32>
      %147 = arith.subf %141, %146 : vector<4x8xf32>
      %148 = arith.mulf %147, %147 : vector<4x8xf32>
      %cst_85 = arith.constant dense<0.000000e+00> : vector<4xf32>
      %149 = vector.multi_reduction <add>, %148, %cst_85 [1] : vector<4x8xf32> to vector<4xf32>
      %150 = vector.shape_cast %149 : vector<4xf32> to vector<4x1xf32>
      %cst_86 = arith.constant 8.000000e+00 : f32
      %151 = vector.broadcast %cst_86 : f32 to vector<4x1xf32>
      %152 = arith.divf %150, %151 : vector<4x1xf32>
      %cst_87 = arith.constant 9.99999974E-6 : f32
      %153 = vector.broadcast %cst_87 : f32 to vector<4x1xf32>
      %154 = arith.addf %152, %153 : vector<4x1xf32>
      %155 = math.rsqrt %154 : vector<4x1xf32>
      %156 = vector.broadcast %155 : vector<4x1xf32> to vector<4x8xf32>
      %157 = arith.mulf %147, %156 : vector<4x8xf32>
      %158 = vector.extract_strided_slice %45 {offsets = [0, 0, 0], sizes = [1, 8, 32], strides = [1, 1, 1]} : vector<4x8x32xf32> to vector<1x8x32xf32>
      %159 = vector.shape_cast %158 : vector<1x8x32xf32> to vector<8x32xf32>
      %cst_88 = arith.constant dense<0.000000e+00> : vector<4x32xf32>
      %160 = tpu.matmul %157, %159, %cst_88 {dimension_numbers = #tpu.dot_dimension_numbers<[1], [0], [0], [1], [0, 0, 1, 1], [], []>} : vector<4x8xf32>, vector<8x32xf32>, vector<4x32xf32> -> vector<4x32xf32>
      %161 = vector.extract_strided_slice %46 {offsets = [0, 0, 0], sizes = [1, 1, 32], strides = [1, 1, 1]} : vector<4x1x32xf32> to vector<1x1x32xf32>
      %162 = vector.shape_cast %161 : vector<1x1x32xf32> to vector<1x32xf32>
      %163 = vector.broadcast %162 : vector<1x32xf32> to vector<4x32xf32>
      %164 = arith.addf %160, %163 : vector<4x32xf32>
      %cst_89 = arith.constant 0.000000e+00 : f32
      %165 = vector.broadcast %cst_89 : f32 to vector<4x32xf32>
      %166 = arith.maximumf %164, %165 : vector<4x32xf32>
      %167 = vector.extract_strided_slice %47 {offsets = [0, 0, 0], sizes = [1, 32, 8], strides = [1, 1, 1]} : vector<4x32x8xf32> to vector<1x32x8xf32>
      %168 = vector.shape_cast %167 : vector<1x32x8xf32> to vector<32x8xf32>
      %cst_90 = arith.constant dense<0.000000e+00> : vector<4x8xf32>
      %169 = tpu.matmul %166, %168, %cst_90 {dimension_numbers = #tpu.dot_dimension_numbers<[1], [0], [0], [1], [0, 0, 1, 1], [], []>} : vector<4x32xf32>, vector<32x8xf32>, vector<4x8xf32> -> vector<4x8xf32>
      %170 = arith.addf %141, %169 : vector<4x8xf32>
      %171 = vector.extract_strided_slice %48 {offsets = [0, 0, 0], sizes = [1, 1, 8], strides = [1, 1, 1]} : vector<4x1x8xf32> to vector<1x1x8xf32>
      %172 = vector.shape_cast %171 : vector<1x1x8xf32> to vector<1x8xf32>
      %173 = vector.broadcast %172 : vector<1x8xf32> to vector<4x8xf32>
      %174 = arith.addf %170, %173 : vector<4x8xf32>
      %cst_91 = arith.constant dense<0.000000e+00> : vector<4xf32>
      %175 = vector.multi_reduction <add>, %174, %cst_91 [1] : vector<4x8xf32> to vector<4xf32>
      %176 = vector.shape_cast %175 : vector<4xf32> to vector<4x1xf32>
      %cst_92 = arith.constant 8.000000e+00 : f32
      %177 = vector.broadcast %cst_92 : f32 to vector<4x1xf32>
      %178 = arith.divf %176, %177 : vector<4x1xf32>
      %179 = vector.broadcast %178 : vector<4x1xf32> to vector<4x8xf32>
      %180 = arith.subf %174, %179 : vector<4x8xf32>
      %181 = arith.mulf %180, %180 : vector<4x8xf32>
      %cst_93 = arith.constant dense<0.000000e+00> : vector<4xf32>
      %182 = vector.multi_reduction <add>, %181, %cst_93 [1] : vector<4x8xf32> to vector<4xf32>
      %183 = vector.shape_cast %182 : vector<4xf32> to vector<4x1xf32>
      %cst_94 = arith.constant 8.000000e+00 : f32
      %184 = vector.broadcast %cst_94 : f32 to vector<4x1xf32>
      %185 = arith.divf %183, %184 : vector<4x1xf32>
      %cst_95 = arith.constant 9.99999974E-6 : f32
      %186 = vector.broadcast %cst_95 : f32 to vector<4x1xf32>
      %187 = arith.addf %185, %186 : vector<4x1xf32>
      %188 = math.rsqrt %187 : vector<4x1xf32>
      %189 = vector.broadcast %188 : vector<4x1xf32> to vector<4x8xf32>
      %190 = arith.mulf %180, %189 : vector<4x8xf32>
      %cst_96 = arith.constant 0.353553385 : f32
      %191 = vector.broadcast %cst_96 : f32 to vector<4x8xf32>
      %192 = arith.mulf %190, %191 : vector<4x8xf32>
      %193 = vector.extract_strided_slice %36 {offsets = [0, 0, 0], sizes = [1, 8, 8], strides = [1, 1, 1]} : vector<4x8x8xf32> to vector<1x8x8xf32>
      %194 = vector.shape_cast %193 : vector<1x8x8xf32> to vector<8x8xf32>
      %cst_97 = arith.constant dense<0.000000e+00> : vector<4x8xf32>
      %195 = tpu.matmul %192, %194, %cst_97 {dimension_numbers = #tpu.dot_dimension_numbers<[1], [1], [0], [0], [0, 0, 1, 0], [], []>} : vector<4x8xf32>, vector<8x8xf32>, vector<4x8xf32> -> vector<4x8xf32>
      %cst_98 = arith.constant dense<0xFF800000> : vector<4xf32>
      %196 = vector.multi_reduction <maximumf>, %195, %cst_98 [1] : vector<4x8xf32> to vector<4xf32>
      %197 = vector.shape_cast %196 : vector<4xf32> to vector<4x1xf32>
      %198 = vector.broadcast %197 : vector<4x1xf32> to vector<4x8xf32>
      %199 = arith.subf %195, %198 : vector<4x8xf32>
      %200 = math.exp %199 : vector<4x8xf32>
      %cst_99 = arith.constant dense<0.000000e+00> : vector<4xf32>
      %201 = vector.multi_reduction <add>, %200, %cst_99 [1] : vector<4x8xf32> to vector<4xf32>
      %202 = vector.shape_cast %201 : vector<4xf32> to vector<4x1xf32>
      %203 = vector.broadcast %202 : vector<4x1xf32> to vector<4x8xf32>
      %204 = arith.divf %200, %203 : vector<4x8xf32>
      %cst_100 = arith.constant dense<0.000000e+00> : vector<4x8xf32>
      %205 = tpu.matmul %204, %194, %cst_100 {dimension_numbers = #tpu.dot_dimension_numbers<[1], [0], [0], [1], [0, 0, 1, 1], [], []>} : vector<4x8xf32>, vector<8x8xf32>, vector<4x8xf32> -> vector<4x8xf32>
      %206 = vector.extract_strided_slice %98 {offsets = [0, 8], sizes = [4, 8], strides = [1, 1]} : vector<4x32xf32> to vector<4x8xf32>
      %207 = vector.extract_strided_slice %arg25 {offsets = [0, 8], sizes = [4, 8], strides = [1, 1]} : vector<4x32xf32> to vector<4x8xf32>
      %208 = vector.extract_strided_slice %41 {offsets = [1, 0, 0], sizes = [1, 8, 24], strides = [1, 1, 1]} : vector<4x8x24xf32> to vector<1x8x24xf32>
      %209 = vector.shape_cast %208 : vector<1x8x24xf32> to vector<8x24xf32>
      %cst_101 = arith.constant dense<0.000000e+00> : vector<4x24xf32>
      %210 = tpu.matmul %206, %209, %cst_101 {dimension_numbers = #tpu.dot_dimension_numbers<[1], [0], [0], [1], [0, 0, 1, 1], [], []>} : vector<4x8xf32>, vector<8x24xf32>, vector<4x24xf32> -> vector<4x24xf32>
      %211 = vector.extract_strided_slice %43 {offsets = [1, 0, 0], sizes = [1, 1, 24], strides = [1, 1, 1]} : vector<4x1x24xf32> to vector<1x1x24xf32>
      %212 = vector.shape_cast %211 : vector<1x1x24xf32> to vector<1x24xf32>
      %213 = vector.broadcast %212 : vector<1x24xf32> to vector<4x24xf32>
      %214 = arith.addf %210, %213 : vector<4x24xf32>
      %215 = vector.extract_strided_slice %42 {offsets = [1, 0, 0], sizes = [1, 8, 24], strides = [1, 1, 1]} : vector<4x8x24xf32> to vector<1x8x24xf32>
      %216 = vector.shape_cast %215 : vector<1x8x24xf32> to vector<8x24xf32>
      %cst_102 = arith.constant dense<0.000000e+00> : vector<4x24xf32>
      %217 = tpu.matmul %207, %216, %cst_102 {dimension_numbers = #tpu.dot_dimension_numbers<[1], [0], [0], [1], [0, 0, 1, 1], [], []>} : vector<4x8xf32>, vector<8x24xf32>, vector<4x24xf32> -> vector<4x24xf32>
      %218 = vector.extract_strided_slice %44 {offsets = [1, 0, 0], sizes = [1, 1, 24], strides = [1, 1, 1]} : vector<4x1x24xf32> to vector<1x1x24xf32>
      %219 = vector.shape_cast %218 : vector<1x1x24xf32> to vector<1x24xf32>
      %220 = vector.broadcast %219 : vector<1x24xf32> to vector<4x24xf32>
      %221 = arith.addf %217, %220 : vector<4x24xf32>
      %222 = vector.extract_strided_slice %214 {offsets = [0, 0], sizes = [4, 8], strides = [1, 1]} : vector<4x24xf32> to vector<4x8xf32>
      %223 = vector.extract_strided_slice %221 {offsets = [0, 0], sizes = [4, 8], strides = [1, 1]} : vector<4x24xf32> to vector<4x8xf32>
      %224 = arith.addf %222, %223 : vector<4x8xf32>
      %225 = arith.negf %224 : vector<4x8xf32>
      %226 = math.exp %225 : vector<4x8xf32>
      %cst_103 = arith.constant 1.000000e+00 : f32
      %227 = vector.broadcast %cst_103 : f32 to vector<4x8xf32>
      %228 = arith.addf %227, %226 : vector<4x8xf32>
      %229 = arith.divf %227, %228 : vector<4x8xf32>
      %230 = vector.extract_strided_slice %214 {offsets = [0, 8], sizes = [4, 8], strides = [1, 1]} : vector<4x24xf32> to vector<4x8xf32>
      %231 = vector.extract_strided_slice %221 {offsets = [0, 8], sizes = [4, 8], strides = [1, 1]} : vector<4x24xf32> to vector<4x8xf32>
      %232 = arith.addf %230, %231 : vector<4x8xf32>
      %233 = arith.negf %232 : vector<4x8xf32>
      %234 = math.exp %233 : vector<4x8xf32>
      %cst_104 = arith.constant 1.000000e+00 : f32
      %235 = vector.broadcast %cst_104 : f32 to vector<4x8xf32>
      %236 = arith.addf %235, %234 : vector<4x8xf32>
      %237 = arith.divf %235, %236 : vector<4x8xf32>
      %238 = vector.extract_strided_slice %214 {offsets = [0, 16], sizes = [4, 8], strides = [1, 1]} : vector<4x24xf32> to vector<4x8xf32>
      %239 = vector.extract_strided_slice %221 {offsets = [0, 16], sizes = [4, 8], strides = [1, 1]} : vector<4x24xf32> to vector<4x8xf32>
      %240 = arith.mulf %229, %239 : vector<4x8xf32>
      %241 = arith.addf %238, %240 : vector<4x8xf32>
      %242 = math.tanh %241 : vector<4x8xf32>
      %cst_105 = arith.constant 1.000000e+00 : f32
      %243 = vector.broadcast %cst_105 : f32 to vector<4x8xf32>
      %244 = arith.subf %243, %237 : vector<4x8xf32>
      %245 = arith.mulf %244, %242 : vector<4x8xf32>
      %246 = arith.mulf %237, %207 : vector<4x8xf32>
      %247 = arith.addf %245, %246 : vector<4x8xf32>
      %cst_106 = arith.constant dense<0.000000e+00> : vector<4xf32>
      %248 = vector.multi_reduction <add>, %247, %cst_106 [1] : vector<4x8xf32> to vector<4xf32>
      %249 = vector.shape_cast %248 : vector<4xf32> to vector<4x1xf32>
      %cst_107 = arith.constant 8.000000e+00 : f32
      %250 = vector.broadcast %cst_107 : f32 to vector<4x1xf32>
      %251 = arith.divf %249, %250 : vector<4x1xf32>
      %252 = vector.broadcast %251 : vector<4x1xf32> to vector<4x8xf32>
      %253 = arith.subf %247, %252 : vector<4x8xf32>
      %254 = arith.mulf %253, %253 : vector<4x8xf32>
      %cst_108 = arith.constant dense<0.000000e+00> : vector<4xf32>
      %255 = vector.multi_reduction <add>, %254, %cst_108 [1] : vector<4x8xf32> to vector<4xf32>
      %256 = vector.shape_cast %255 : vector<4xf32> to vector<4x1xf32>
      %cst_109 = arith.constant 8.000000e+00 : f32
      %257 = vector.broadcast %cst_109 : f32 to vector<4x1xf32>
      %258 = arith.divf %256, %257 : vector<4x1xf32>
      %cst_110 = arith.constant 9.99999974E-6 : f32
      %259 = vector.broadcast %cst_110 : f32 to vector<4x1xf32>
      %260 = arith.addf %258, %259 : vector<4x1xf32>
      %261 = math.rsqrt %260 : vector<4x1xf32>
      %262 = vector.broadcast %261 : vector<4x1xf32> to vector<4x8xf32>
      %263 = arith.mulf %253, %262 : vector<4x8xf32>
      %264 = vector.extract_strided_slice %45 {offsets = [1, 0, 0], sizes = [1, 8, 32], strides = [1, 1, 1]} : vector<4x8x32xf32> to vector<1x8x32xf32>
      %265 = vector.shape_cast %264 : vector<1x8x32xf32> to vector<8x32xf32>
      %cst_111 = arith.constant dense<0.000000e+00> : vector<4x32xf32>
      %266 = tpu.matmul %263, %265, %cst_111 {dimension_numbers = #tpu.dot_dimension_numbers<[1], [0], [0], [1], [0, 0, 1, 1], [], []>} : vector<4x8xf32>, vector<8x32xf32>, vector<4x32xf32> -> vector<4x32xf32>
      %267 = vector.extract_strided_slice %46 {offsets = [1, 0, 0], sizes = [1, 1, 32], strides = [1, 1, 1]} : vector<4x1x32xf32> to vector<1x1x32xf32>
      %268 = vector.shape_cast %267 : vector<1x1x32xf32> to vector<1x32xf32>
      %269 = vector.broadcast %268 : vector<1x32xf32> to vector<4x32xf32>
      %270 = arith.addf %266, %269 : vector<4x32xf32>
      %cst_112 = arith.constant 0.000000e+00 : f32
      %271 = vector.broadcast %cst_112 : f32 to vector<4x32xf32>
      %272 = arith.maximumf %270, %271 : vector<4x32xf32>
      %273 = vector.extract_strided_slice %47 {offsets = [1, 0, 0], sizes = [1, 32, 8], strides = [1, 1, 1]} : vector<4x32x8xf32> to vector<1x32x8xf32>
      %274 = vector.shape_cast %273 : vector<1x32x8xf32> to vector<32x8xf32>
      %cst_113 = arith.constant dense<0.000000e+00> : vector<4x8xf32>
      %275 = tpu.matmul %272, %274, %cst_113 {dimension_numbers = #tpu.dot_dimension_numbers<[1], [0], [0], [1], [0, 0, 1, 1], [], []>} : vector<4x32xf32>, vector<32x8xf32>, vector<4x8xf32> -> vector<4x8xf32>
      %276 = arith.addf %247, %275 : vector<4x8xf32>
      %277 = vector.extract_strided_slice %48 {offsets = [1, 0, 0], sizes = [1, 1, 8], strides = [1, 1, 1]} : vector<4x1x8xf32> to vector<1x1x8xf32>
      %278 = vector.shape_cast %277 : vector<1x1x8xf32> to vector<1x8xf32>
      %279 = vector.broadcast %278 : vector<1x8xf32> to vector<4x8xf32>
      %280 = arith.addf %276, %279 : vector<4x8xf32>
      %cst_114 = arith.constant dense<0.000000e+00> : vector<4xf32>
      %281 = vector.multi_reduction <add>, %280, %cst_114 [1] : vector<4x8xf32> to vector<4xf32>
      %282 = vector.shape_cast %281 : vector<4xf32> to vector<4x1xf32>
      %cst_115 = arith.constant 8.000000e+00 : f32
      %283 = vector.broadcast %cst_115 : f32 to vector<4x1xf32>
      %284 = arith.divf %282, %283 : vector<4x1xf32>
      %285 = vector.broadcast %284 : vector<4x1xf32> to vector<4x8xf32>
      %286 = arith.subf %280, %285 : vector<4x8xf32>
      %287 = arith.mulf %286, %286 : vector<4x8xf32>
      %cst_116 = arith.constant dense<0.000000e+00> : vector<4xf32>
      %288 = vector.multi_reduction <add>, %287, %cst_116 [1] : vector<4x8xf32> to vector<4xf32>
      %289 = vector.shape_cast %288 : vector<4xf32> to vector<4x1xf32>
      %cst_117 = arith.constant 8.000000e+00 : f32
      %290 = vector.broadcast %cst_117 : f32 to vector<4x1xf32>
      %291 = arith.divf %289, %290 : vector<4x1xf32>
      %cst_118 = arith.constant 9.99999974E-6 : f32
      %292 = vector.broadcast %cst_118 : f32 to vector<4x1xf32>
      %293 = arith.addf %291, %292 : vector<4x1xf32>
      %294 = math.rsqrt %293 : vector<4x1xf32>
      %295 = vector.broadcast %294 : vector<4x1xf32> to vector<4x8xf32>
      %296 = arith.mulf %286, %295 : vector<4x8xf32>
      %cst_119 = arith.constant 0.353553385 : f32
      %297 = vector.broadcast %cst_119 : f32 to vector<4x8xf32>
      %298 = arith.mulf %296, %297 : vector<4x8xf32>
      %299 = vector.extract_strided_slice %36 {offsets = [1, 0, 0], sizes = [1, 8, 8], strides = [1, 1, 1]} : vector<4x8x8xf32> to vector<1x8x8xf32>
      %300 = vector.shape_cast %299 : vector<1x8x8xf32> to vector<8x8xf32>
      %cst_120 = arith.constant dense<0.000000e+00> : vector<4x8xf32>
      %301 = tpu.matmul %298, %300, %cst_120 {dimension_numbers = #tpu.dot_dimension_numbers<[1], [1], [0], [0], [0, 0, 1, 0], [], []>} : vector<4x8xf32>, vector<8x8xf32>, vector<4x8xf32> -> vector<4x8xf32>
      %cst_121 = arith.constant dense<0xFF800000> : vector<4xf32>
      %302 = vector.multi_reduction <maximumf>, %301, %cst_121 [1] : vector<4x8xf32> to vector<4xf32>
      %303 = vector.shape_cast %302 : vector<4xf32> to vector<4x1xf32>
      %304 = vector.broadcast %303 : vector<4x1xf32> to vector<4x8xf32>
      %305 = arith.subf %301, %304 : vector<4x8xf32>
      %306 = math.exp %305 : vector<4x8xf32>
      %cst_122 = arith.constant dense<0.000000e+00> : vector<4xf32>
      %307 = vector.multi_reduction <add>, %306, %cst_122 [1] : vector<4x8xf32> to vector<4xf32>
      %308 = vector.shape_cast %307 : vector<4xf32> to vector<4x1xf32>
      %309 = vector.broadcast %308 : vector<4x1xf32> to vector<4x8xf32>
      %310 = arith.divf %306, %309 : vector<4x8xf32>
      %cst_123 = arith.constant dense<0.000000e+00> : vector<4x8xf32>
      %311 = tpu.matmul %310, %300, %cst_123 {dimension_numbers = #tpu.dot_dimension_numbers<[1], [0], [0], [1], [0, 0, 1, 1], [], []>} : vector<4x8xf32>, vector<8x8xf32>, vector<4x8xf32> -> vector<4x8xf32>
      %312 = vector.extract_strided_slice %98 {offsets = [0, 16], sizes = [4, 8], strides = [1, 1]} : vector<4x32xf32> to vector<4x8xf32>
      %313 = vector.extract_strided_slice %arg25 {offsets = [0, 16], sizes = [4, 8], strides = [1, 1]} : vector<4x32xf32> to vector<4x8xf32>
      %314 = vector.extract_strided_slice %41 {offsets = [2, 0, 0], sizes = [1, 8, 24], strides = [1, 1, 1]} : vector<4x8x24xf32> to vector<1x8x24xf32>
      %315 = vector.shape_cast %314 : vector<1x8x24xf32> to vector<8x24xf32>
      %cst_124 = arith.constant dense<0.000000e+00> : vector<4x24xf32>
      %316 = tpu.matmul %312, %315, %cst_124 {dimension_numbers = #tpu.dot_dimension_numbers<[1], [0], [0], [1], [0, 0, 1, 1], [], []>} : vector<4x8xf32>, vector<8x24xf32>, vector<4x24xf32> -> vector<4x24xf32>
      %317 = vector.extract_strided_slice %43 {offsets = [2, 0, 0], sizes = [1, 1, 24], strides = [1, 1, 1]} : vector<4x1x24xf32> to vector<1x1x24xf32>
      %318 = vector.shape_cast %317 : vector<1x1x24xf32> to vector<1x24xf32>
      %319 = vector.broadcast %318 : vector<1x24xf32> to vector<4x24xf32>
      %320 = arith.addf %316, %319 : vector<4x24xf32>
      %321 = vector.extract_strided_slice %42 {offsets = [2, 0, 0], sizes = [1, 8, 24], strides = [1, 1, 1]} : vector<4x8x24xf32> to vector<1x8x24xf32>
      %322 = vector.shape_cast %321 : vector<1x8x24xf32> to vector<8x24xf32>
      %cst_125 = arith.constant dense<0.000000e+00> : vector<4x24xf32>
      %323 = tpu.matmul %313, %322, %cst_125 {dimension_numbers = #tpu.dot_dimension_numbers<[1], [0], [0], [1], [0, 0, 1, 1], [], []>} : vector<4x8xf32>, vector<8x24xf32>, vector<4x24xf32> -> vector<4x24xf32>
      %324 = vector.extract_strided_slice %44 {offsets = [2, 0, 0], sizes = [1, 1, 24], strides = [1, 1, 1]} : vector<4x1x24xf32> to vector<1x1x24xf32>
      %325 = vector.shape_cast %324 : vector<1x1x24xf32> to vector<1x24xf32>
      %326 = vector.broadcast %325 : vector<1x24xf32> to vector<4x24xf32>
      %327 = arith.addf %323, %326 : vector<4x24xf32>
      %328 = vector.extract_strided_slice %320 {offsets = [0, 0], sizes = [4, 8], strides = [1, 1]} : vector<4x24xf32> to vector<4x8xf32>
      %329 = vector.extract_strided_slice %327 {offsets = [0, 0], sizes = [4, 8], strides = [1, 1]} : vector<4x24xf32> to vector<4x8xf32>
      %330 = arith.addf %328, %329 : vector<4x8xf32>
      %331 = arith.negf %330 : vector<4x8xf32>
      %332 = math.exp %331 : vector<4x8xf32>
      %cst_126 = arith.constant 1.000000e+00 : f32
      %333 = vector.broadcast %cst_126 : f32 to vector<4x8xf32>
      %334 = arith.addf %333, %332 : vector<4x8xf32>
      %335 = arith.divf %333, %334 : vector<4x8xf32>
      %336 = vector.extract_strided_slice %320 {offsets = [0, 8], sizes = [4, 8], strides = [1, 1]} : vector<4x24xf32> to vector<4x8xf32>
      %337 = vector.extract_strided_slice %327 {offsets = [0, 8], sizes = [4, 8], strides = [1, 1]} : vector<4x24xf32> to vector<4x8xf32>
      %338 = arith.addf %336, %337 : vector<4x8xf32>
      %339 = arith.negf %338 : vector<4x8xf32>
      %340 = math.exp %339 : vector<4x8xf32>
      %cst_127 = arith.constant 1.000000e+00 : f32
      %341 = vector.broadcast %cst_127 : f32 to vector<4x8xf32>
      %342 = arith.addf %341, %340 : vector<4x8xf32>
      %343 = arith.divf %341, %342 : vector<4x8xf32>
      %344 = vector.extract_strided_slice %320 {offsets = [0, 16], sizes = [4, 8], strides = [1, 1]} : vector<4x24xf32> to vector<4x8xf32>
      %345 = vector.extract_strided_slice %327 {offsets = [0, 16], sizes = [4, 8], strides = [1, 1]} : vector<4x24xf32> to vector<4x8xf32>
      %346 = arith.mulf %335, %345 : vector<4x8xf32>
      %347 = arith.addf %344, %346 : vector<4x8xf32>
      %348 = math.tanh %347 : vector<4x8xf32>
      %cst_128 = arith.constant 1.000000e+00 : f32
      %349 = vector.broadcast %cst_128 : f32 to vector<4x8xf32>
      %350 = arith.subf %349, %343 : vector<4x8xf32>
      %351 = arith.mulf %350, %348 : vector<4x8xf32>
      %352 = arith.mulf %343, %313 : vector<4x8xf32>
      %353 = arith.addf %351, %352 : vector<4x8xf32>
      %cst_129 = arith.constant dense<0.000000e+00> : vector<4xf32>
      %354 = vector.multi_reduction <add>, %353, %cst_129 [1] : vector<4x8xf32> to vector<4xf32>
      %355 = vector.shape_cast %354 : vector<4xf32> to vector<4x1xf32>
      %cst_130 = arith.constant 8.000000e+00 : f32
      %356 = vector.broadcast %cst_130 : f32 to vector<4x1xf32>
      %357 = arith.divf %355, %356 : vector<4x1xf32>
      %358 = vector.broadcast %357 : vector<4x1xf32> to vector<4x8xf32>
      %359 = arith.subf %353, %358 : vector<4x8xf32>
      %360 = arith.mulf %359, %359 : vector<4x8xf32>
      %cst_131 = arith.constant dense<0.000000e+00> : vector<4xf32>
      %361 = vector.multi_reduction <add>, %360, %cst_131 [1] : vector<4x8xf32> to vector<4xf32>
      %362 = vector.shape_cast %361 : vector<4xf32> to vector<4x1xf32>
      %cst_132 = arith.constant 8.000000e+00 : f32
      %363 = vector.broadcast %cst_132 : f32 to vector<4x1xf32>
      %364 = arith.divf %362, %363 : vector<4x1xf32>
      %cst_133 = arith.constant 9.99999974E-6 : f32
      %365 = vector.broadcast %cst_133 : f32 to vector<4x1xf32>
      %366 = arith.addf %364, %365 : vector<4x1xf32>
      %367 = math.rsqrt %366 : vector<4x1xf32>
      %368 = vector.broadcast %367 : vector<4x1xf32> to vector<4x8xf32>
      %369 = arith.mulf %359, %368 : vector<4x8xf32>
      %370 = vector.extract_strided_slice %45 {offsets = [2, 0, 0], sizes = [1, 8, 32], strides = [1, 1, 1]} : vector<4x8x32xf32> to vector<1x8x32xf32>
      %371 = vector.shape_cast %370 : vector<1x8x32xf32> to vector<8x32xf32>
      %cst_134 = arith.constant dense<0.000000e+00> : vector<4x32xf32>
      %372 = tpu.matmul %369, %371, %cst_134 {dimension_numbers = #tpu.dot_dimension_numbers<[1], [0], [0], [1], [0, 0, 1, 1], [], []>} : vector<4x8xf32>, vector<8x32xf32>, vector<4x32xf32> -> vector<4x32xf32>
      %373 = vector.extract_strided_slice %46 {offsets = [2, 0, 0], sizes = [1, 1, 32], strides = [1, 1, 1]} : vector<4x1x32xf32> to vector<1x1x32xf32>
      %374 = vector.shape_cast %373 : vector<1x1x32xf32> to vector<1x32xf32>
      %375 = vector.broadcast %374 : vector<1x32xf32> to vector<4x32xf32>
      %376 = arith.addf %372, %375 : vector<4x32xf32>
      %cst_135 = arith.constant 0.000000e+00 : f32
      %377 = vector.broadcast %cst_135 : f32 to vector<4x32xf32>
      %378 = arith.maximumf %376, %377 : vector<4x32xf32>
      %379 = vector.extract_strided_slice %47 {offsets = [2, 0, 0], sizes = [1, 32, 8], strides = [1, 1, 1]} : vector<4x32x8xf32> to vector<1x32x8xf32>
      %380 = vector.shape_cast %379 : vector<1x32x8xf32> to vector<32x8xf32>
      %cst_136 = arith.constant dense<0.000000e+00> : vector<4x8xf32>
      %381 = tpu.matmul %378, %380, %cst_136 {dimension_numbers = #tpu.dot_dimension_numbers<[1], [0], [0], [1], [0, 0, 1, 1], [], []>} : vector<4x32xf32>, vector<32x8xf32>, vector<4x8xf32> -> vector<4x8xf32>
      %382 = arith.addf %353, %381 : vector<4x8xf32>
      %383 = vector.extract_strided_slice %48 {offsets = [2, 0, 0], sizes = [1, 1, 8], strides = [1, 1, 1]} : vector<4x1x8xf32> to vector<1x1x8xf32>
      %384 = vector.shape_cast %383 : vector<1x1x8xf32> to vector<1x8xf32>
      %385 = vector.broadcast %384 : vector<1x8xf32> to vector<4x8xf32>
      %386 = arith.addf %382, %385 : vector<4x8xf32>
      %cst_137 = arith.constant dense<0.000000e+00> : vector<4xf32>
      %387 = vector.multi_reduction <add>, %386, %cst_137 [1] : vector<4x8xf32> to vector<4xf32>
      %388 = vector.shape_cast %387 : vector<4xf32> to vector<4x1xf32>
      %cst_138 = arith.constant 8.000000e+00 : f32
      %389 = vector.broadcast %cst_138 : f32 to vector<4x1xf32>
      %390 = arith.divf %388, %389 : vector<4x1xf32>
      %391 = vector.broadcast %390 : vector<4x1xf32> to vector<4x8xf32>
      %392 = arith.subf %386, %391 : vector<4x8xf32>
      %393 = arith.mulf %392, %392 : vector<4x8xf32>
      %cst_139 = arith.constant dense<0.000000e+00> : vector<4xf32>
      %394 = vector.multi_reduction <add>, %393, %cst_139 [1] : vector<4x8xf32> to vector<4xf32>
      %395 = vector.shape_cast %394 : vector<4xf32> to vector<4x1xf32>
      %cst_140 = arith.constant 8.000000e+00 : f32
      %396 = vector.broadcast %cst_140 : f32 to vector<4x1xf32>
      %397 = arith.divf %395, %396 : vector<4x1xf32>
      %cst_141 = arith.constant 9.99999974E-6 : f32
      %398 = vector.broadcast %cst_141 : f32 to vector<4x1xf32>
      %399 = arith.addf %397, %398 : vector<4x1xf32>
      %400 = math.rsqrt %399 : vector<4x1xf32>
      %401 = vector.broadcast %400 : vector<4x1xf32> to vector<4x8xf32>
      %402 = arith.mulf %392, %401 : vector<4x8xf32>
      %cst_142 = arith.constant 0.353553385 : f32
      %403 = vector.broadcast %cst_142 : f32 to vector<4x8xf32>
      %404 = arith.mulf %402, %403 : vector<4x8xf32>
      %405 = vector.extract_strided_slice %36 {offsets = [2, 0, 0], sizes = [1, 8, 8], strides = [1, 1, 1]} : vector<4x8x8xf32> to vector<1x8x8xf32>
      %406 = vector.shape_cast %405 : vector<1x8x8xf32> to vector<8x8xf32>
      %cst_143 = arith.constant dense<0.000000e+00> : vector<4x8xf32>
      %407 = tpu.matmul %404, %406, %cst_143 {dimension_numbers = #tpu.dot_dimension_numbers<[1], [1], [0], [0], [0, 0, 1, 0], [], []>} : vector<4x8xf32>, vector<8x8xf32>, vector<4x8xf32> -> vector<4x8xf32>
      %cst_144 = arith.constant dense<0xFF800000> : vector<4xf32>
      %408 = vector.multi_reduction <maximumf>, %407, %cst_144 [1] : vector<4x8xf32> to vector<4xf32>
      %409 = vector.shape_cast %408 : vector<4xf32> to vector<4x1xf32>
      %410 = vector.broadcast %409 : vector<4x1xf32> to vector<4x8xf32>
      %411 = arith.subf %407, %410 : vector<4x8xf32>
      %412 = math.exp %411 : vector<4x8xf32>
      %cst_145 = arith.constant dense<0.000000e+00> : vector<4xf32>
      %413 = vector.multi_reduction <add>, %412, %cst_145 [1] : vector<4x8xf32> to vector<4xf32>
      %414 = vector.shape_cast %413 : vector<4xf32> to vector<4x1xf32>
      %415 = vector.broadcast %414 : vector<4x1xf32> to vector<4x8xf32>
      %416 = arith.divf %412, %415 : vector<4x8xf32>
      %cst_146 = arith.constant dense<0.000000e+00> : vector<4x8xf32>
      %417 = tpu.matmul %416, %406, %cst_146 {dimension_numbers = #tpu.dot_dimension_numbers<[1], [0], [0], [1], [0, 0, 1, 1], [], []>} : vector<4x8xf32>, vector<8x8xf32>, vector<4x8xf32> -> vector<4x8xf32>
      %418 = vector.extract_strided_slice %98 {offsets = [0, 24], sizes = [4, 8], strides = [1, 1]} : vector<4x32xf32> to vector<4x8xf32>
      %419 = vector.extract_strided_slice %arg25 {offsets = [0, 24], sizes = [4, 8], strides = [1, 1]} : vector<4x32xf32> to vector<4x8xf32>
      %420 = vector.extract_strided_slice %41 {offsets = [3, 0, 0], sizes = [1, 8, 24], strides = [1, 1, 1]} : vector<4x8x24xf32> to vector<1x8x24xf32>
      %421 = vector.shape_cast %420 : vector<1x8x24xf32> to vector<8x24xf32>
      %cst_147 = arith.constant dense<0.000000e+00> : vector<4x24xf32>
      %422 = tpu.matmul %418, %421, %cst_147 {dimension_numbers = #tpu.dot_dimension_numbers<[1], [0], [0], [1], [0, 0, 1, 1], [], []>} : vector<4x8xf32>, vector<8x24xf32>, vector<4x24xf32> -> vector<4x24xf32>
      %423 = vector.extract_strided_slice %43 {offsets = [3, 0, 0], sizes = [1, 1, 24], strides = [1, 1, 1]} : vector<4x1x24xf32> to vector<1x1x24xf32>
      %424 = vector.shape_cast %423 : vector<1x1x24xf32> to vector<1x24xf32>
      %425 = vector.broadcast %424 : vector<1x24xf32> to vector<4x24xf32>
      %426 = arith.addf %422, %425 : vector<4x24xf32>
      %427 = vector.extract_strided_slice %42 {offsets = [3, 0, 0], sizes = [1, 8, 24], strides = [1, 1, 1]} : vector<4x8x24xf32> to vector<1x8x24xf32>
      %428 = vector.shape_cast %427 : vector<1x8x24xf32> to vector<8x24xf32>
      %cst_148 = arith.constant dense<0.000000e+00> : vector<4x24xf32>
      %429 = tpu.matmul %419, %428, %cst_148 {dimension_numbers = #tpu.dot_dimension_numbers<[1], [0], [0], [1], [0, 0, 1, 1], [], []>} : vector<4x8xf32>, vector<8x24xf32>, vector<4x24xf32> -> vector<4x24xf32>
      %430 = vector.extract_strided_slice %44 {offsets = [3, 0, 0], sizes = [1, 1, 24], strides = [1, 1, 1]} : vector<4x1x24xf32> to vector<1x1x24xf32>
      %431 = vector.shape_cast %430 : vector<1x1x24xf32> to vector<1x24xf32>
      %432 = vector.broadcast %431 : vector<1x24xf32> to vector<4x24xf32>
      %433 = arith.addf %429, %432 : vector<4x24xf32>
      %434 = vector.extract_strided_slice %426 {offsets = [0, 0], sizes = [4, 8], strides = [1, 1]} : vector<4x24xf32> to vector<4x8xf32>
      %435 = vector.extract_strided_slice %433 {offsets = [0, 0], sizes = [4, 8], strides = [1, 1]} : vector<4x24xf32> to vector<4x8xf32>
      %436 = arith.addf %434, %435 : vector<4x8xf32>
      %437 = arith.negf %436 : vector<4x8xf32>
      %438 = math.exp %437 : vector<4x8xf32>
      %cst_149 = arith.constant 1.000000e+00 : f32
      %439 = vector.broadcast %cst_149 : f32 to vector<4x8xf32>
      %440 = arith.addf %439, %438 : vector<4x8xf32>
      %441 = arith.divf %439, %440 : vector<4x8xf32>
      %442 = vector.extract_strided_slice %426 {offsets = [0, 8], sizes = [4, 8], strides = [1, 1]} : vector<4x24xf32> to vector<4x8xf32>
      %443 = vector.extract_strided_slice %433 {offsets = [0, 8], sizes = [4, 8], strides = [1, 1]} : vector<4x24xf32> to vector<4x8xf32>
      %444 = arith.addf %442, %443 : vector<4x8xf32>
      %445 = arith.negf %444 : vector<4x8xf32>
      %446 = math.exp %445 : vector<4x8xf32>
      %cst_150 = arith.constant 1.000000e+00 : f32
      %447 = vector.broadcast %cst_150 : f32 to vector<4x8xf32>
      %448 = arith.addf %447, %446 : vector<4x8xf32>
      %449 = arith.divf %447, %448 : vector<4x8xf32>
      %450 = vector.extract_strided_slice %426 {offsets = [0, 16], sizes = [4, 8], strides = [1, 1]} : vector<4x24xf32> to vector<4x8xf32>
      %451 = vector.extract_strided_slice %433 {offsets = [0, 16], sizes = [4, 8], strides = [1, 1]} : vector<4x24xf32> to vector<4x8xf32>
      %452 = arith.mulf %441, %451 : vector<4x8xf32>
      %453 = arith.addf %450, %452 : vector<4x8xf32>
      %454 = math.tanh %453 : vector<4x8xf32>
      %cst_151 = arith.constant 1.000000e+00 : f32
      %455 = vector.broadcast %cst_151 : f32 to vector<4x8xf32>
      %456 = arith.subf %455, %449 : vector<4x8xf32>
      %457 = arith.mulf %456, %454 : vector<4x8xf32>
      %458 = arith.mulf %449, %419 : vector<4x8xf32>
      %459 = arith.addf %457, %458 : vector<4x8xf32>
      %cst_152 = arith.constant dense<0.000000e+00> : vector<4xf32>
      %460 = vector.multi_reduction <add>, %459, %cst_152 [1] : vector<4x8xf32> to vector<4xf32>
      %461 = vector.shape_cast %460 : vector<4xf32> to vector<4x1xf32>
      %cst_153 = arith.constant 8.000000e+00 : f32
      %462 = vector.broadcast %cst_153 : f32 to vector<4x1xf32>
      %463 = arith.divf %461, %462 : vector<4x1xf32>
      %464 = vector.broadcast %463 : vector<4x1xf32> to vector<4x8xf32>
      %465 = arith.subf %459, %464 : vector<4x8xf32>
      %466 = arith.mulf %465, %465 : vector<4x8xf32>
      %cst_154 = arith.constant dense<0.000000e+00> : vector<4xf32>
      %467 = vector.multi_reduction <add>, %466, %cst_154 [1] : vector<4x8xf32> to vector<4xf32>
      %468 = vector.shape_cast %467 : vector<4xf32> to vector<4x1xf32>
      %cst_155 = arith.constant 8.000000e+00 : f32
      %469 = vector.broadcast %cst_155 : f32 to vector<4x1xf32>
      %470 = arith.divf %468, %469 : vector<4x1xf32>
      %cst_156 = arith.constant 9.99999974E-6 : f32
      %471 = vector.broadcast %cst_156 : f32 to vector<4x1xf32>
      %472 = arith.addf %470, %471 : vector<4x1xf32>
      %473 = math.rsqrt %472 : vector<4x1xf32>
      %474 = vector.broadcast %473 : vector<4x1xf32> to vector<4x8xf32>
      %475 = arith.mulf %465, %474 : vector<4x8xf32>
      %476 = vector.extract_strided_slice %45 {offsets = [3, 0, 0], sizes = [1, 8, 32], strides = [1, 1, 1]} : vector<4x8x32xf32> to vector<1x8x32xf32>
      %477 = vector.shape_cast %476 : vector<1x8x32xf32> to vector<8x32xf32>
      %cst_157 = arith.constant dense<0.000000e+00> : vector<4x32xf32>
      %478 = tpu.matmul %475, %477, %cst_157 {dimension_numbers = #tpu.dot_dimension_numbers<[1], [0], [0], [1], [0, 0, 1, 1], [], []>} : vector<4x8xf32>, vector<8x32xf32>, vector<4x32xf32> -> vector<4x32xf32>
      %479 = vector.extract_strided_slice %46 {offsets = [3, 0, 0], sizes = [1, 1, 32], strides = [1, 1, 1]} : vector<4x1x32xf32> to vector<1x1x32xf32>
      %480 = vector.shape_cast %479 : vector<1x1x32xf32> to vector<1x32xf32>
      %481 = vector.broadcast %480 : vector<1x32xf32> to vector<4x32xf32>
      %482 = arith.addf %478, %481 : vector<4x32xf32>
      %cst_158 = arith.constant 0.000000e+00 : f32
      %483 = vector.broadcast %cst_158 : f32 to vector<4x32xf32>
      %484 = arith.maximumf %482, %483 : vector<4x32xf32>
      %485 = vector.extract_strided_slice %47 {offsets = [3, 0, 0], sizes = [1, 32, 8], strides = [1, 1, 1]} : vector<4x32x8xf32> to vector<1x32x8xf32>
      %486 = vector.shape_cast %485 : vector<1x32x8xf32> to vector<32x8xf32>
      %cst_159 = arith.constant dense<0.000000e+00> : vector<4x8xf32>
      %487 = tpu.matmul %484, %486, %cst_159 {dimension_numbers = #tpu.dot_dimension_numbers<[1], [0], [0], [1], [0, 0, 1, 1], [], []>} : vector<4x32xf32>, vector<32x8xf32>, vector<4x8xf32> -> vector<4x8xf32>
      %488 = arith.addf %459, %487 : vector<4x8xf32>
      %489 = vector.extract_strided_slice %48 {offsets = [3, 0, 0], sizes = [1, 1, 8], strides = [1, 1, 1]} : vector<4x1x8xf32> to vector<1x1x8xf32>
      %490 = vector.shape_cast %489 : vector<1x1x8xf32> to vector<1x8xf32>
      %491 = vector.broadcast %490 : vector<1x8xf32> to vector<4x8xf32>
      %492 = arith.addf %488, %491 : vector<4x8xf32>
      %cst_160 = arith.constant dense<0.000000e+00> : vector<4xf32>
      %493 = vector.multi_reduction <add>, %492, %cst_160 [1] : vector<4x8xf32> to vector<4xf32>
      %494 = vector.shape_cast %493 : vector<4xf32> to vector<4x1xf32>
      %cst_161 = arith.constant 8.000000e+00 : f32
      %495 = vector.broadcast %cst_161 : f32 to vector<4x1xf32>
      %496 = arith.divf %494, %495 : vector<4x1xf32>
      %497 = vector.broadcast %496 : vector<4x1xf32> to vector<4x8xf32>
      %498 = arith.subf %492, %497 : vector<4x8xf32>
      %499 = arith.mulf %498, %498 : vector<4x8xf32>
      %cst_162 = arith.constant dense<0.000000e+00> : vector<4xf32>
      %500 = vector.multi_reduction <add>, %499, %cst_162 [1] : vector<4x8xf32> to vector<4xf32>
      %501 = vector.shape_cast %500 : vector<4xf32> to vector<4x1xf32>
      %cst_163 = arith.constant 8.000000e+00 : f32
      %502 = vector.broadcast %cst_163 : f32 to vector<4x1xf32>
      %503 = arith.divf %501, %502 : vector<4x1xf32>
      %cst_164 = arith.constant 9.99999974E-6 : f32
      %504 = vector.broadcast %cst_164 : f32 to vector<4x1xf32>
      %505 = arith.addf %503, %504 : vector<4x1xf32>
      %506 = math.rsqrt %505 : vector<4x1xf32>
      %507 = vector.broadcast %506 : vector<4x1xf32> to vector<4x8xf32>
      %508 = arith.mulf %498, %507 : vector<4x8xf32>
      %cst_165 = arith.constant 0.353553385 : f32
      %509 = vector.broadcast %cst_165 : f32 to vector<4x8xf32>
      %510 = arith.mulf %508, %509 : vector<4x8xf32>
      %511 = vector.extract_strided_slice %36 {offsets = [3, 0, 0], sizes = [1, 8, 8], strides = [1, 1, 1]} : vector<4x8x8xf32> to vector<1x8x8xf32>
      %512 = vector.shape_cast %511 : vector<1x8x8xf32> to vector<8x8xf32>
      %cst_166 = arith.constant dense<0.000000e+00> : vector<4x8xf32>
      %513 = tpu.matmul %510, %512, %cst_166 {dimension_numbers = #tpu.dot_dimension_numbers<[1], [1], [0], [0], [0, 0, 1, 0], [], []>} : vector<4x8xf32>, vector<8x8xf32>, vector<4x8xf32> -> vector<4x8xf32>
      %cst_167 = arith.constant dense<0xFF800000> : vector<4xf32>
      %514 = vector.multi_reduction <maximumf>, %513, %cst_167 [1] : vector<4x8xf32> to vector<4xf32>
      %515 = vector.shape_cast %514 : vector<4xf32> to vector<4x1xf32>
      %516 = vector.broadcast %515 : vector<4x1xf32> to vector<4x8xf32>
      %517 = arith.subf %513, %516 : vector<4x8xf32>
      %518 = math.exp %517 : vector<4x8xf32>
      %cst_168 = arith.constant dense<0.000000e+00> : vector<4xf32>
      %519 = vector.multi_reduction <add>, %518, %cst_168 [1] : vector<4x8xf32> to vector<4xf32>
      %520 = vector.shape_cast %519 : vector<4xf32> to vector<4x1xf32>
      %521 = vector.broadcast %520 : vector<4x1xf32> to vector<4x8xf32>
      %522 = arith.divf %518, %521 : vector<4x8xf32>
      %cst_169 = arith.constant dense<0.000000e+00> : vector<4x8xf32>
      %523 = tpu.matmul %522, %512, %cst_169 {dimension_numbers = #tpu.dot_dimension_numbers<[1], [0], [0], [1], [0, 0, 1, 1], [], []>} : vector<4x8xf32>, vector<8x8xf32>, vector<4x8xf32> -> vector<4x8xf32>
      %524 = tpu.concatenate %205, %311, %417, %523 in 1 : vector<4x8xf32>, vector<4x8xf32>, vector<4x8xf32>, vector<4x8xf32> -> vector<4x32xf32>
      scf.yield %524, %99 : vector<4x32xf32>, vector<1x4x16xf32>
    }
    %54 = vector.shape_cast %53#0 : vector<4x32xf32> to vector<1x4x32xf32>
    %c0_59 = arith.constant 0 : index
    %c0_60 = arith.constant 0 : index
    %c0_61 = arith.constant 0 : index
    %55 = vector.load %arg22[%c0_59, %c0_60, %c0_61] : memref<1x4x32xf32, #tpu.memory_space<vmem>>, vector<1x4x32xf32>
    tpu.vector_store %arg22[%c0_59, %c0_60, %c0_61], %54 {strides = array<i32>} : memref<1x4x32xf32, #tpu.memory_space<vmem>>, vector<1x4x32xf32>,
    %c0_62 = arith.constant 0 : index
    %c0_63 = arith.constant 0 : index
    %c0_64 = arith.constant 0 : index
    %56 = vector.load %arg23[%c0_62, %c0_63, %c0_64] : memref<1x4x16xf32, #tpu.memory_space<vmem>>, vector<1x4x16xf32>
    tpu.vector_store %arg23[%c0_62, %c0_63, %c0_64], %53#1 {strides = array<i32>} : memref<1x4x16xf32, #tpu.memory_space<vmem>>, vector<1x4x16xf32>,
    return
  }
  func.func @transform_0(%arg0: i32) -> (i32, i32, i32) {
    %c0_i32 = arith.constant 0 : i32
    %c0_i32_0 = arith.constant 0 : i32
    %c0_i32_1 = arith.constant 0 : i32
    return %arg0, %c0_i32, %c0_i32_0 : i32, i32, i32
  }
  func.func @transform_1(%arg0: i32) -> (i32, i32, i32) {
    %c0_i32 = arith.constant 0 : i32
    %c0_i32_0 = arith.constant 0 : i32
    %c0_i32_1 = arith.constant 0 : i32
    return %arg0, %c0_i32, %c0_i32_0 : i32, i32, i32
  }
  func.func @transform_2(%arg0: i32) -> (i32, i32, i32) {
    %c0_i32 = arith.constant 0 : i32
    %c0_i32_0 = arith.constant 0 : i32
    %c0_i32_1 = arith.constant 0 : i32
    %c0_i32_2 = arith.constant 0 : i32
    return %c0_i32, %c0_i32_0, %c0_i32_1 : i32, i32, i32
  }
  func.func @transform_3(%arg0: i32) -> (i32, i32) {
    %c0_i32 = arith.constant 0 : i32
    %c0_i32_0 = arith.constant 0 : i32
    %c0_i32_1 = arith.constant 0 : i32
    return %c0_i32, %c0_i32_0 : i32, i32
  }
  func.func @transform_4(%arg0: i32) -> (i32, i32) {
    %c0_i32 = arith.constant 0 : i32
    %c0_i32_0 = arith.constant 0 : i32
    %c0_i32_1 = arith.constant 0 : i32
    return %c0_i32, %c0_i32_0 : i32, i32
  }
  func.func @transform_5(%arg0: i32) -> (i32, i32) {
    %c0_i32 = arith.constant 0 : i32
    %c0_i32_0 = arith.constant 0 : i32
    %c0_i32_1 = arith.constant 0 : i32
    return %c0_i32, %c0_i32_0 : i32, i32
  }
  func.func @transform_6(%arg0: i32) -> (i32, i32) {
    %c0_i32 = arith.constant 0 : i32
    %c0_i32_0 = arith.constant 0 : i32
    %c0_i32_1 = arith.constant 0 : i32
    return %c0_i32, %c0_i32_0 : i32, i32
  }
  func.func @transform_7(%arg0: i32) -> (i32, i32) {
    %c0_i32 = arith.constant 0 : i32
    %c0_i32_0 = arith.constant 0 : i32
    %c0_i32_1 = arith.constant 0 : i32
    return %c0_i32, %c0_i32_0 : i32, i32
  }
  func.func @transform_8(%arg0: i32) -> (i32, i32) {
    %c0_i32 = arith.constant 0 : i32
    %c0_i32_0 = arith.constant 0 : i32
    %c0_i32_1 = arith.constant 0 : i32
    return %c0_i32, %c0_i32_0 : i32, i32
  }
  func.func @transform_9(%arg0: i32) -> (i32, i32) {
    %c0_i32 = arith.constant 0 : i32
    %c0_i32_0 = arith.constant 0 : i32
    %c0_i32_1 = arith.constant 0 : i32
    return %c0_i32, %c0_i32_0 : i32, i32
  }
  func.func @transform_10(%arg0: i32) -> (i32, i32) {
    %c0_i32 = arith.constant 0 : i32
    %c0_i32_0 = arith.constant 0 : i32
    %c0_i32_1 = arith.constant 0 : i32
    return %c0_i32, %c0_i32_0 : i32, i32
  }
  func.func @transform_11(%arg0: i32) -> (i32, i32) {
    %c0_i32 = arith.constant 0 : i32
    %c0_i32_0 = arith.constant 0 : i32
    %c0_i32_1 = arith.constant 0 : i32
    return %c0_i32, %c0_i32_0 : i32, i32
  }
  func.func @transform_12(%arg0: i32) -> (i32, i32) {
    %c0_i32 = arith.constant 0 : i32
    %c0_i32_0 = arith.constant 0 : i32
    %c0_i32_1 = arith.constant 0 : i32
    return %c0_i32, %c0_i32_0 : i32, i32
  }
  func.func @transform_13(%arg0: i32) -> (i32, i32, i32) {
    %c0_i32 = arith.constant 0 : i32
    %c0_i32_0 = arith.constant 0 : i32
    %c0_i32_1 = arith.constant 0 : i32
    %c0_i32_2 = arith.constant 0 : i32
    return %c0_i32, %c0_i32_0, %c0_i32_1 : i32, i32, i32
  }
  func.func @transform_14(%arg0: i32) -> (i32, i32, i32) {
    %c0_i32 = arith.constant 0 : i32
    %c0_i32_0 = arith.constant 0 : i32
    %c0_i32_1 = arith.constant 0 : i32
    %c0_i32_2 = arith.constant 0 : i32
    return %c0_i32, %c0_i32_0, %c0_i32_1 : i32, i32, i32
  }
  func.func @transform_15(%arg0: i32) -> (i32, i32, i32) {
    %c0_i32 = arith.constant 0 : i32
    %c0_i32_0 = arith.constant 0 : i32
    %c0_i32_1 = arith.constant 0 : i32
    %c0_i32_2 = arith.constant 0 : i32
    return %c0_i32, %c0_i32_0, %c0_i32_1 : i32, i32, i32
  }
  func.func @transform_16(%arg0: i32) -> (i32, i32, i32) {
    %c0_i32 = arith.constant 0 : i32
    %c0_i32_0 = arith.constant 0 : i32
    %c0_i32_1 = arith.constant 0 : i32
    %c0_i32_2 = arith.constant 0 : i32
    return %c0_i32, %c0_i32_0, %c0_i32_1 : i32, i32, i32
  }
  func.func @transform_17(%arg0: i32) -> (i32, i32, i32) {
    %c0_i32 = arith.constant 0 : i32
    %c0_i32_0 = arith.constant 0 : i32
    %c0_i32_1 = arith.constant 0 : i32
    %c0_i32_2 = arith.constant 0 : i32
    return %c0_i32, %c0_i32_0, %c0_i32_1 : i32, i32, i32
  }
  func.func @transform_18(%arg0: i32) -> (i32, i32, i32) {
    %c0_i32 = arith.constant 0 : i32
    %c0_i32_0 = arith.constant 0 : i32
    %c0_i32_1 = arith.constant 0 : i32
    %c0_i32_2 = arith.constant 0 : i32
    return %c0_i32, %c0_i32_0, %c0_i32_1 : i32, i32, i32
  }
  func.func @transform_19(%arg0: i32) -> (i32, i32, i32) {
    %c0_i32 = arith.constant 0 : i32
    %c0_i32_0 = arith.constant 0 : i32
    %c0_i32_1 = arith.constant 0 : i32
    %c0_i32_2 = arith.constant 0 : i32
    return %c0_i32, %c0_i32_0, %c0_i32_1 : i32, i32, i32
  }
  func.func @transform_20(%arg0: i32) -> (i32, i32, i32) {
    %c0_i32 = arith.constant 0 : i32
    %c0_i32_0 = arith.constant 0 : i32
    %c0_i32_1 = arith.constant 0 : i32
    %c0_i32_2 = arith.constant 0 : i32
    return %c0_i32, %c0_i32_0, %c0_i32_1 : i32, i32, i32
  }
  func.func @transform_21(%arg0: i32) -> (i32, i32, i32) {
    %c0_i32 = arith.constant 0 : i32
    %c0_i32_0 = arith.constant 0 : i32
    %c0_i32_1 = arith.constant 0 : i32
    return %arg0, %c0_i32, %c0_i32_0 : i32, i32, i32
  }
  func.func @transform_22(%arg0: i32) -> (i32, i32, i32) {
    %c0_i32 = arith.constant 0 : i32
    %c0_i32_0 = arith.constant 0 : i32
    %c0_i32_1 = arith.constant 0 : i32
    return %arg0, %c0_i32, %c0_i32_0 : i32, i32, i32
  }
}

</mosaic_0001>

<llo_original>
// kernel: sysbinder_forward.2
$region0: #{sysbinder_forward.2}
  #allocation0 [shape = 'u32[]', space=smem, size = 0x4, offset = 0x4, fixed_abs, tag = 'smem constant byte address 0x4 - core index']
  #allocation1 [shape = 'u32[144,128]{1,0:T(1,128)}', space=vmem, size = 0x12000, scoped, tag = 'internal scratch']
  %s0 = inlined_call_operand.vmem [shape: f32[32,8], index: 0, kind: input, shape index: {}]
  %s1 = inlined_call_operand.vmem [shape: f32[8,32], index: 1, kind: input, shape index: {}]
  %s2 = inlined_call_operand.vmem [shape: f32[1,32], index: 2, kind: input, shape index: {}]
  %s3 = inlined_call_operand.vmem [shape: f32[32,32], index: 3, kind: input, shape index: {}]
  %s4 = inlined_call_operand.vmem [shape: f32[1,32], index: 4, kind: input, shape index: {}]
  %s5 = inlined_call_operand.vmem [shape: f32[32,32], index: 5, kind: input, shape index: {}]
  %s6 = inlined_call_operand.vmem [shape: f32[1,32], index: 6, kind: input, shape index: {}]
  %s7 = inlined_call_operand.vmem [shape: f32[32,8], index: 7, kind: input, shape index: {}]
  %s8 = inlined_call_operand.vmem [shape: f32[1,8], index: 8, kind: input, shape index: {}]
  %s9 = inlined_call_operand.vmem [shape: f32[32,8], index: 9, kind: output, shape index: {}]
  %s10 = sld [smem:[#allocation0]]
  $region46: #{sysbinder_forward.2} parent=0
    _
  %s12 = ssub.s32 1, %s10
  %s13 = scalar_select 0, %s12, %s10
  // Predicated region
  $region2: #{sysbinder_forward.2} parent=0 // pred_check
    _
  $region3: #{sysbinder_forward.2} parent=0 // pred_check_branch
    %15 = sbr.rel (0) target = $region5
  $region4: #{sysbinder_forward.2} parent=0 // pred_region
    _
  $region5: #{sysbinder_forward.2} parent=0 // pred_fallthru
    _
  // Predicated region
  $region6: #{sysbinder_forward.2} parent=0 // pred_check
    _
  $region7: #{sysbinder_forward.2} parent=0 // pred_check_branch
    %17 = sbr.rel (0) target = $region9
  $region8: #{sysbinder_forward.2} parent=0 // pred_region
    _
  $region9: #{sysbinder_forward.2} parent=0 // pred_fallthru
    _
  // Predicated region
  $region10: #{sysbinder_forward.2} parent=0 // pred_check
    _
  $region11: #{sysbinder_forward.2} parent=0 // pred_check_branch
    %19 = sbr.rel (0) target = $region13
  $region12: #{sysbinder_forward.2} parent=0 // pred_region
    _
  $region13: #{sysbinder_forward.2} parent=0 // pred_fallthru
    _
  // Predicated region
  $region14: #{sysbinder_forward.2} parent=0 // pred_check
    _
  $region15: #{sysbinder_forward.2} parent=0 // pred_check_branch
    %21 = sbr.rel (0) target = $region17
  $region16: #{sysbinder_forward.2} parent=0 // pred_region
    _
  $region17: #{sysbinder_forward.2} parent=0 // pred_fallthru
    _
  // Predicated region
  $region18: #{sysbinder_forward.2} parent=0 // pred_check
    _
  $region19: #{sysbinder_forward.2} parent=0 // pred_check_branch
    %23 = sbr.rel (0) target = $region21
  $region20: #{sysbinder_forward.2} parent=0 // pred_region
    _
  $region21: #{sysbinder_forward.2} parent=0 // pred_fallthru
    _
  // Predicated region
  $region22: #{sysbinder_forward.2} parent=0 // pred_check
    _
  $region23: #{sysbinder_forward.2} parent=0 // pred_check_branch
    %25 = sbr.rel (0) target = $region25
  $region24: #{sysbinder_forward.2} parent=0 // pred_region
    _
  $region25: #{sysbinder_forward.2} parent=0 // pred_fallthru
    _
  // Predicated region
  $region26: #{sysbinder_forward.2} parent=0 // pred_check
    _
  $region27: #{sysbinder_forward.2} parent=0 // pred_check_branch
    %27 = sbr.rel (0) target = $region29
  $region28: #{sysbinder_forward.2} parent=0 // pred_region
    _
  $region29: #{sysbinder_forward.2} parent=0 // pred_fallthru
    _
  // Predicated region
  $region30: #{sysbinder_forward.2} parent=0 // pred_check
    _
  $region31: #{sysbinder_forward.2} parent=0 // pred_check_branch
    %29 = sbr.rel (0) target = $region33
  $region32: #{sysbinder_forward.2} parent=0 // pred_region
    _
  $region33: #{sysbinder_forward.2} parent=0 // pred_fallthru
    _
  // Predicated region
  $region34: #{sysbinder_forward.2} parent=0 // pred_check
    _
  $region35: #{sysbinder_forward.2} parent=0 // pred_check_branch
    %31 = sbr.rel (0) target = $region37
  $region36: #{sysbinder_forward.2} parent=0 // pred_region
    _
  $region37: #{sysbinder_forward.2} parent=0 // pred_fallthru
    _
  %v32 = vld [vmem:[%s0] sm:$0xff]
  %v33 = vld [vmem:[%s0 + $0x8] sm:$0xff]
  %v34 = vld [vmem:[%s0 + $0x10] sm:$0xff]
  %v35 = vld [vmem:[%s0 + $0x18] sm:$0xff]
  %v36 = vld [vmem:[%s1] sm:$0xff]
  %v37 = vld [vmem:[%s2] sm:$0x1]
  %v39 = vlaneseq
  %v40 = vshrl.u32 %v39, 7
  %v41 = vsub.s32 0, %v40
  %v42 = vrot.slane %v37, %v41
  %vm44 = vcmask 64512
  %v46 = vsel %vm44, %v32, 0
  %v49 = vsel %vm44, %v33, 0
  %v52 = vsel %vm44, %v34, 0
  %v55 = vsel %vm44, %v35, 0
  %57 = vmatprep.subr.mxu0 0.0
  %58 = vmatpush1.msra.mxu0 0.0
  %59 = vmatprep.subr.mxu0 0.0
  %60 = vmatpush1.msra.mxu0 0.0
  %61 = vmatprep.subr.mxu0 0.0
  %62 = vmatpush1.msra.mxu0 0.0
  %63 = vmatprep.subr.mxu0 0.0
  %64 = vmatpush1.msra.mxu0 0.0
  %65 = vmatprep.subr.mxu0 0.0
  %66 = vmatpush1.msra.mxu0 0.0
  %67 = vmatprep.subr.mxu0 0.0
  %68 = vmatpush1.msra.mxu0 0.0
  %69 = vmatprep.subr.mxu0 0.0
  %70 = vmatpush1.msra.mxu0 0.0
  %71 = vmatprep.subr.mxu0 0.0
  %72 = vmatpush1.msra.mxu0 0.0
  %73 = vmatprep.subr.mxu0 0.0
  %74 = vmatpush1.msra.mxu0 0.0
  %75 = vmatprep.subr.mxu0 0.0
  %76 = vmatpush1.msra.mxu0 0.0
  %77 = vmatprep.subr.mxu0 0.0
  %78 = vmatpush1.msra.mxu0 0.0
  %79 = vmatprep.subr.mxu0 0.0
  %80 = vmatpush1.msra.mxu0 0.0
  %81 = vmatprep.subr.mxu0 0.0
  %82 = vmatpush1.msra.mxu0 0.0
  %83 = vmatprep.subr.mxu0 0.0
  %84 = vmatpush1.msra.mxu0 0.0
  %85 = vmatprep.subr.mxu0 0.0
  %86 = vmatpush1.msra.mxu0 0.0
  %87 = vmatprep.subr.mxu0 0.0
  %88 = vmatpush1.msra.mxu0 %v36
  %89 = vmatprep.subr.mxu0 0.0
  %90 = vmatpush2.msra.mxu0 0.0
  %91 = vmatprep.subr.mxu0 0.0
  %92 = vmatpush2.msra.mxu0 0.0
  %93 = vmatprep.subr.mxu0 0.0
  %94 = vmatpush2.msra.mxu0 0.0
  %95 = vmatprep.subr.mxu0 0.0
  %96 = vmatpush2.msra.mxu0 0.0
  %97 = vmatprep.subr.mxu0 0.0
  %98 = vmatpush2.msra.mxu0 0.0
  %99 = vmatprep.subr.mxu0 0.0
  %100 = vmatpush2.msra.mxu0 0.0
  %101 = vmatprep.subr.mxu0 0.0
  %102 = vmatpush2.msra.mxu0 0.0
  %103 = vmatprep.subr.mxu0 0.0
  %104 = vmatpush2.msra.mxu0 0.0
  %105 = vmatprep.subr.mxu0 0.0
  %106 = vmatpush2.msra.mxu0 0.0
  %107 = vmatprep.subr.mxu0 0.0
  %108 = vmatpush2.msra.mxu0 0.0
  %109 = vmatprep.subr.mxu0 0.0
  %110 = vmatpush2.msra.mxu0 0.0
  %111 = vmatprep.subr.mxu0 0.0
  %112 = vmatpush2.msra.mxu0 0.0
  %113 = vmatprep.subr.mxu0 0.0
  %114 = vmatpush2.msra.mxu0 0.0
  %115 = vmatprep.subr.mxu0 0.0
  %116 = vmatpush2.msra.mxu0 0.0
  %117 = vmatprep.subr.mxu0 0.0
  %118 = vmatpush2.msra.mxu0 0.0
  %119 = vmatprep.subr.mxu0 0.0
  %120 = vmatpush2.msra.mxu0 0.0
  %121 = vmatprep.mubr.f32.mxu0 0.0
  %122 = vmatmul.mubr.f32.gmra.mxu0 %v46
  %v123 = vpop.f32.mrf.mxu0
  %v124 = vadd.f32 %v42, %v123
  %v125 = vpop.f32.mrf.mxu0
  %126 = vmatprep.mubr.f32.mxu0 0.0
  %127 = vmatmul.mubr.f32.gmra.mxu0 %v49
  %v128 = vpop.f32.mrf.mxu0
  %v129 = vadd.f32 %v42, %v128
  %v130 = vpop.f32.mrf.mxu0
  %131 = vmatprep.mubr.f32.mxu0 0.0
  %132 = vmatmul.mubr.f32.gmra.mxu0 %v52
  %v133 = vpop.f32.mrf.mxu0
  %v134 = vadd.f32 %v42, %v133
  %v135 = vpop.f32.mrf.mxu0
  %136 = vmatprep.mubr.f32.mxu0 0.0
  %137 = vmatmul.mubr.f32.gmra.mxu0 %v55
  %v138 = vpop.f32.mrf.mxu0
  %v139 = vadd.f32 %v42, %v138
  %v140 = vpop.f32.mrf.mxu0
  %141 = vdwg.mxu0
  %v142 = vmax.f32 %v124, 0.0
  %v143 = vmax.f32 %v129, 0.0
  %v144 = vmax.f32 %v134, 0.0
  %v145 = vmax.f32 %v139, 0.0
  %v146 = vld [vmem:[%s3] sm:$0xff]
  %v147 = vld [vmem:[%s3 + $0x8] sm:$0xff]
  %v148 = vld [vmem:[%s3 + $0x10] sm:$0xff]
  %v149 = vld [vmem:[%s3 + $0x18] sm:$0xff]
  %v150 = vld [vmem:[%s4] sm:$0x1]
  %v152 = vlaneseq
  %v153 = vshrl.u32 %v152, 7
  %v154 = vsub.s32 0, %v153
  %v155 = vrot.slane %v150, %v154
  %vm157 = vcmask 261120
  %v159 = vsel %vm157, %v142, 0
  %v162 = vsel %vm157, %v143, 0
  %v165 = vsel %vm157, %v144, 0
  %v168 = vsel %vm157, %v145, 0
  %170 = vmatprep.subr.mxu0 0.0
  %171 = vmatpush1.msra.mxu0 0.0
  %172 = vmatprep.subr.mxu0 0.0
  %173 = vmatpush1.msra.mxu0 0.0
  %174 = vmatprep.subr.mxu0 0.0
  %175 = vmatpush1.msra.mxu0 0.0
  %176 = vmatprep.subr.mxu0 0.0
  %177 = vmatpush1.msra.mxu0 0.0
  %178 = vmatprep.subr.mxu0 0.0
  %179 = vmatpush1.msra.mxu0 0.0
  %180 = vmatprep.subr.mxu0 0.0
  %181 = vmatpush1.msra.mxu0 0.0
  %182 = vmatprep.subr.mxu0 0.0
  %183 = vmatpush1.msra.mxu0 0.0
  %184 = vmatprep.subr.mxu0 0.0
  %185 = vmatpush1.msra.mxu0 0.0
  %186 = vmatprep.subr.mxu0 0.0
  %187 = vmatpush1.msra.mxu0 0.0
  %188 = vmatprep.subr.mxu0 0.0
  %189 = vmatpush1.msra.mxu0 0.0
  %190 = vmatprep.subr.mxu0 0.0
  %191 = vmatpush1.msra.mxu0 0.0
  %192 = vmatprep.subr.mxu0 0.0
  %193 = vmatpush1.msra.mxu0 0.0
  %194 = vmatprep.subr.mxu0 0.0
  %195 = vmatpush1.msra.mxu0 %v149
  %196 = vmatprep.subr.mxu0 0.0
  %197 = vmatpush1.msra.mxu0 %v148
  %198 = vmatprep.subr.mxu0 0.0
  %199 = vmatpush1.msra.mxu0 %v147
  %200 = vmatprep.subr.mxu0 0.0
  %201 = vmatpush1.msra.mxu0 %v146
  %202 = vmatprep.subr.mxu0 0.0
  %203 = vmatpush2.msra.mxu0 0.0
  %204 = vmatprep.subr.mxu0 0.0
  %205 = vmatpush2.msra.mxu0 0.0
  %206 = vmatprep.subr.mxu0 0.0
  %207 = vmatpush2.msra.mxu0 0.0
  %208 = vmatprep.subr.mxu0 0.0
  %209 = vmatpush2.msra.mxu0 0.0
  %210 = vmatprep.subr.mxu0 0.0
  %211 = vmatpush2.msra.mxu0 0.0
  %212 = vmatprep.subr.mxu0 0.0
  %213 = vmatpush2.msra.mxu0 0.0
  %214 = vmatprep.subr.mxu0 0.0
  %215 = vmatpush2.msra.mxu0 0.0
  %216 = vmatprep.subr.mxu0 0.0
  %217 = vmatpush2.msra.mxu0 0.0
  %218 = vmatprep.subr.mxu0 0.0
  %219 = vmatpush2.msra.mxu0 0.0
  %220 = vmatprep.subr.mxu0 0.0
  %221 = vmatpush2.msra.mxu0 0.0
  %222 = vmatprep.subr.mxu0 0.0
  %223 = vmatpush2.msra.mxu0 0.0
  %224 = vmatprep.subr.mxu0 0.0
  %225 = vmatpush2.msra.mxu0 0.0
  %226 = vmatprep.subr.mxu0 0.0
  %227 = vmatpush2.msra.mxu0 0.0
  %228 = vmatprep.subr.mxu0 0.0
  %229 = vmatpush2.msra.mxu0 0.0
  %230 = vmatprep.subr.mxu0 0.0
  %231 = vmatpush2.msra.mxu0 0.0
  %232 = vmatprep.subr.mxu0 0.0
  %233 = vmatpush2.msra.mxu0 0.0
  %234 = vmatprep.mubr.f32.mxu0 0.0
  %235 = vmatmul.mubr.f32.gmra.mxu0 %v159
  %v236 = vpop.f32.mrf.mxu0
  %v237 = vadd.f32 %v155, %v236
  %v238 = vpop.f32.mrf.mxu0
  %239 = vmatprep.mubr.f32.mxu0 0.0
  %240 = vmatmul.mubr.f32.gmra.mxu0 %v162
  %v241 = vpop.f32.mrf.mxu0
  %v242 = vadd.f32 %v155, %v241
  %v243 = vpop.f32.mrf.mxu0
  %244 = vmatprep.mubr.f32.mxu0 0.0
  %245 = vmatmul.mubr.f32.gmra.mxu0 %v165
  %v246 = vpop.f32.mrf.mxu0
  %v247 = vadd.f32 %v155, %v246
  %v248 = vpop.f32.mrf.mxu0
  %249 = vmatprep.mubr.f32.mxu0 0.0
  %250 = vmatmul.mubr.f32.gmra.mxu0 %v168
  %v251 = vpop.f32.mrf.mxu0
  %v252 = vadd.f32 %v155, %v251
  %v253 = vpop.f32.mrf.mxu0
  %254 = vdwg.mxu0
  %v255 = vmax.f32 %v237, 0.0
  %v256 = vmax.f32 %v242, 0.0
  %v257 = vmax.f32 %v247, 0.0
  %v258 = vmax.f32 %v252, 0.0
  %v259 = vld [vmem:[%s5] sm:$0xff]
  %v260 = vld [vmem:[%s5 + $0x8] sm:$0xff]
  %v261 = vld [vmem:[%s5 + $0x10] sm:$0xff]
  %v262 = vld [vmem:[%s5 + $0x18] sm:$0xff]
  %v263 = vld [vmem:[%s6] sm:$0x1]
  %v265 = vlaneseq
  %v266 = vshrl.u32 %v265, 7
  %v267 = vsub.s32 0, %v266
  %v268 = vrot.slane %v263, %v267
  %v271 = vsel %vm157, %v255, 0
  %v274 = vsel %vm157, %v256, 0
  %v277 = vsel %vm157, %v257, 0
  %v280 = vsel %vm157, %v258, 0
  %282 = vmatprep.subr.mxu0 0.0
  %283 = vmatpush1.msra.mxu0 0.0
  %284 = vmatprep.subr.mxu0 0.0
  %285 = vmatpush1.msra.mxu0 0.0
  %286 = vmatprep.subr.mxu0 0.0
  %287 = vmatpush1.msra.mxu0 0.0
  %288 = vmatprep.subr.mxu0 0.0
  %289 = vmatpush1.msra.mxu0 0.0
  %290 = vmatprep.subr.mxu0 0.0
  %291 = vmatpush1.msra.mxu0 0.0
  %292 = vmatprep.subr.mxu0 0.0
  %293 = vmatpush1.msra.mxu0 0.0
  %294 = vmatprep.subr.mxu0 0.0
  %295 = vmatpush1.msra.mxu0 0.0
  %296 = vmatprep.subr.mxu0 0.0
  %297 = vmatpush1.msra.mxu0 0.0
  %298 = vmatprep.subr.mxu0 0.0
  %299 = vmatpush1.msra.mxu0 0.0
  %300 = vmatprep.subr.mxu0 0.0
  %301 = vmatpush1.msra.mxu0 0.0
  %302 = vmatprep.subr.mxu0 0.0
  %303 = vmatpush1.msra.mxu0 0.0
  %304 = vmatprep.subr.mxu0 0.0
  %305 = vmatpush1.msra.mxu0 0.0
  %306 = vmatprep.subr.mxu0 0.0
  %307 = vmatpush1.msra.mxu0 %v262
  %308 = vmatprep.subr.mxu0 0.0
  %309 = vmatpush1.msra.mxu0 %v261
  %310 = vmatprep.subr.mxu0 0.0
  %311 = vmatpush1.msra.mxu0 %v260
  %312 = vmatprep.subr.mxu0 0.0
  %313 = vmatpush1.msra.mxu0 %v259
  %314 = vmatprep.subr.mxu0 0.0
  %315 = vmatpush2.msra.mxu0 0.0
  %316 = vmatprep.subr.mxu0 0.0
  %317 = vmatpush2.msra.mxu0 0.0
  %318 = vmatprep.subr.mxu0 0.0
  %319 = vmatpush2.msra.mxu0 0.0
  %320 = vmatprep.subr.mxu0 0.0
  %321 = vmatpush2.msra.mxu0 0.0
  %322 = vmatprep.subr.mxu0 0.0
  %323 = vmatpush2.msra.mxu0 0.0
  %324 = vmatprep.subr.mxu0 0.0
  %325 = vmatpush2.msra.mxu0 0.0
  %326 = vmatprep.subr.mxu0 0.0
  %327 = vmatpush2.msra.mxu0 0.0
  %328 = vmatprep.subr.mxu0 0.0
  %329 = vmatpush2.msra.mxu0 0.0
  %330 = vmatprep.subr.mxu0 0.0
  %331 = vmatpush2.msra.mxu0 0.0
  %332 = vmatprep.subr.mxu0 0.0
  %333 = vmatpush2.msra.mxu0 0.0
  %334 = vmatprep.subr.mxu0 0.0
  %335 = vmatpush2.msra.mxu0 0.0
  %336 = vmatprep.subr.mxu0 0.0
  %337 = vmatpush2.msra.mxu0 0.0
  %338 = vmatprep.subr.mxu0 0.0
  %339 = vmatpush2.msra.mxu0 0.0
  %340 = vmatprep.subr.mxu0 0.0
  %341 = vmatpush2.msra.mxu0 0.0
  %342 = vmatprep.subr.mxu0 0.0
  %343 = vmatpush2.msra.mxu0 0.0
  %344 = vmatprep.subr.mxu0 0.0
  %345 = vmatpush2.msra.mxu0 0.0
  %346 = vmatprep.mubr.f32.mxu0 0.0
  %347 = vmatmul.mubr.f32.gmra.mxu0 %v271
  %v348 = vpop.f32.mrf.mxu0
  %v349 = vadd.f32 %v268, %v348
  %v350 = vpop.f32.mrf.mxu0
  %351 = vmatprep.mubr.f32.mxu0 0.0
  %352 = vmatmul.mubr.f32.gmra.mxu0 %v274
  %v353 = vpop.f32.mrf.mxu0
  %v354 = vadd.f32 %v268, %v353
  %v355 = vpop.f32.mrf.mxu0
  %356 = vmatprep.mubr.f32.mxu0 0.0
  %357 = vmatmul.mubr.f32.gmra.mxu0 %v277
  %v358 = vpop.f32.mrf.mxu0
  %v359 = vadd.f32 %v268, %v358
  %v360 = vpop.f32.mrf.mxu0
  %361 = vmatprep.mubr.f32.mxu0 0.0
  %362 = vmatmul.mubr.f32.gmra.mxu0 %v280
  %v363 = vpop.f32.mrf.mxu0
  %v364 = vadd.f32 %v268, %v363
  %v365 = vpop.f32.mrf.mxu0
  %366 = vdwg.mxu0
  %v367 = vmax.f32 %v349, 0.0
  %v368 = vmax.f32 %v354, 0.0
  %v369 = vmax.f32 %v359, 0.0
  %v370 = vmax.f32 %v364, 0.0
  %v371 = vld [vmem:[%s7] sm:$0xff]
  %v372 = vld [vmem:[%s7 + $0x8] sm:$0xff]
  %v373 = vld [vmem:[%s7 + $0x10] sm:$0xff]
  %v374 = vld [vmem:[%s7 + $0x18] sm:$0xff]
  %v375 = vld [vmem:[%s8] sm:$0x1]
  %v377 = vlaneseq
  %v378 = vshrl.u32 %v377, 7
  %v379 = vsub.s32 0, %v378
  %v380 = vrot.slane %v375, %v379
  %v383 = vsel %vm157, %v367, 0
  %v386 = vsel %vm157, %v368, 0
  %v389 = vsel %vm157, %v369, 0
  %v392 = vsel %vm157, %v370, 0
  %394 = vmatprep.subr.mxu0 0.0
  %395 = vmatpush1.msra.mxu0 0.0
  %396 = vmatprep.subr.mxu0 0.0
  %397 = vmatpush1.msra.mxu0 0.0
  %398 = vmatprep.subr.mxu0 0.0
  %399 = vmatpush1.msra.mxu0 0.0
  %400 = vmatprep.subr.mxu0 0.0
  %401 = vmatpush1.msra.mxu0 0.0
  %402 = vmatprep.subr.mxu0 0.0
  %403 = vmatpush1.msra.mxu0 0.0
  %404 = vmatprep.subr.mxu0 0.0
  %405 = vmatpush1.msra.mxu0 0.0
  %406 = vmatprep.subr.mxu0 0.0
  %407 = vmatpush1.msra.mxu0 0.0
  %408 = vmatprep.subr.mxu0 0.0
  %409 = vmatpush1.msra.mxu0 0.0
  %410 = vmatprep.subr.mxu0 0.0
  %411 = vmatpush1.msra.mxu0 0.0
  %412 = vmatprep.subr.mxu0 0.0
  %413 = vmatpush1.msra.mxu0 0.0
  %414 = vmatprep.subr.mxu0 0.0
  %415 = vmatpush1.msra.mxu0 0.0
  %416 = vmatprep.subr.mxu0 0.0
  %417 = vmatpush1.msra.mxu0 0.0
  %418 = vmatprep.subr.mxu0 0.0
  %419 = vmatpush1.msra.mxu0 %v374
  %420 = vmatprep.subr.mxu0 0.0
  %421 = vmatpush1.msra.mxu0 %v373
  %422 = vmatprep.subr.mxu0 0.0
  %423 = vmatpush1.msra.mxu0 %v372
  %424 = vmatprep.subr.mxu0 0.0
  %425 = vmatpush1.msra.mxu0 %v371
  %426 = vmatprep.subr.mxu0 0.0
  %427 = vmatpush2.msra.mxu0 0.0
  %428 = vmatprep.subr.mxu0 0.0
  %429 = vmatpush2.msra.mxu0 0.0
  %430 = vmatprep.subr.mxu0 0.0
  %431 = vmatpush2.msra.mxu0 0.0
  %432 = vmatprep.subr.mxu0 0.0
  %433 = vmatpush2.msra.mxu0 0.0
  %434 = vmatprep.subr.mxu0 0.0
  %435 = vmatpush2.msra.mxu0 0.0
  %436 = vmatprep.subr.mxu0 0.0
  %437 = vmatpush2.msra.mxu0 0.0
  %438 = vmatprep.subr.mxu0 0.0
  %439 = vmatpush2.msra.mxu0 0.0
  %440 = vmatprep.subr.mxu0 0.0
  %441 = vmatpush2.msra.mxu0 0.0
  %442 = vmatprep.subr.mxu0 0.0
  %443 = vmatpush2.msra.mxu0 0.0
  %444 = vmatprep.subr.mxu0 0.0
  %445 = vmatpush2.msra.mxu0 0.0
  %446 = vmatprep.subr.mxu0 0.0
  %447 = vmatpush2.msra.mxu0 0.0
  %448 = vmatprep.subr.mxu0 0.0
  %449 = vmatpush2.msra.mxu0 0.0
  %450 = vmatprep.subr.mxu0 0.0
  %451 = vmatpush2.msra.mxu0 0.0
  %452 = vmatprep.subr.mxu0 0.0
  %453 = vmatpush2.msra.mxu0 0.0
  %454 = vmatprep.subr.mxu0 0.0
  %455 = vmatpush2.msra.mxu0 0.0
  %456 = vmatprep.subr.mxu0 0.0
  %457 = vmatpush2.msra.mxu0 0.0
  %458 = vmatprep.mubr.f32.mxu0 0.0
  %459 = vmatmul.mubr.f32.gmra.mxu0 %v383
  %v460 = vpop.f32.mrf.mxu0
  %v461 = vadd.f32 %v380, %v460
  %v462 = vpop.f32.mrf.mxu0
  %463 = vmatprep.mubr.f32.mxu0 0.0
  %464 = vmatmul.mubr.f32.gmra.mxu0 %v386
  %v465 = vpop.f32.mrf.mxu0
  %v466 = vadd.f32 %v380, %v465
  %v467 = vpop.f32.mrf.mxu0
  %468 = vmatprep.mubr.f32.mxu0 0.0
  %469 = vmatmul.mubr.f32.gmra.mxu0 %v389
  %v470 = vpop.f32.mrf.mxu0
  %v471 = vadd.f32 %v380, %v470
  %v472 = vpop.f32.mrf.mxu0
  %473 = vmatprep.mubr.f32.mxu0 0.0
  %474 = vmatmul.mubr.f32.gmra.mxu0 %v392
  %v475 = vpop.f32.mrf.mxu0
  %v476 = vadd.f32 %v380, %v475
  %v477 = vpop.f32.mrf.mxu0
  %478 = vdwg.mxu0
  %v479 = vsel %vm44, %v461, 0.0
  %480 = vadd.xlane.f32.xlu0 %v479
  %v481 = vpop.xlane.xlu0 %480
  %v482 = vsel %vm44, %v466, 0.0
  %483 = vadd.xlane.f32.xlu0 %v482
  %v484 = vpop.xlane.xlu0 %483
  %v485 = vsel %vm44, %v471, 0.0
  %486 = vadd.xlane.f32.xlu0 %v485
  %v487 = vpop.xlane.xlu0 %486
  %v488 = vsel %vm44, %v476, 0.0
  %489 = vadd.xlane.f32.xlu0 %v488
  %v490 = vpop.xlane.xlu0 %489
  %v491 = vrcp.pop 8.0
  %v492 = vmul.f32 %v481, %v491
  %v493 = vmul.f32 %v484, %v491
  %v494 = vmul.f32 %v487, %v491
  %v495 = vmul.f32 %v490, %v491
  %v496 = vsub.f32 %v461, %v492
  %v497 = vsub.f32 %v466, %v493
  %v498 = vsub.f32 %v471, %v494
  %v499 = vsub.f32 %v476, %v495
  %v500 = vmul.f32 %v496, %v496
  %v501 = vmul.f32 %v497, %v497
  %v502 = vmul.f32 %v498, %v498
  %v503 = vmul.f32 %v499, %v499
  %v504 = vsel %vm44, %v500, 0.0
  %505 = vadd.xlane.f32.xlu0 %v504
  %v506 = vpop.xlane.xlu0 %505
  %v507 = vsel %vm44, %v501, 0.0
  %508 = vadd.xlane.f32.xlu0 %v507
  %v509 = vpop.xlane.xlu0 %508
  %v510 = vsel %vm44, %v502, 0.0
  %511 = vadd.xlane.f32.xlu0 %v510
  %v512 = vpop.xlane.xlu0 %511
  %v513 = vsel %vm44, %v503, 0.0
  %514 = vadd.xlane.f32.xlu0 %v513
  %v515 = vpop.xlane.xlu0 %514
  %v516 = vmul.f32 %v506, %v491
  %v517 = vmul.f32 %v509, %v491
  %v518 = vmul.f32 %v512, %v491
  %v519 = vmul.f32 %v515, %v491
  %v520 = vadd.f32 %v516, 1e-05
  %v521 = vadd.f32 %v517, 1e-05
  %v522 = vadd.f32 %v518, 1e-05
  %v523 = vadd.f32 %v519, 1e-05
  %v524 = vrsqrt.pop %v520
  %v525 = vrsqrt.pop %v521
  %v526 = vrsqrt.pop %v522
  %v527 = vrsqrt.pop %v523
  %v528 = vmul.f32 %v496, %v524
  %v529 = vmul.f32 %v497, %v525
  %v530 = vmul.f32 %v498, %v526
  %v531 = vmul.f32 %v499, %v527
  %532 = vst.msk [vmem:[%s9] sm:$0xff] %vm44, %v528
  %533 = vst.msk [vmem:[%s9 + $0x8] sm:$0xff] %vm44, %v529
  %534 = vst.msk [vmem:[%s9 + $0x10] sm:$0xff] %vm44, %v530
  %535 = vst.msk [vmem:[%s9 + $0x18] sm:$0xff] %vm44, %v531
  // Predicated region
  $region38: #{sysbinder_forward.2} parent=0 // pred_check
    _
  $region39: #{sysbinder_forward.2} parent=0 // pred_check_branch
    %537 = sbr.rel (0) target = $region41
  $region40: #{sysbinder_forward.2} parent=0 // pred_region
    _
  $region41: #{sysbinder_forward.2} parent=0 // pred_fallthru
    _
  // Predicated region
  $region42: #{sysbinder_forward.2} parent=0 // pred_check
    _
  $region43: #{sysbinder_forward.2} parent=0 // pred_check_branch
    %539 = sbr.rel (0) target = $region45
  $region44: #{sysbinder_forward.2} parent=0 // pred_region
    _
  $region45: #{sysbinder_forward.2} parent=0 // pred_fallthru
    _

// kernel: sysbinder_forward.3
$region0: #{sysbinder_forward.3}
  #allocation0 [shape = 'u32[]', space=smem, size = 0x4, offset = 0x4, fixed_abs, tag = 'smem constant byte address 0x4 - core index']
  #allocation1 [shape = 'u32[144,128]{1,0:T(1,128)}', space=vmem, size = 0x12000, scoped, tag = 'internal scratch']
  %s0 = inlined_call_operand.vmem [shape: f32[2,16,8], index: 0, kind: input, shape index: {}]
  %s1 = inlined_call_operand.vmem [shape: f32[2,4,32], index: 1, kind: input, shape index: {}]
  %s2 = inlined_call_operand.vmem [shape: f32[4,8,8], index: 2, kind: input, shape index: {}]
  %s3 = inlined_call_operand.vmem [shape: f32[1,8], index: 3, kind: input, shape index: {}]
  %s4 = inlined_call_operand.vmem [shape: f32[1,8], index: 4, kind: input, shape index: {}]
  %s5 = inlined_call_operand.vmem [shape: f32[8,32], index: 5, kind: input, shape index: {}]
  %s6 = inlined_call_operand.vmem [shape: f32[1,32], index: 6, kind: input, shape index: {}]
  %s7 = inlined_call_operand.vmem [shape: f32[8,32], index: 7, kind: input, shape index: {}]
  %s8 = inlined_call_operand.vmem [shape: f32[1,32], index: 8, kind: input, shape index: {}]
  %s9 = inlined_call_operand.vmem [shape: f32[1,32], index: 9, kind: input, shape index: {}]
  %s10 = inlined_call_operand.vmem [shape: f32[1,32], index: 10, kind: input, shape index: {}]
  %s11 = inlined_call_operand.vmem [shape: f32[32,32], index: 11, kind: input, shape index: {}]
  %s12 = inlined_call_operand.vmem [shape: f32[1,32], index: 12, kind: input, shape index: {}]
  %s13 = inlined_call_operand.vmem [shape: f32[4,8,24], index: 13, kind: input, shape index: {}]
  %s14 = inlined_call_operand.vmem [shape: f32[4,8,24], index: 14, kind: input, shape index: {}]
  %s15 = inlined_call_operand.vmem [shape: f32[4,1,24], index: 15, kind: input, shape index: {}]
  %s16 = inlined_call_operand.vmem [shape: f32[4,1,24], index: 16, kind: input, shape index: {}]
  %s17 = inlined_call_operand.vmem [shape: f32[4,8,32], index: 17, kind: input, shape index: {}]
  %s18 = inlined_call_operand.vmem [shape: f32[4,1,32], index: 18, kind: input, shape index: {}]
  %s19 = inlined_call_operand.vmem [shape: f32[4,32,8], index: 19, kind: input, shape index: {}]
  %s20 = inlined_call_operand.vmem [shape: f32[4,1,8], index: 20, kind: input, shape index: {}]
  %s21 = inlined_call_operand.hbm [shape: f32[2,4,32], index: 21, kind: output, shape index: {0}]
  %s22 = inlined_call_operand.hbm [shape: f32[2,4,16], index: 22, kind: output, shape index: {1}]
  %23 = xla_tuple %s21, %s22
  %s24 = sld [smem:[#allocation0]]
  $region132: #{sysbinder_forward.3} parent=0
    _
  %s26 = ssub.s32 1, %s24
  %s27 = scalar_select 0, %s26, %s24
  $region1: #{sysbinder_forward.3} parent=0
    #allocation2 [shape = 'u8[4096]{0}', space=vmem, size = 0x1000, scoped, tag = 'output window, operand 0']
    #allocation3 [shape = 's32[2]{0}', space=sflag, size = 0x8, scoped, tag = 'scoped memory for sysbinder_forward.3']
    #allocation4 [shape = 'u8[4096]{0}', space=vmem, size = 0x1000, scoped, tag = 'output window, operand 1']
    #allocation5 [shape = 's32[2]{0}', space=sflag, size = 0x8, scoped, tag = 'scoped memory for sysbinder_forward.3']
    %28 = vsyncpa [#allocation3], 0
    %s29 = scalar_lea.sflag [#allocation3], 1
    %30 = vsyncpa %s29, 0
    %31 = vsyncpa [#allocation5], 0
    %s32 = scalar_lea.sflag [#allocation5], 1
    %33 = vsyncpa %s32, 0
    loop: start=0, step=1, limit=4
    $region2: #{sysbinder_forward.3} parent=1 // loop_pre_header
      _
    $region3: #{sysbinder_forward.3} parent=1 // loop_header
      %s35 = sphi 0, %s39
      %p36 = scmp.ge.s32.totalorder %s35, 4
      %s45 = sphi 0, %s47
      %s48 = sphi 0, %s45
      %s49 = sphi 0, %s48
      %s65 = sphi 0, %s49
      %s71 = sphi 0, %s73
      %s74 = sphi 0, %s71
      %s75 = sphi 0, %s74
      %s91 = sphi 0, %s75
      %s95 = sphi 0, %s95
      %s97 = sphi 0, %s95
      %s98 = sphi 0, %s97
      %s112 = sphi 0, %s98
      %s116 = sphi 0, %s116
      %s118 = sphi 0, %s116
      %s119 = sphi 0, %s118
      %s133 = sphi 0, %s119
      %s137 = sphi 0, %s137
      %s139 = sphi 0, %s137
      %s140 = sphi 0, %s139
      %s154 = sphi 0, %s140
      %s158 = sphi 0, %s158
      %s160 = sphi 0, %s158
      %s161 = sphi 0, %s160
      %s175 = sphi 0, %s161
      %s179 = sphi 0, %s179
      %s181 = sphi 0, %s179
      %s182 = sphi 0, %s181
      %s196 = sphi 0, %s182
      %s200 = sphi 0, %s200
      %s202 = sphi 0, %s200
      %s203 = sphi 0, %s202
      %s217 = sphi 0, %s203
      %s221 = sphi 0, %s221
      %s223 = sphi 0, %s221
      %s224 = sphi 0, %s223
      %s238 = sphi 0, %s224
      %s242 = sphi 0, %s242
      %s244 = sphi 0, %s242
      %s245 = sphi 0, %s244
      %s259 = sphi 0, %s245
      %s263 = sphi 0, %s263
      %s265 = sphi 0, %s263
      %s266 = sphi 0, %s265
      %s280 = sphi 0, %s266
      %s284 = sphi 0, %s284
      %s286 = sphi 0, %s284
      %s287 = sphi 0, %s286
      %s301 = sphi 0, %s287
      %s305 = sphi 0, %s305
      %s307 = sphi 0, %s305
      %s308 = sphi 0, %s307
      %s322 = sphi 0, %s308
      %s326 = sphi 0, %s326
      %s328 = sphi 0, %s326
      %s329 = sphi 0, %s328
      %s343 = sphi 0, %s329
      %s347 = sphi 0, %s347
      %s349 = sphi 0, %s347
      %s350 = sphi 0, %s349
      %s364 = sphi 0, %s350
      %s368 = sphi 0, %s368
      %s370 = sphi 0, %s368
      %s371 = sphi 0, %s370
      %s385 = sphi 0, %s371
      %s389 = sphi 0, %s389
      %s391 = sphi 0, %s389
      %s392 = sphi 0, %s391
      %s406 = sphi 0, %s392
      %s410 = sphi 0, %s410
      %s412 = sphi 0, %s410
      %s413 = sphi 0, %s412
      %s427 = sphi 0, %s413
      %s431 = sphi 0, %s431
      %s433 = sphi 0, %s431
      %s434 = sphi 0, %s433
      %s448 = sphi 0, %s434
      %s452 = sphi 0, %s452
      %s454 = sphi 0, %s452
      %s455 = sphi 0, %s454
      %s469 = sphi 0, %s455
      %s473 = sphi 0, %s473
      %s475 = sphi 0, %s473
      %s476 = sphi 0, %s475
      %s490 = sphi 0, %s476
      %s496 = sphi 0, %s498
      %s499 = sphi 0, %s496
      %s500 = sphi 0, %s499
      %s516 = sphi 0, %s500
      %s522 = sphi 0, %s524
      %s525 = sphi 0, %s522
      %s526 = sphi 0, %s525
      %s542 = sphi 0, %s526
    $region4: #{sysbinder_forward.3} parent=1 // loop_header_branch
      %38 = sbr.rel (%p36) target = $region8
    $region5: #{sysbinder_forward.3} parent=1 // loop_body
      %s40 = ssub.s32 %s35, 1
      %s41 = ssub.s32 %s35, 2
      %s42 = sadd.s32 %s35, 1
      %s43 = ssub.s32 %s35, %s42
      %p44 = scmp.eq.s32.totalorder %s43, 0
      %s46 = sadd.s32 %s45, 1
      %s47 = scalar_select %p44, %s45, %s46
      %p50 = pneg %p44
      %p51 = scmp.eq.s32.totalorder %s35, 1
      %p52 = por %p50, %p51
      %p53 = scmp.ne.s32.totalorder %s45, %s48
      %p54 = scmp.eq.s32.totalorder %s35, 0
      %p55 = por %p53, %p54
      %p56 = scmp.ne.s32.totalorder %s45, %s48
      %p57 = scmp.eq.s32.totalorder %s40, 1
      %p58 = por %p56, %p57
      %p59 = scmp.ne.s32.totalorder %s48, %s49
      %p60 = scmp.eq.s32.totalorder %s40, 0
      %p61 = por %p59, %p60
      %p62 = scmp.ne.s32.totalorder %s48, %s49
      %p63 = scmp.eq.s32.totalorder %s41, 1
      %p64 = por %p62, %p63
      %p66 = scmp.ne.s32.totalorder %s49, %s65
      %p67 = scmp.eq.s32.totalorder %s41, 0
      %p68 = por %p66, %p67
      %s69 = ssub.s32 %s35, %s42
      %p70 = scmp.eq.s32.totalorder %s69, 0
      %s72 = sadd.s32 %s71, 1
      %s73 = scalar_select %p70, %s71, %s72
      %p76 = pneg %p70
      %p77 = scmp.eq.s32.totalorder %s35, 1
      %p78 = por %p76, %p77
      %p79 = scmp.ne.s32.totalorder %s71, %s74
      %p80 = scmp.eq.s32.totalorder %s35, 0
      %p81 = por %p79, %p80
      %p82 = scmp.ne.s32.totalorder %s71, %s74
      %p83 = scmp.eq.s32.totalorder %s40, 1
      %p84 = por %p82, %p83
      %p85 = scmp.ne.s32.totalorder %s74, %s75
      %p86 = scmp.eq.s32.totalorder %s40, 0
      %p87 = por %p85, %p86
      %p88 = scmp.ne.s32.totalorder %s74, %s75
      %p89 = scmp.eq.s32.totalorder %s41, 1
      %p90 = por %p88, %p89
      %p92 = scmp.ne.s32.totalorder %s75, %s91
      %p93 = scmp.eq.s32.totalorder %s41, 0
      %p94 = por %p92, %p93
      %s96 = sadd.s32 %s95, 1
      %p99 = scmp.eq.s32.totalorder %s35, 1
      %p100 = scmp.ne.s32.totalorder %s95, %s97
      %p101 = scmp.eq.s32.totalorder %s35, 0
      %p102 = por %p100, %p101
      %p103 = scmp.ne.s32.totalorder %s95, %s97
      %p104 = scmp.eq.s32.totalorder %s40, 1
      %p105 = por %p103, %p104
      %p106 = scmp.ne.s32.totalorder %s97, %s98
      %p107 = scmp.eq.s32.totalorder %s40, 0
      %p108 = por %p106, %p107
      %p109 = scmp.ne.s32.totalorder %s97, %s98
      %p110 = scmp.eq.s32.totalorder %s41, 1
      %p111 = por %p109, %p110
      %p113 = scmp.ne.s32.totalorder %s98, %s112
      %p114 = scmp.eq.s32.totalorder %s41, 0
      %p115 = por %p113, %p114
      %s117 = sadd.s32 %s116, 1
      %p120 = scmp.eq.s32.totalorder %s35, 1
      %p121 = scmp.ne.s32.totalorder %s116, %s118
      %p122 = scmp.eq.s32.totalorder %s35, 0
      %p123 = por %p121, %p122
      %p124 = scmp.ne.s32.totalorder %s116, %s118
      %p125 = scmp.eq.s32.totalorder %s40, 1
      %p126 = por %p124, %p125
      %p127 = scmp.ne.s32.totalorder %s118, %s119
      %p128 = scmp.eq.s32.totalorder %s40, 0
      %p129 = por %p127, %p128
      %p130 = scmp.ne.s32.totalorder %s118, %s119
      %p131 = scmp.eq.s32.totalorder %s41, 1
      %p132 = por %p130, %p131
      %p134 = scmp.ne.s32.totalorder %s119, %s133
      %p135 = scmp.eq.s32.totalorder %s41, 0
      %p136 = por %p134, %p135
      %s138 = sadd.s32 %s137, 1
      %p141 = scmp.eq.s32.totalorder %s35, 1
      %p142 = scmp.ne.s32.totalorder %s137, %s139
      %p143 = scmp.eq.s32.totalorder %s35, 0
      %p144 = por %p142, %p143
      %p145 = scmp.ne.s32.totalorder %s137, %s139
      %p146 = scmp.eq.s32.totalorder %s40, 1
      %p147 = por %p145, %p146
      %p148 = scmp.ne.s32.totalorder %s139, %s140
      %p149 = scmp.eq.s32.totalorder %s40, 0
      %p150 = por %p148, %p149
      %p151 = scmp.ne.s32.totalorder %s139, %s140
      %p152 = scmp.eq.s32.totalorder %s41, 1
      %p153 = por %p151, %p152
      %p155 = scmp.ne.s32.totalorder %s140, %s154
      %p156 = scmp.eq.s32.totalorder %s41, 0
      %p157 = por %p155, %p156
      %s159 = sadd.s32 %s158, 1
      %p162 = scmp.eq.s32.totalorder %s35, 1
      %p163 = scmp.ne.s32.totalorder %s158, %s160
      %p164 = scmp.eq.s32.totalorder %s35, 0
      %p165 = por %p163, %p164
      %p166 = scmp.ne.s32.totalorder %s158, %s160
      %p167 = scmp.eq.s32.totalorder %s40, 1
      %p168 = por %p166, %p167
      %p169 = scmp.ne.s32.totalorder %s160, %s161
      %p170 = scmp.eq.s32.totalorder %s40, 0
      %p171 = por %p169, %p170
      %p172 = scmp.ne.s32.totalorder %s160, %s161
      %p173 = scmp.eq.s32.totalorder %s41, 1
      %p174 = por %p172, %p173
      %p176 = scmp.ne.s32.totalorder %s161, %s175
      %p177 = scmp.eq.s32.totalorder %s41, 0
      %p178 = por %p176, %p177
      %s180 = sadd.s32 %s179, 1
      %p183 = scmp.eq.s32.totalorder %s35, 1
      %p184 = scmp.ne.s32.totalorder %s179, %s181
      %p185 = scmp.eq.s32.totalorder %s35, 0
      %p186 = por %p184, %p185
      %p187 = scmp.ne.s32.totalorder %s179, %s181
      %p188 = scmp.eq.s32.totalorder %s40, 1
      %p189 = por %p187, %p188
      %p190 = scmp.ne.s32.totalorder %s181, %s182
      %p191 = scmp.eq.s32.totalorder %s40, 0
      %p192 = por %p190, %p191
      %p193 = scmp.ne.s32.totalorder %s181, %s182
      %p194 = scmp.eq.s32.totalorder %s41, 1
      %p195 = por %p193, %p194
      %p197 = scmp.ne.s32.totalorder %s182, %s196
      %p198 = scmp.eq.s32.totalorder %s41, 0
      %p199 = por %p197, %p198
      %s201 = sadd.s32 %s200, 1
      %p204 = scmp.eq.s32.totalorder %s35, 1
      %p205 = scmp.ne.s32.totalorder %s200, %s202
      %p206 = scmp.eq.s32.totalorder %s35, 0
      %p207 = por %p205, %p206
      %p208 = scmp.ne.s32.totalorder %s200, %s202
      %p209 = scmp.eq.s32.totalorder %s40, 1
      %p210 = por %p208, %p209
      %p211 = scmp.ne.s32.totalorder %s202, %s203
      %p212 = scmp.eq.s32.totalorder %s40, 0
      %p213 = por %p211, %p212
      %p214 = scmp.ne.s32.totalorder %s202, %s203
      %p215 = scmp.eq.s32.totalorder %s41, 1
      %p216 = por %p214, %p215
      %p218 = scmp.ne.s32.totalorder %s203, %s217
      %p219 = scmp.eq.s32.totalorder %s41, 0
      %p220 = por %p218, %p219
      %s222 = sadd.s32 %s221, 1
      %p225 = scmp.eq.s32.totalorder %s35, 1
      %p226 = scmp.ne.s32.totalorder %s221, %s223
      %p227 = scmp.eq.s32.totalorder %s35, 0
      %p228 = por %p226, %p227
      %p229 = scmp.ne.s32.totalorder %s221, %s223
      %p230 = scmp.eq.s32.totalorder %s40, 1
      %p231 = por %p229, %p230
      %p232 = scmp.ne.s32.totalorder %s223, %s224
      %p233 = scmp.eq.s32.totalorder %s40, 0
      %p234 = por %p232, %p233
      %p235 = scmp.ne.s32.totalorder %s223, %s224
      %p236 = scmp.eq.s32.totalorder %s41, 1
      %p237 = por %p235, %p236
      %p239 = scmp.ne.s32.totalorder %s224, %s238
      %p240 = scmp.eq.s32.totalorder %s41, 0
      %p241 = por %p239, %p240
      %s243 = sadd.s32 %s242, 1
      %p246 = scmp.eq.s32.totalorder %s35, 1
      %p247 = scmp.ne.s32.totalorder %s242, %s244
      %p248 = scmp.eq.s32.totalorder %s35, 0
      %p249 = por %p247, %p248
      %p250 = scmp.ne.s32.totalorder %s242, %s244
      %p251 = scmp.eq.s32.totalorder %s40, 1
      %p252 = por %p250, %p251
      %p253 = scmp.ne.s32.totalorder %s244, %s245
      %p254 = scmp.eq.s32.totalorder %s40, 0
      %p255 = por %p253, %p254
      %p256 = scmp.ne.s32.totalorder %s244, %s245
      %p257 = scmp.eq.s32.totalorder %s41, 1
      %p258 = por %p256, %p257
      %p260 = scmp.ne.s32.totalorder %s245, %s259
      %p261 = scmp.eq.s32.totalorder %s41, 0
      %p262 = por %p260, %p261
      %s264 = sadd.s32 %s263, 1
      %p267 = scmp.eq.s32.totalorder %s35, 1
      %p268 = scmp.ne.s32.totalorder %s263, %s265
      %p269 = scmp.eq.s32.totalorder %s35, 0
      %p270 = por %p268, %p269
      %p271 = scmp.ne.s32.totalorder %s263, %s265
      %p272 = scmp.eq.s32.totalorder %s40, 1
      %p273 = por %p271, %p272
      %p274 = scmp.ne.s32.totalorder %s265, %s266
      %p275 = scmp.eq.s32.totalorder %s40, 0
      %p276 = por %p274, %p275
      %p277 = scmp.ne.s32.totalorder %s265, %s266
      %p278 = scmp.eq.s32.totalorder %s41, 1
      %p279 = por %p277, %p278
      %p281 = scmp.ne.s32.totalorder %s266, %s280
      %p282 = scmp.eq.s32.totalorder %s41, 0
      %p283 = por %p281, %p282
      %s285 = sadd.s32 %s284, 1
      %p288 = scmp.eq.s32.totalorder %s35, 1
      %p289 = scmp.ne.s32.totalorder %s284, %s286
      %p290 = scmp.eq.s32.totalorder %s35, 0
      %p291 = por %p289, %p290
      %p292 = scmp.ne.s32.totalorder %s284, %s286
      %p293 = scmp.eq.s32.totalorder %s40, 1
      %p294 = por %p292, %p293
      %p295 = scmp.ne.s32.totalorder %s286, %s287
      %p296 = scmp.eq.s32.totalorder %s40, 0
      %p297 = por %p295, %p296
      %p298 = scmp.ne.s32.totalorder %s286, %s287
      %p299 = scmp.eq.s32.totalorder %s41, 1
      %p300 = por %p298, %p299
      %p302 = scmp.ne.s32.totalorder %s287, %s301
      %p303 = scmp.eq.s32.totalorder %s41, 0
      %p304 = por %p302, %p303
      %s306 = sadd.s32 %s305, 1
      %p309 = scmp.eq.s32.totalorder %s35, 1
      %p310 = scmp.ne.s32.totalorder %s305, %s307
      %p311 = scmp.eq.s32.totalorder %s35, 0
      %p312 = por %p310, %p311
      %p313 = scmp.ne.s32.totalorder %s305, %s307
      %p314 = scmp.eq.s32.totalorder %s40, 1
      %p315 = por %p313, %p314
      %p316 = scmp.ne.s32.totalorder %s307, %s308
      %p317 = scmp.eq.s32.totalorder %s40, 0
      %p318 = por %p316, %p317
      %p319 = scmp.ne.s32.totalorder %s307, %s308
      %p320 = scmp.eq.s32.totalorder %s41, 1
      %p321 = por %p319, %p320
      %p323 = scmp.ne.s32.totalorder %s308, %s322
      %p324 = scmp.eq.s32.totalorder %s41, 0
      %p325 = por %p323, %p324
      %s327 = sadd.s32 %s326, 1
      %p330 = scmp.eq.s32.totalorder %s35, 1
      %p331 = scmp.ne.s32.totalorder %s326, %s328
      %p332 = scmp.eq.s32.totalorder %s35, 0
      %p333 = por %p331, %p332
      %p334 = scmp.ne.s32.totalorder %s326, %s328
      %p335 = scmp.eq.s32.totalorder %s40, 1
      %p336 = por %p334, %p335
      %p337 = scmp.ne.s32.totalorder %s328, %s329
      %p338 = scmp.eq.s32.totalorder %s40, 0
      %p339 = por %p337, %p338
      %p340 = scmp.ne.s32.totalorder %s328, %s329
      %p341 = scmp.eq.s32.totalorder %s41, 1
      %p342 = por %p340, %p341
      %p344 = scmp.ne.s32.totalorder %s329, %s343
      %p345 = scmp.eq.s32.totalorder %s41, 0
      %p346 = por %p344, %p345
      %s348 = sadd.s32 %s347, 1
      %p351 = scmp.eq.s32.totalorder %s35, 1
      %p352 = scmp.ne.s32.totalorder %s347, %s349
      %p353 = scmp.eq.s32.totalorder %s35, 0
      %p354 = por %p352, %p353
      %p355 = scmp.ne.s32.totalorder %s347, %s349
      %p356 = scmp.eq.s32.totalorder %s40, 1
      %p357 = por %p355, %p356
      %p358 = scmp.ne.s32.totalorder %s349, %s350
      %p359 = scmp.eq.s32.totalorder %s40, 0
      %p360 = por %p358, %p359
      %p361 = scmp.ne.s32.totalorder %s349, %s350
      %p362 = scmp.eq.s32.totalorder %s41, 1
      %p363 = por %p361, %p362
      %p365 = scmp.ne.s32.totalorder %s350, %s364
      %p366 = scmp.eq.s32.totalorder %s41, 0
      %p367 = por %p365, %p366
      %s369 = sadd.s32 %s368, 1
      %p372 = scmp.eq.s32.totalorder %s35, 1
      %p373 = scmp.ne.s32.totalorder %s368, %s370
      %p374 = scmp.eq.s32.totalorder %s35, 0
      %p375 = por %p373, %p374
      %p376 = scmp.ne.s32.totalorder %s368, %s370
      %p377 = scmp.eq.s32.totalorder %s40, 1
      %p378 = por %p376, %p377
      %p379 = scmp.ne.s32.totalorder %s370, %s371
      %p380 = scmp.eq.s32.totalorder %s40, 0
      %p381 = por %p379, %p380
      %p382 = scmp.ne.s32.totalorder %s370, %s371
      %p383 = scmp.eq.s32.totalorder %s41, 1
      %p384 = por %p382, %p383
      %p386 = scmp.ne.s32.totalorder %s371, %s385
      %p387 = scmp.eq.s32.totalorder %s41, 0
      %p388 = por %p386, %p387
      %s390 = sadd.s32 %s389, 1
      %p393 = scmp.eq.s32.totalorder %s35, 1
      %p394 = scmp.ne.s32.totalorder %s389, %s391
      %p395 = scmp.eq.s32.totalorder %s35, 0
      %p396 = por %p394, %p395
      %p397 = scmp.ne.s32.totalorder %s389, %s391
      %p398 = scmp.eq.s32.totalorder %s40, 1
      %p399 = por %p397, %p398
      %p400 = scmp.ne.s32.totalorder %s391, %s392
      %p401 = scmp.eq.s32.totalorder %s40, 0
      %p402 = por %p400, %p401
      %p403 = scmp.ne.s32.totalorder %s391, %s392
      %p404 = scmp.eq.s32.totalorder %s41, 1
      %p405 = por %p403, %p404
      %p407 = scmp.ne.s32.totalorder %s392, %s406
      %p408 = scmp.eq.s32.totalorder %s41, 0
      %p409 = por %p407, %p408
      %s411 = sadd.s32 %s410, 1
      %p414 = scmp.eq.s32.totalorder %s35, 1
      %p415 = scmp.ne.s32.totalorder %s410, %s412
      %p416 = scmp.eq.s32.totalorder %s35, 0
      %p417 = por %p415, %p416
      %p418 = scmp.ne.s32.totalorder %s410, %s412
      %p419 = scmp.eq.s32.totalorder %s40, 1
      %p420 = por %p418, %p419
      %p421 = scmp.ne.s32.totalorder %s412, %s413
      %p422 = scmp.eq.s32.totalorder %s40, 0
      %p423 = por %p421, %p422
      %p424 = scmp.ne.s32.totalorder %s412, %s413
      %p425 = scmp.eq.s32.totalorder %s41, 1
      %p426 = por %p424, %p425
      %p428 = scmp.ne.s32.totalorder %s413, %s427
      %p429 = scmp.eq.s32.totalorder %s41, 0
      %p430 = por %p428, %p429
      %s432 = sadd.s32 %s431, 1
      %p435 = scmp.eq.s32.totalorder %s35, 1
      %p436 = scmp.ne.s32.totalorder %s431, %s433
      %p437 = scmp.eq.s32.totalorder %s35, 0
      %p438 = por %p436, %p437
      %p439 = scmp.ne.s32.totalorder %s431, %s433
      %p440 = scmp.eq.s32.totalorder %s40, 1
      %p441 = por %p439, %p440
      %p442 = scmp.ne.s32.totalorder %s433, %s434
      %p443 = scmp.eq.s32.totalorder %s40, 0
      %p444 = por %p442, %p443
      %p445 = scmp.ne.s32.totalorder %s433, %s434
      %p446 = scmp.eq.s32.totalorder %s41, 1
      %p447 = por %p445, %p446
      %p449 = scmp.ne.s32.totalorder %s434, %s448
      %p450 = scmp.eq.s32.totalorder %s41, 0
      %p451 = por %p449, %p450
      %s453 = sadd.s32 %s452, 1
      %p456 = scmp.eq.s32.totalorder %s35, 1
      %p457 = scmp.ne.s32.totalorder %s452, %s454
      %p458 = scmp.eq.s32.totalorder %s35, 0
      %p459 = por %p457, %p458
      %p460 = scmp.ne.s32.totalorder %s452, %s454
      %p461 = scmp.eq.s32.totalorder %s40, 1
      %p462 = por %p460, %p461
      %p463 = scmp.ne.s32.totalorder %s454, %s455
      %p464 = scmp.eq.s32.totalorder %s40, 0
      %p465 = por %p463, %p464
      %p466 = scmp.ne.s32.totalorder %s454, %s455
      %p467 = scmp.eq.s32.totalorder %s41, 1
      %p468 = por %p466, %p467
      %p470 = scmp.ne.s32.totalorder %s455, %s469
      %p471 = scmp.eq.s32.totalorder %s41, 0
      %p472 = por %p470, %p471
      %s474 = sadd.s32 %s473, 1
      %p477 = scmp.eq.s32.totalorder %s35, 1
      %p478 = scmp.ne.s32.totalorder %s473, %s475
      %p479 = scmp.eq.s32.totalorder %s35, 0
      %p480 = por %p478, %p479
      %p481 = scmp.ne.s32.totalorder %s473, %s475
      %p482 = scmp.eq.s32.totalorder %s40, 1
      %p483 = por %p481, %p482
      %p484 = scmp.ne.s32.totalorder %s475, %s476
      %p485 = scmp.eq.s32.totalorder %s40, 0
      %p486 = por %p484, %p485
      %p487 = scmp.ne.s32.totalorder %s475, %s476
      %p488 = scmp.eq.s32.totalorder %s41, 1
      %p489 = por %p487, %p488
      %p491 = scmp.ne.s32.totalorder %s476, %s490
      %p492 = scmp.eq.s32.totalorder %s41, 0
      %p493 = por %p491, %p492
      %s494 = ssub.s32 %s35, %s42
      %p495 = scmp.eq.s32.totalorder %s494, 0
      %s497 = sadd.s32 %s496, 1
      %s498 = scalar_select %p495, %s496, %s497
      %p501 = pneg %p495
      %p502 = scmp.eq.s32.totalorder %s35, 1
      %p503 = por %p501, %p502
      %p504 = scmp.ne.s32.totalorder %s496, %s499
      %p505 = scmp.eq.s32.totalorder %s35, 0
      %p506 = por %p504, %p505
      %p507 = scmp.ne.s32.totalorder %s496, %s499
      %p508 = scmp.eq.s32.totalorder %s40, 1
      %p509 = por %p507, %p508
      %p510 = scmp.ne.s32.totalorder %s499, %s500
      %p511 = scmp.eq.s32.totalorder %s40, 0
      %p512 = por %p510, %p511
      %p513 = scmp.ne.s32.totalorder %s499, %s500
      %p514 = scmp.eq.s32.totalorder %s41, 1
      %p515 = por %p513, %p514
      %p517 = scmp.ne.s32.totalorder %s500, %s516
      %p518 = scmp.eq.s32.totalorder %s41, 0
      %p519 = por %p517, %p518
      %s520 = ssub.s32 %s35, %s42
      %p521 = scmp.eq.s32.totalorder %s520, 0
      %s523 = sadd.s32 %s522, 1
      %s524 = scalar_select %p521, %s522, %s523
      %p527 = pneg %p521
      %p528 = scmp.eq.s32.totalorder %s35, 1
      %p529 = por %p527, %p528
      %p530 = scmp.ne.s32.totalorder %s522, %s525
      %p531 = scmp.eq.s32.totalorder %s35, 0
      %p532 = por %p530, %p531
      %p533 = scmp.ne.s32.totalorder %s522, %s525
      %p534 = scmp.eq.s32.totalorder %s40, 1
      %p535 = por %p533, %p534
      %p536 = scmp.ne.s32.totalorder %s525, %s526
      %p537 = scmp.eq.s32.totalorder %s40, 0
      %p538 = por %p536, %p537
      %p539 = scmp.ne.s32.totalorder %s525, %s526
      %p540 = scmp.eq.s32.totalorder %s41, 1
      %p541 = por %p539, %p540
      %p543 = scmp.ne.s32.totalorder %s526, %s542
      %p544 = scmp.eq.s32.totalorder %s41, 0
      %p545 = por %p543, %p544
      %p546 = scmp.le.s32.totalorder 1, %s35
      %p547 = scmp.lt.s32.totalorder %s35, 3
      %p548 = pnand %p546, %p547
      %p549 = pneg %p548
      // Predicated region
      $region9: #{sysbinder_forward.3} parent=5 // pred_check
        _
      $region10: #{sysbinder_forward.3} parent=5 // pred_check_branch
        %551 = sbr.rel (%p548) target = $region12
      $region11: #{sysbinder_forward.3} parent=5 // pred_region
        %s552 = ssub.s32 %s35, 1
        // Predicated region
        $region13: #{sysbinder_forward.3} parent=11 // pred_check
          %p553 = pneg %p108
        $region14: #{sysbinder_forward.3} parent=11 // pred_check_branch
          %555 = sbr.rel (%p553) target = $region16
        $region15: #{sysbinder_forward.3} parent=11 // pred_region
          _
        $region16: #{sysbinder_forward.3} parent=11 // pred_fallthru
          _
        // Predicated region
        $region17: #{sysbinder_forward.3} parent=11 // pred_check
          %p556 = pneg %p129
        $region18: #{sysbinder_forward.3} parent=11 // pred_check_branch
          %558 = sbr.rel (%p556) target = $region20
        $region19: #{sysbinder_forward.3} parent=11 // pred_region
          _
        $region20: #{sysbinder_forward.3} parent=11 // pred_fallthru
          _
        // Predicated region
        $region21: #{sysbinder_forward.3} parent=11 // pred_check
          %p559 = pneg %p150
        $region22: #{sysbinder_forward.3} parent=11 // pred_check_branch
          %561 = sbr.rel (%p559) target = $region24
        $region23: #{sysbinder_forward.3} parent=11 // pred_region
          _
        $region24: #{sysbinder_forward.3} parent=11 // pred_fallthru
          _
        // Predicated region
        $region25: #{sysbinder_forward.3} parent=11 // pred_check
          %p562 = pneg %p171
        $region26: #{sysbinder_forward.3} parent=11 // pred_check_branch
          %564 = sbr.rel (%p562) target = $region28
        $region27: #{sysbinder_forward.3} parent=11 // pred_region
          _
        $region28: #{sysbinder_forward.3} parent=11 // pred_fallthru
          _
        // Predicated region
        $region29: #{sysbinder_forward.3} parent=11 // pred_check
          %p565 = pneg %p192
        $region30: #{sysbinder_forward.3} parent=11 // pred_check_branch
          %567 = sbr.rel (%p565) target = $region32
        $region31: #{sysbinder_forward.3} parent=11 // pred_region
          _
        $region32: #{sysbinder_forward.3} parent=11 // pred_fallthru
          _
        // Predicated region
        $region33: #{sysbinder_forward.3} parent=11 // pred_check
          %p568 = pneg %p213
        $region34: #{sysbinder_forward.3} parent=11 // pred_check_branch
          %570 = sbr.rel (%p568) target = $region36
        $region35: #{sysbinder_forward.3} parent=11 // pred_region
          _
        $region36: #{sysbinder_forward.3} parent=11 // pred_fallthru
          _
        // Predicated region
        $region37: #{sysbinder_forward.3} parent=11 // pred_check
          %p571 = pneg %p234
        $region38: #{sysbinder_forward.3} parent=11 // pred_check_branch
          %573 = sbr.rel (%p571) target = $region40
        $region39: #{sysbinder_forward.3} parent=11 // pred_region
          _
        $region40: #{sysbinder_forward.3} parent=11 // pred_fallthru
          _
        // Predicated region
        $region41: #{sysbinder_forward.3} parent=11 // pred_check
          %p574 = pneg %p255
        $region42: #{sysbinder_forward.3} parent=11 // pred_check_branch
          %576 = sbr.rel (%p574) target = $region44
        $region43: #{sysbinder_forward.3} parent=11 // pred_region
          _
        $region44: #{sysbinder_forward.3} parent=11 // pred_fallthru
          _
        // Predicated region
        $region45: #{sysbinder_forward.3} parent=11 // pred_check
          %p577 = pneg %p276
        $region46: #{sysbinder_forward.3} parent=11 // pred_check_branch
          %579 = sbr.rel (%p577) target = $region48
        $region47: #{sysbinder_forward.3} parent=11 // pred_region
          _
        $region48: #{sysbinder_forward.3} parent=11 // pred_fallthru
          _
        // Predicated region
        $region49: #{sysbinder_forward.3} parent=11 // pred_check
          %p580 = pneg %p297
        $region50: #{sysbinder_forward.3} parent=11 // pred_check_branch
          %582 = sbr.rel (%p580) target = $region52
        $region51: #{sysbinder_forward.3} parent=11 // pred_region
          _
        $region52: #{sysbinder_forward.3} parent=11 // pred_fallthru
          _
        // Predicated region
        $region53: #{sysbinder_forward.3} parent=11 // pred_check
          %p583 = pneg %p318
        $region54: #{sysbinder_forward.3} parent=11 // pred_check_branch
          %585 = sbr.rel (%p583) target = $region56
        $region55: #{sysbinder_forward.3} parent=11 // pred_region
          _
        $region56: #{sysbinder_forward.3} parent=11 // pred_fallthru
          _
        // Predicated region
        $region57: #{sysbinder_forward.3} parent=11 // pred_check
          %p586 = pneg %p339
        $region58: #{sysbinder_forward.3} parent=11 // pred_check_branch
          %588 = sbr.rel (%p586) target = $region60
        $region59: #{sysbinder_forward.3} parent=11 // pred_region
          _
        $region60: #{sysbinder_forward.3} parent=11 // pred_fallthru
          _
        // Predicated region
        $region61: #{sysbinder_forward.3} parent=11 // pred_check
          %p589 = pneg %p360
        $region62: #{sysbinder_forward.3} parent=11 // pred_check_branch
          %591 = sbr.rel (%p589) target = $region64
        $region63: #{sysbinder_forward.3} parent=11 // pred_region
          _
        $region64: #{sysbinder_forward.3} parent=11 // pred_fallthru
          _
        // Predicated region
        $region65: #{sysbinder_forward.3} parent=11 // pred_check
          %p592 = pneg %p381
        $region66: #{sysbinder_forward.3} parent=11 // pred_check_branch
          %594 = sbr.rel (%p592) target = $region68
        $region67: #{sysbinder_forward.3} parent=11 // pred_region
          _
        $region68: #{sysbinder_forward.3} parent=11 // pred_fallthru
          _
        // Predicated region
        $region69: #{sysbinder_forward.3} parent=11 // pred_check
          %p595 = pneg %p402
        $region70: #{sysbinder_forward.3} parent=11 // pred_check_branch
          %597 = sbr.rel (%p595) target = $region72
        $region71: #{sysbinder_forward.3} parent=11 // pred_region
          _
        $region72: #{sysbinder_forward.3} parent=11 // pred_fallthru
          _
        // Predicated region
        $region73: #{sysbinder_forward.3} parent=11 // pred_check
          %p598 = pneg %p423
        $region74: #{sysbinder_forward.3} parent=11 // pred_check_branch
          %600 = sbr.rel (%p598) target = $region76
        $region75: #{sysbinder_forward.3} parent=11 // pred_region
          _
        $region76: #{sysbinder_forward.3} parent=11 // pred_fallthru
          _
        // Predicated region
        $region77: #{sysbinder_forward.3} parent=11 // pred_check
          %p601 = pneg %p444
        $region78: #{sysbinder_forward.3} parent=11 // pred_check_branch
          %603 = sbr.rel (%p601) target = $region80
        $region79: #{sysbinder_forward.3} parent=11 // pred_region
          _
        $region80: #{sysbinder_forward.3} parent=11 // pred_fallthru
          _
        // Predicated region
        $region81: #{sysbinder_forward.3} parent=11 // pred_check
          %p604 = pneg %p465
        $region82: #{sysbinder_forward.3} parent=11 // pred_check_branch
          %606 = sbr.rel (%p604) target = $region84
        $region83: #{sysbinder_forward.3} parent=11 // pred_region
          _
        $region84: #{sysbinder_forward.3} parent=11 // pred_fallthru
          _
        // Predicated region
        $region85: #{sysbinder_forward.3} parent=11 // pred_check
          %p607 = pneg %p486
        $region86: #{sysbinder_forward.3} parent=11 // pred_check_branch
          %609 = sbr.rel (%p607) target = $region88
        $region87: #{sysbinder_forward.3} parent=11 // pred_region
          _
        $region88: #{sysbinder_forward.3} parent=11 // pred_fallthru
          _
      $region12: #{sysbinder_forward.3} parent=5 // pred_fallthru
        _
      %p610 = scmp.lt.s32.totalorder %s35, 2
      // Predicated region
      $region89: #{sysbinder_forward.3} parent=5 // pred_check
        %p611 = pneg %p610
      $region90: #{sysbinder_forward.3} parent=5 // pred_check_branch
        %613 = sbr.rel (%p611) target = $region92
      $region91: #{sysbinder_forward.3} parent=5 // pred_region
        // Predicated region
        $region93: #{sysbinder_forward.3} parent=91 // pred_check
          %p614 = pneg %p55
        $region94: #{sysbinder_forward.3} parent=91 // pred_check_branch
          %616 = sbr.rel (%p614) target = $region96
        $region95: #{sysbinder_forward.3} parent=91 // pred_region
          %p617 = scmp.lt.s32.totalorder %s35, 1
          %s618 = scalar_select %p617, %s35, 1
          %s619 = smul.addr %s618, 2
          %s620 = smul.addr %s619, 8
          %s621 = scalar_lea.vmem %s0, %s620
        $region96: #{sysbinder_forward.3} parent=91 // pred_fallthru
          _
        // Predicated region
        $region97: #{sysbinder_forward.3} parent=91 // pred_check
          %p622 = pneg %p81
        $region98: #{sysbinder_forward.3} parent=91 // pred_check_branch
          %624 = sbr.rel (%p622) target = $region100
        $region99: #{sysbinder_forward.3} parent=91 // pred_region
          %p625 = scmp.lt.s32.totalorder %s35, 1
          %s626 = scalar_select %p625, %s35, 1
          %s627 = smul.addr %s626, 4
          %s628 = scalar_lea.vmem %s1, %s627
        $region100: #{sysbinder_forward.3} parent=91 // pred_fallthru
          _
      $region92: #{sysbinder_forward.3} parent=5 // pred_fallthru
        _
      %p629 = scmp.le.s32.totalorder 1, %s35
      %p630 = scmp.lt.s32.totalorder %s35, 3
      %p631 = pnand %p629, %p630
      %p632 = pneg %p631
      // Predicated region
      $region101: #{sysbinder_forward.3} parent=5 // pred_check
        _
      $region102: #{sysbinder_forward.3} parent=5 // pred_check_branch
        %634 = sbr.rel (%p631) target = $region104
      $region103: #{sysbinder_forward.3} parent=5 // pred_region
        %s635 = ssub.s32 %s35, 1
        %p636 = scmp.lt.s32.totalorder %s40, 1
        %s637 = scalar_select %p636, %s40, 1
        %s638 = smul.addr %s637, 2
        %s639 = smul.addr %s638, 8
        %s640 = scalar_lea.vmem %s0, %s639
        %p641 = pneg %p61
        %p642 = pneg %p58
        %p643 = scmp.lt.s32.totalorder %s40, 1
        %s644 = scalar_select %p643, %s40, 1
        %s645 = smul.addr %s644, 4
        %s646 = scalar_lea.vmem %s1, %s645
        %p647 = pneg %p87
        %p648 = pneg %p84
        %p649 = pneg %p108
        %p650 = pneg %p105
        %p651 = pneg %p129
        %p652 = pneg %p126
        %p653 = pneg %p150
        %p654 = pneg %p147
        %p655 = pneg %p171
        %p656 = pneg %p168
        %p657 = pneg %p192
        %p658 = pneg %p189
        %p659 = pneg %p213
        %p660 = pneg %p210
        %p661 = pneg %p234
        %p662 = pneg %p231
        %p663 = pneg %p255
        %p664 = pneg %p252
        %p665 = pneg %p276
        %p666 = pneg %p273
        %p667 = pneg %p297
        %p668 = pneg %p294
        %p669 = pneg %p318
        %p670 = pneg %p315
        %p671 = pneg %p339
        %p672 = pneg %p336
        %p673 = pneg %p360
        %p674 = pneg %p357
        %p675 = pneg %p381
        %p676 = pneg %p378
        %p677 = pneg %p402
        %p678 = pneg %p399
        %p679 = pneg %p423
        %p680 = pneg %p420
        %p681 = pneg %p444
        %p682 = pneg %p441
        %p683 = pneg %p465
        %p684 = pneg %p462
        %p685 = pneg %p486
        %p686 = pneg %p483
        %p687 = pneg %p512
        %p688 = pneg %p509
        %s689 = sand.u32 %s499, 1
        %s690 = scalar_lea.sflag [#allocation3], %s689
        %s691 = sand.u32 %s499, 1
        %s692 = smul.addr %s691, 4
        %s693 = scalar_lea.vmem [#allocation2], %s692
        %p694 = pneg %p538
        %p695 = pneg %p535
        %s696 = sand.u32 %s525, 1
        %s697 = scalar_lea.sflag [#allocation5], %s696
        %s698 = sand.u32 %s525, 1
        %s699 = smul.addr %s698, 4
        %s700 = scalar_lea.vmem [#allocation4], %s699
        %p701 = scmp.lt.s32.totalorder %s40, 1
        %s702 = scalar_select %p701, %s40, 1
        %s703 = smul.addr %s702, 2
        %s704 = smul.addr %s703, 8
        %s705 = scalar_lea.vmem %s0, %s704
        %p706 = scmp.lt.s32.totalorder %s40, 1
        %s707 = scalar_select %p706, %s40, 1
        %s708 = smul.addr %s707, 4
        %s709 = scalar_lea.vmem %s1, %s708
        %v710 = vld [vmem:[%s705] sm:$0xff]
        %v711 = vld [vmem:[%s705 + $0x8] sm:$0xff]
        %vm712 = vcmask 64512
        %v713 = vsel %vm712, %v710, 0.0
        %714 = vadd.xlane.f32.xlu0 %v713
        %v715 = vpop.xlane.xlu0 %714
        %v716 = vsel %vm712, %v711, 0.0
        %717 = vadd.xlane.f32.xlu0 %v716
        %v718 = vpop.xlane.xlu0 %717
        %v719 = vrcp.pop 8.0
        %v720 = vmul.f32 %v715, %v719
        %v721 = vmul.f32 %v718, %v719
        %v722 = vsub.f32 %v710, %v720
        %v723 = vsub.f32 %v711, %v721
        %v724 = vmul.f32 %v722, %v722
        %v725 = vmul.f32 %v723, %v723
        %v726 = vsel %vm712, %v724, 0.0
        %727 = vadd.xlane.f32.xlu0 %v726
        %v728 = vpop.xlane.xlu0 %727
        %v729 = vsel %vm712, %v725, 0.0
        %730 = vadd.xlane.f32.xlu0 %v729
        %v731 = vpop.xlane.xlu0 %730
        %v732 = vmul.f32 %v728, %v719
        %v733 = vmul.f32 %v731, %v719
        %v734 = vadd.f32 %v732, 1e-05
        %v735 = vadd.f32 %v733, 1e-05
        %v736 = vrsqrt.pop %v734
        %v737 = vrsqrt.pop %v735
        %v738 = vmul.f32 %v722, %v736
        %v739 = vmul.f32 %v723, %v737
        %v740 = vld [vmem:[%s3] sm:$0x1]
        %v742 = vlaneseq
        %v743 = vshrl.u32 %v742, 7
        %v744 = vsub.s32 0, %v743
        %v745 = vrot.slane %v740, %v744
        %v747 = vmul.f32 %v738, %v745
        %v748 = vmul.f32 %v739, %v745
        %v749 = vld [vmem:[%s4] sm:$0x1]
        %v751 = vlaneseq
        %v752 = vshrl.u32 %v751, 7
        %v753 = vsub.s32 0, %v752
        %v754 = vrot.slane %v749, %v753
        %v756 = vadd.f32 %v747, %v754
        %v757 = vadd.f32 %v748, %v754
        %v758 = vld [vmem:[%s5] sm:$0xff]
        %v759 = vld [vmem:[%s6] sm:$0x1]
        %v761 = vlaneseq
        %v762 = vshrl.u32 %v761, 7
        %v763 = vsub.s32 0, %v762
        %v764 = vrot.slane %v759, %v763
        %v767 = vsel %vm712, %v756, 0
        %v770 = vsel %vm712, %v757, 0
        %772 = vmatprep.subr.mxu0 0.0
        %773 = vmatpush1.msra.mxu0 0.0
        %774 = vmatprep.subr.mxu0 0.0
        %775 = vmatpush1.msra.mxu0 0.0
        %776 = vmatprep.subr.mxu0 0.0
        %777 = vmatpush1.msra.mxu0 0.0
        %778 = vmatprep.subr.mxu0 0.0
        %779 = vmatpush1.msra.mxu0 0.0
        %780 = vmatprep.subr.mxu0 0.0
        %781 = vmatpush1.msra.mxu0 0.0
        %782 = vmatprep.subr.mxu0 0.0
        %783 = vmatpush1.msra.mxu0 0.0
        %784 = vmatprep.subr.mxu0 0.0
        %785 = vmatpush1.msra.mxu0 0.0
        %786 = vmatprep.subr.mxu0 0.0
        %787 = vmatpush1.msra.mxu0 0.0
        %788 = vmatprep.subr.mxu0 0.0
        %789 = vmatpush1.msra.mxu0 0.0
        %790 = vmatprep.subr.mxu0 0.0
        %791 = vmatpush1.msra.mxu0 0.0
        %792 = vmatprep.subr.mxu0 0.0
        %793 = vmatpush1.msra.mxu0 0.0
        %794 = vmatprep.subr.mxu0 0.0
        %795 = vmatpush1.msra.mxu0 0.0
        %796 = vmatprep.subr.mxu0 0.0
        %797 = vmatpush1.msra.mxu0 0.0
        %798 = vmatprep.subr.mxu0 0.0
        %799 = vmatpush1.msra.mxu0 0.0
        %800 = vmatprep.subr.mxu0 0.0
        %801 = vmatpush1.msra.mxu0 0.0
        %802 = vmatprep.subr.mxu0 0.0
        %803 = vmatpush1.msra.mxu0 %v758
        %804 = vmatprep.subr.mxu0 0.0
        %805 = vmatpush2.msra.mxu0 0.0
        %806 = vmatprep.subr.mxu0 0.0
        %807 = vmatpush2.msra.mxu0 0.0
        %808 = vmatprep.subr.mxu0 0.0
        %809 = vmatpush2.msra.mxu0 0.0
        %810 = vmatprep.subr.mxu0 0.0
        %811 = vmatpush2.msra.mxu0 0.0
        %812 = vmatprep.subr.mxu0 0.0
        %813 = vmatpush2.msra.mxu0 0.0
        %814 = vmatprep.subr.mxu0 0.0
        %815 = vmatpush2.msra.mxu0 0.0
        %816 = vmatprep.subr.mxu0 0.0
        %817 = vmatpush2.msra.mxu0 0.0
        %818 = vmatprep.subr.mxu0 0.0
        %819 = vmatpush2.msra.mxu0 0.0
        %820 = vmatprep.subr.mxu0 0.0
        %821 = vmatpush2.msra.mxu0 0.0
        %822 = vmatprep.subr.mxu0 0.0
        %823 = vmatpush2.msra.mxu0 0.0
        %824 = vmatprep.subr.mxu0 0.0
        %825 = vmatpush2.msra.mxu0 0.0
        %826 = vmatprep.subr.mxu0 0.0
        %827 = vmatpush2.msra.mxu0 0.0
        %828 = vmatprep.subr.mxu0 0.0
        %829 = vmatpush2.msra.mxu0 0.0
        %830 = vmatprep.subr.mxu0 0.0
        %831 = vmatpush2.msra.mxu0 0.0
        %832 = vmatprep.subr.mxu0 0.0
        %833 = vmatpush2.msra.mxu0 0.0
        %834 = vmatprep.subr.mxu0 0.0
        %835 = vmatpush2.msra.mxu0 0.0
        %836 = vmatprep.mubr.f32.mxu0 0.0
        %837 = vmatmul.mubr.f32.gmra.mxu0 %v767
        %v838 = vpop.f32.mrf.mxu0
        %v839 = vadd.f32 %v764, %v838
        %v840 = vpop.f32.mrf.mxu0
        %841 = vmatprep.mubr.f32.mxu0 0.0
        %842 = vmatmul.mubr.f32.gmra.mxu0 %v770
        %v843 = vpop.f32.mrf.mxu0
        %v844 = vadd.f32 %v764, %v843
        %v845 = vpop.f32.mrf.mxu0
        %846 = vdwg.mxu0
        %v847 = vld [vmem:[%s7] sm:$0xff]
        %v848 = vld [vmem:[%s8] sm:$0x1]
        %v850 = vlaneseq
        %v851 = vshrl.u32 %v850, 7
        %v852 = vsub.s32 0, %v851
        %v853 = vrot.slane %v848, %v852
        %855 = vmatprep.subr.mxu0 0.0
        %856 = vmatpush1.msra.mxu0 0.0
        %857 = vmatprep.subr.mxu0 0.0
        %858 = vmatpush1.msra.mxu0 0.0
        %859 = vmatprep.subr.mxu0 0.0
        %860 = vmatpush1.msra.mxu0 0.0
        %861 = vmatprep.subr.mxu0 0.0
        %862 = vmatpush1.msra.mxu0 0.0
        %863 = vmatprep.subr.mxu0 0.0
        %864 = vmatpush1.msra.mxu0 0.0
        %865 = vmatprep.subr.mxu0 0.0
        %866 = vmatpush1.msra.mxu0 0.0
        %867 = vmatprep.subr.mxu0 0.0
        %868 = vmatpush1.msra.mxu0 0.0
        %869 = vmatprep.subr.mxu0 0.0
        %870 = vmatpush1.msra.mxu0 0.0
        %871 = vmatprep.subr.mxu0 0.0
        %872 = vmatpush1.msra.mxu0 0.0
        %873 = vmatprep.subr.mxu0 0.0
        %874 = vmatpush1.msra.mxu0 0.0
        %875 = vmatprep.subr.mxu0 0.0
        %876 = vmatpush1.msra.mxu0 0.0
        %877 = vmatprep.subr.mxu0 0.0
        %878 = vmatpush1.msra.mxu0 0.0
        %879 = vmatprep.subr.mxu0 0.0
        %880 = vmatpush1.msra.mxu0 0.0
        %881 = vmatprep.subr.mxu0 0.0
        %882 = vmatpush1.msra.mxu0 0.0
        %883 = vmatprep.subr.mxu0 0.0
        %884 = vmatpush1.msra.mxu0 0.0
        %885 = vmatprep.subr.mxu0 0.0
        %886 = vmatpush1.msra.mxu0 %v847
        %887 = vmatprep.subr.mxu0 0.0
        %888 = vmatpush2.msra.mxu0 0.0
        %889 = vmatprep.subr.mxu0 0.0
        %890 = vmatpush2.msra.mxu0 0.0
        %891 = vmatprep.subr.mxu0 0.0
        %892 = vmatpush2.msra.mxu0 0.0
        %893 = vmatprep.subr.mxu0 0.0
        %894 = vmatpush2.msra.mxu0 0.0
        %895 = vmatprep.subr.mxu0 0.0
        %896 = vmatpush2.msra.mxu0 0.0
        %897 = vmatprep.subr.mxu0 0.0
        %898 = vmatpush2.msra.mxu0 0.0
        %899 = vmatprep.subr.mxu0 0.0
        %900 = vmatpush2.msra.mxu0 0.0
        %901 = vmatprep.subr.mxu0 0.0
        %902 = vmatpush2.msra.mxu0 0.0
        %903 = vmatprep.subr.mxu0 0.0
        %904 = vmatpush2.msra.mxu0 0.0
        %905 = vmatprep.subr.mxu0 0.0
        %906 = vmatpush2.msra.mxu0 0.0
        %907 = vmatprep.subr.mxu0 0.0
        %908 = vmatpush2.msra.mxu0 0.0
        %909 = vmatprep.subr.mxu0 0.0
        %910 = vmatpush2.msra.mxu0 0.0
        %911 = vmatprep.subr.mxu0 0.0
        %912 = vmatpush2.msra.mxu0 0.0
        %913 = vmatprep.subr.mxu0 0.0
        %914 = vmatpush2.msra.mxu0 0.0
        %915 = vmatprep.subr.mxu0 0.0
        %916 = vmatpush2.msra.mxu0 0.0
        %917 = vmatprep.subr.mxu0 0.0
        %918 = vmatpush2.msra.mxu0 0.0
        %919 = vmatprep.mubr.f32.mxu0 0.0
        %920 = vmatmul.mubr.f32.gmra.mxu0 %v767
        %v921 = vpop.f32.mrf.mxu0
        %v922 = vadd.f32 %v853, %v921
        %v923 = vpop.f32.mrf.mxu0
        %924 = vmatprep.mubr.f32.mxu0 0.0
        %925 = vmatmul.mubr.f32.gmra.mxu0 %v770
        %v926 = vpop.f32.mrf.mxu0
        %v927 = vadd.f32 %v853, %v926
        %v928 = vpop.f32.mrf.mxu0
        %929 = vdwg.mxu0
        %v930 = vld [vmem:[%s2] sm:$0xff]
        %v931 = vld [vmem:[%s2 + $0x8] sm:$0xff]
        %v932 = vld [vmem:[%s2 + $0x10] sm:$0xff]
        %v933 = vld [vmem:[%s2 + $0x18] sm:$0xff]
        %v934 = vld [vmem:[%s9] sm:$0x1]
        %v935 = vld [vmem:[%s10] sm:$0x1]
        %v936 = vld [vmem:[%s11] sm:$0xff]
        %v937 = vld [vmem:[%s11 + $0x8] sm:$0xff]
        %v938 = vld [vmem:[%s11 + $0x10] sm:$0xff]
        %v939 = vld [vmem:[%s11 + $0x18] sm:$0xff]
        %v940 = vld [vmem:[%s12] sm:$0x1]
        %v941 = vld [vmem:[%s13] sm:$0xff]
        %v942 = vld [vmem:[%s13 + $0x8] sm:$0xff]
        %v943 = vld [vmem:[%s13 + $0x10] sm:$0xff]
        %v944 = vld [vmem:[%s13 + $0x18] sm:$0xff]
        %v945 = vld [vmem:[%s14] sm:$0xff]
        %v946 = vld [vmem:[%s14 + $0x8] sm:$0xff]
        %v947 = vld [vmem:[%s14 + $0x10] sm:$0xff]
        %v948 = vld [vmem:[%s14 + $0x18] sm:$0xff]
        %v949 = vld [vmem:[%s15] sm:$0x1]
        %v950 = vld [vmem:[%s15 + $0x1] sm:$0x1]
        %v951 = vld [vmem:[%s15 + $0x2] sm:$0x1]
        %v952 = vld [vmem:[%s15 + $0x3] sm:$0x1]
        %v953 = vld [vmem:[%s16] sm:$0x1]
        %v954 = vld [vmem:[%s16 + $0x1] sm:$0x1]
        %v955 = vld [vmem:[%s16 + $0x2] sm:$0x1]
        %v956 = vld [vmem:[%s16 + $0x3] sm:$0x1]
        %v957 = vld [vmem:[%s17] sm:$0xff]
        %v958 = vld [vmem:[%s17 + $0x8] sm:$0xff]
        %v959 = vld [vmem:[%s17 + $0x10] sm:$0xff]
        %v960 = vld [vmem:[%s17 + $0x18] sm:$0xff]
        %v961 = vld [vmem:[%s18] sm:$0x1]
        %v962 = vld [vmem:[%s18 + $0x1] sm:$0x1]
        %v963 = vld [vmem:[%s18 + $0x2] sm:$0x1]
        %v964 = vld [vmem:[%s18 + $0x3] sm:$0x1]
        %v965 = vld [vmem:[%s19] sm:$0xff]
        %v966 = vld [vmem:[%s19 + $0x8] sm:$0xff]
        %v967 = vld [vmem:[%s19 + $0x10] sm:$0xff]
        %v968 = vld [vmem:[%s19 + $0x18] sm:$0xff]
        %v969 = vld [vmem:[%s19 + $0x20] sm:$0xff]
        %v970 = vld [vmem:[%s19 + $0x28] sm:$0xff]
        %v971 = vld [vmem:[%s19 + $0x30] sm:$0xff]
        %v972 = vld [vmem:[%s19 + $0x38] sm:$0xff]
        %v973 = vld [vmem:[%s19 + $0x40] sm:$0xff]
        %v974 = vld [vmem:[%s19 + $0x48] sm:$0xff]
        %v975 = vld [vmem:[%s19 + $0x50] sm:$0xff]
        %v976 = vld [vmem:[%s19 + $0x58] sm:$0xff]
        %v977 = vld [vmem:[%s19 + $0x60] sm:$0xff]
        %v978 = vld [vmem:[%s19 + $0x68] sm:$0xff]
        %v979 = vld [vmem:[%s19 + $0x70] sm:$0xff]
        %v980 = vld [vmem:[%s19 + $0x78] sm:$0xff]
        %v981 = vld [vmem:[%s20] sm:$0x1]
        %v982 = vld [vmem:[%s20 + $0x1] sm:$0x1]
        %v983 = vld [vmem:[%s20 + $0x2] sm:$0x1]
        %v984 = vld [vmem:[%s20 + $0x3] sm:$0x1]
        %v985 = vld [vmem:[%s709] sm:$0xf]
        loop: start=0, step=1, limit=3
        $region105: #{sysbinder_forward.3} parent=103 // loop_pre_header
          _
        $region106: #{sysbinder_forward.3} parent=103 // loop_header
          %s987 = sphi 0, %s991
          %p988 = scmp.ge.s32.totalorder %s987, 3
          %v992 = vphi %v985, %v3534
          %v993 = vphi 0.0, %v1200
        $region107: #{sysbinder_forward.3} parent=103 // loop_header_branch
          %990 = sbr.rel (%p988) target = $region111
        $region108: #{sysbinder_forward.3} parent=103 // loop_body
          %vm994 = vcmask 257024
          %v995 = vsel %vm994, %v992, 0.0
          %996 = vadd.xlane.f32.xlu0 %v995
          %v997 = vpop.xlane.xlu0 %996
          %v998 = vrcp.pop 32.0
          %v999 = vmul.f32 %v997, %v998
          %v1000 = vsub.f32 %v992, %v999
          %v1001 = vmul.f32 %v1000, %v1000
          %v1002 = vsel %vm994, %v1001, 0.0
          %1003 = vadd.xlane.f32.xlu0 %v1002
          %v1004 = vpop.xlane.xlu0 %1003
          %v1005 = vmul.f32 %v1004, %v998
          %v1006 = vadd.f32 %v1005, 1e-05
          %v1007 = vrsqrt.pop %v1006
          %v1008 = vmul.f32 %v1000, %v1007
          %v1010 = vlaneseq
          %v1011 = vshrl.u32 %v1010, 7
          %v1012 = vsub.s32 0, %v1011
          %v1013 = vrot.slane %v934, %v1012
          %v1015 = vmul.f32 %v1008, %v1013
          %v1017 = vlaneseq
          %v1018 = vshrl.u32 %v1017, 7
          %v1019 = vsub.s32 0, %v1018
          %v1020 = vrot.slane %v935, %v1019
          %v1022 = vadd.f32 %v1015, %v1020
          %v1024 = vlaneseq
          %v1025 = vshrl.u32 %v1024, 7
          %v1026 = vsub.s32 0, %v1025
          %v1027 = vrot.slane %v940, %v1026
          %vm1029 = vcmask 261120
          %v1031 = vsel %vm1029, %v1022, 0
          %1033 = vmatprep.subr.mxu0 0.0
          %1034 = vmatpush1.msra.mxu0 0.0
          %1035 = vmatprep.subr.mxu0 0.0
          %1036 = vmatpush1.msra.mxu0 0.0
          %1037 = vmatprep.subr.mxu0 0.0
          %1038 = vmatpush1.msra.mxu0 0.0
          %1039 = vmatprep.subr.mxu0 0.0
          %1040 = vmatpush1.msra.mxu0 0.0
          %1041 = vmatprep.subr.mxu0 0.0
          %1042 = vmatpush1.msra.mxu0 0.0
          %1043 = vmatprep.subr.mxu0 0.0
          %1044 = vmatpush1.msra.mxu0 0.0
          %1045 = vmatprep.subr.mxu0 0.0
          %1046 = vmatpush1.msra.mxu0 0.0
          %1047 = vmatprep.subr.mxu0 0.0
          %1048 = vmatpush1.msra.mxu0 0.0
          %1049 = vmatprep.subr.mxu0 0.0
          %1050 = vmatpush1.msra.mxu0 0.0
          %1051 = vmatprep.subr.mxu0 0.0
          %1052 = vmatpush1.msra.mxu0 0.0
          %1053 = vmatprep.subr.mxu0 0.0
          %1054 = vmatpush1.msra.mxu0 0.0
          %1055 = vmatprep.subr.mxu0 0.0
          %1056 = vmatpush1.msra.mxu0 0.0
          %1057 = vmatprep.subr.mxu0 0.0
          %1058 = vmatpush1.msra.mxu0 %v939
          %1059 = vmatprep.subr.mxu0 0.0
          %1060 = vmatpush1.msra.mxu0 %v938
          %1061 = vmatprep.subr.mxu0 0.0
          %1062 = vmatpush1.msra.mxu0 %v937
          %1063 = vmatprep.subr.mxu0 0.0
          %1064 = vmatpush1.msra.mxu0 %v936
          %1065 = vmatprep.subr.mxu0 0.0
          %1066 = vmatpush2.msra.mxu0 0.0
          %1067 = vmatprep.subr.mxu0 0.0
          %1068 = vmatpush2.msra.mxu0 0.0
          %1069 = vmatprep.subr.mxu0 0.0
          %1070 = vmatpush2.msra.mxu0 0.0
          %1071 = vmatprep.subr.mxu0 0.0
          %1072 = vmatpush2.msra.mxu0 0.0
          %1073 = vmatprep.subr.mxu0 0.0
          %1074 = vmatpush2.msra.mxu0 0.0
          %1075 = vmatprep.subr.mxu0 0.0
          %1076 = vmatpush2.msra.mxu0 0.0
          %1077 = vmatprep.subr.mxu0 0.0
          %1078 = vmatpush2.msra.mxu0 0.0
          %1079 = vmatprep.subr.mxu0 0.0
          %1080 = vmatpush2.msra.mxu0 0.0
          %1081 = vmatprep.subr.mxu0 0.0
          %1082 = vmatpush2.msra.mxu0 0.0
          %1083 = vmatprep.subr.mxu0 0.0
          %1084 = vmatpush2.msra.mxu0 0.0
          %1085 = vmatprep.subr.mxu0 0.0
          %1086 = vmatpush2.msra.mxu0 0.0
          %1087 = vmatprep.subr.mxu0 0.0
          %1088 = vmatpush2.msra.mxu0 0.0
          %1089 = vmatprep.subr.mxu0 0.0
          %1090 = vmatpush2.msra.mxu0 0.0
          %1091 = vmatprep.subr.mxu0 0.0
          %1092 = vmatpush2.msra.mxu0 0.0
          %1093 = vmatprep.subr.mxu0 0.0
          %1094 = vmatpush2.msra.mxu0 0.0
          %1095 = vmatprep.subr.mxu0 0.0
          %1096 = vmatpush2.msra.mxu0 0.0
          %1097 = vmatprep.mubr.f32.mxu0 0.0
          %1098 = vmatmul.mubr.f32.gmra.mxu0 %v1031
          %v1099 = vpop.f32.mrf.mxu0
          %v1100 = vadd.f32 %v1027, %v1099
          %v1101 = vpop.f32.mrf.mxu0
          %1102 = vdwg.mxu0
          %v1104 = vsel %vm1029, %v1100, 0
          %v1107 = vsel %vm1029, %v839, 0
          %v1110 = vsel %vm1029, %v844, 0
          %1112 = vmatprep.subr.mxu0 0.0
          %1113 = vmatpush1.xpose.msra.mxu0 0.0
          %1114 = vmatprep.subr.mxu0 0.0
          %1115 = vmatpush1.xpose.msra.mxu0 0.0
          %1116 = vmatprep.subr.mxu0 0.0
          %1117 = vmatpush1.xpose.msra.mxu0 0.0
          %1118 = vmatprep.subr.mxu0 0.0
          %1119 = vmatpush1.xpose.msra.mxu0 0.0
          %1120 = vmatprep.subr.mxu0 0.0
          %1121 = vmatpush1.xpose.msra.mxu0 0.0
          %1122 = vmatprep.subr.mxu0 0.0
          %1123 = vmatpush1.xpose.msra.mxu0 0.0
          %1124 = vmatprep.subr.mxu0 0.0
          %1125 = vmatpush1.xpose.msra.mxu0 0.0
          %1126 = vmatprep.subr.mxu0 0.0
          %1127 = vmatpush1.xpose.msra.mxu0 0.0
          %1128 = vmatprep.subr.mxu0 0.0
          %1129 = vmatpush1.xpose.msra.mxu0 0.0
          %1130 = vmatprep.subr.mxu0 0.0
          %1131 = vmatpush1.xpose.msra.mxu0 0.0
          %1132 = vmatprep.subr.mxu0 0.0
          %1133 = vmatpush1.xpose.msra.mxu0 0.0
          %1134 = vmatprep.subr.mxu0 0.0
          %1135 = vmatpush1.xpose.msra.mxu0 0.0
          %1136 = vmatprep.subr.mxu0 0.0
          %1137 = vmatpush1.xpose.msra.mxu0 0.0
          %1138 = vmatprep.subr.mxu0 0.0
          %1139 = vmatpush1.xpose.msra.mxu0 0.0
          %1140 = vmatprep.subr.mxu0 0.0
          %1141 = vmatpush1.xpose.msra.mxu0 %v1110
          %1142 = vmatprep.subr.mxu0 0.0
          %1143 = vmatpush1.xpose.msra.mxu0 %v1107
          %1144 = vmatprep.subr.mxu0 0.0
          %1145 = vmatpush2.xpose.msra.mxu0 0.0
          %1146 = vmatprep.subr.mxu0 0.0
          %1147 = vmatpush2.xpose.msra.mxu0 0.0
          %1148 = vmatprep.subr.mxu0 0.0
          %1149 = vmatpush2.xpose.msra.mxu0 0.0
          %1150 = vmatprep.subr.mxu0 0.0
          %1151 = vmatpush2.xpose.msra.mxu0 0.0
          %1152 = vmatprep.subr.mxu0 0.0
          %1153 = vmatpush2.xpose.msra.mxu0 0.0
          %1154 = vmatprep.subr.mxu0 0.0
          %1155 = vmatpush2.xpose.msra.mxu0 0.0
          %1156 = vmatprep.subr.mxu0 0.0
          %1157 = vmatpush2.xpose.msra.mxu0 0.0
          %1158 = vmatprep.subr.mxu0 0.0
          %1159 = vmatpush2.xpose.msra.mxu0 0.0
          %1160 = vmatprep.subr.mxu0 0.0
          %1161 = vmatpush2.xpose.msra.mxu0 0.0
          %1162 = vmatprep.subr.mxu0 0.0
          %1163 = vmatpush2.xpose.msra.mxu0 0.0
          %1164 = vmatprep.subr.mxu0 0.0
          %1165 = vmatpush2.xpose.msra.mxu0 0.0
          %1166 = vmatprep.subr.mxu0 0.0
          %1167 = vmatpush2.xpose.msra.mxu0 0.0
          %1168 = vmatprep.subr.mxu0 0.0
          %1169 = vmatpush2.xpose.msra.mxu0 0.0
          %1170 = vmatprep.subr.mxu0 0.0
          %1171 = vmatpush2.xpose.msra.mxu0 0.0
          %1172 = vmatprep.subr.mxu0 0.0
          %1173 = vmatpush2.xpose.msra.mxu0 0.0
          %1174 = vmatprep.subr.mxu0 0.0
          %1175 = vmatpush2.xpose.msra.mxu0 0.0
          %1176 = vmatprep.mubr.f32.mxu0 0.0
          %1177 = vmatmul.mubr.f32.gmra.mxu0 %v1104
          %v1178 = vpop.f32.mrf.mxu0
          %v1179 = vadd.f32 0.0, %v1178
          %v1180 = vpop.f32.mrf.mxu0
          %1181 = vdwg.mxu0
          %v1182 = vmul.f32 %v1179, 0.17677669
          %vm1183 = vcmask 125952
          %v1184 = vsel %vm1183, %v1182, -inf
          %1185 = vmax.xlane.f32.xlu0 %v1184
          %v1186 = vpop.xlane.xlu0 %1185
          %v1187 = vsub.f32 %v1182, %v1186
          %v1188 = vmul.f32 %v1187, 1.442695
          %v1189 = vpow.pop %v1188
          %v1190 = vsel %vm1183, %v1189, 0.0
          %1191 = vadd.xlane.f32.xlu0 %v1190
          %v1192 = vpop.xlane.xlu0 %1191
          %v1193 = vrcp.pop %v1192
          %v1194 = vmul.f32 %v1189, %v1193
          %v1195 = vadd.f32 %v1194, 1e-08
          %v1196 = vsel %vm1183, %v1195, 0.0
          %1197 = vadd.xlane.f32.xlu0 %v1196
          %v1198 = vpop.xlane.xlu0 %1197
          %v1199 = vrcp.pop %v1198
          %v1200 = vmul.f32 %v1195, %v1199
          %vm1201 = vcmask 130048
          %v1203 = vsel %vm1201, %v1200, 0
          %1205 = vmatprep.subr.mxu0 0.0
          %1206 = vmatpush1.msra.mxu0 0.0
          %1207 = vmatprep.subr.mxu0 0.0
          %1208 = vmatpush1.msra.mxu0 0.0
          %1209 = vmatprep.subr.mxu0 0.0
          %1210 = vmatpush1.msra.mxu0 0.0
          %1211 = vmatprep.subr.mxu0 0.0
          %1212 = vmatpush1.msra.mxu0 0.0
          %1213 = vmatprep.subr.mxu0 0.0
          %1214 = vmatpush1.msra.mxu0 0.0
          %1215 = vmatprep.subr.mxu0 0.0
          %1216 = vmatpush1.msra.mxu0 0.0
          %1217 = vmatprep.subr.mxu0 0.0
          %1218 = vmatpush1.msra.mxu0 0.0
          %1219 = vmatprep.subr.mxu0 0.0
          %1220 = vmatpush1.msra.mxu0 0.0
          %1221 = vmatprep.subr.mxu0 0.0
          %1222 = vmatpush1.msra.mxu0 0.0
          %1223 = vmatprep.subr.mxu0 0.0
          %1224 = vmatpush1.msra.mxu0 0.0
          %1225 = vmatprep.subr.mxu0 0.0
          %1226 = vmatpush1.msra.mxu0 0.0
          %1227 = vmatprep.subr.mxu0 0.0
          %1228 = vmatpush1.msra.mxu0 0.0
          %1229 = vmatprep.subr.mxu0 0.0
          %1230 = vmatpush1.msra.mxu0 0.0
          %1231 = vmatprep.subr.mxu0 0.0
          %1232 = vmatpush1.msra.mxu0 0.0
          %1233 = vmatprep.subr.mxu0 0.0
          %1234 = vmatpush1.msra.mxu0 %v927
          %1235 = vmatprep.subr.mxu0 0.0
          %1236 = vmatpush1.msra.mxu0 %v922
          %1237 = vmatprep.subr.mxu0 0.0
          %1238 = vmatpush2.msra.mxu0 0.0
          %1239 = vmatprep.subr.mxu0 0.0
          %1240 = vmatpush2.msra.mxu0 0.0
          %1241 = vmatprep.subr.mxu0 0.0
          %1242 = vmatpush2.msra.mxu0 0.0
          %1243 = vmatprep.subr.mxu0 0.0
          %1244 = vmatpush2.msra.mxu0 0.0
          %1245 = vmatprep.subr.mxu0 0.0
          %1246 = vmatpush2.msra.mxu0 0.0
          %1247 = vmatprep.subr.mxu0 0.0
          %1248 = vmatpush2.msra.mxu0 0.0
          %1249 = vmatprep.subr.mxu0 0.0
          %1250 = vmatpush2.msra.mxu0 0.0
          %1251 = vmatprep.subr.mxu0 0.0
          %1252 = vmatpush2.msra.mxu0 0.0
          %1253 = vmatprep.subr.mxu0 0.0
          %1254 = vmatpush2.msra.mxu0 0.0
          %1255 = vmatprep.subr.mxu0 0.0
          %1256 = vmatpush2.msra.mxu0 0.0
          %1257 = vmatprep.subr.mxu0 0.0
          %1258 = vmatpush2.msra.mxu0 0.0
          %1259 = vmatprep.subr.mxu0 0.0
          %1260 = vmatpush2.msra.mxu0 0.0
          %1261 = vmatprep.subr.mxu0 0.0
          %1262 = vmatpush2.msra.mxu0 0.0
          %1263 = vmatprep.subr.mxu0 0.0
          %1264 = vmatpush2.msra.mxu0 0.0
          %1265 = vmatprep.subr.mxu0 0.0
          %1266 = vmatpush2.msra.mxu0 0.0
          %1267 = vmatprep.subr.mxu0 0.0
          %1268 = vmatpush2.msra.mxu0 0.0
          %1269 = vmatprep.mubr.f32.mxu0 0.0
          %1270 = vmatmul.mubr.f32.gmra.mxu0 %v1203
          %v1271 = vpop.f32.mrf.mxu0
          %v1272 = vadd.f32 0.0, %v1271
          %v1273 = vpop.f32.mrf.mxu0
          %1274 = vdwg.mxu0
          %v1276 = vlaneseq
          %v1277 = vshrl.u32 %v1276, 7
          %v1278 = vsub.s32 0, %v1277
          %v1279 = vrot.slane %v949, %v1278
          %v1282 = vsel %vm712, %v1272, 0
          %1284 = vmatprep.subr.mxu0 0.0
          %1285 = vmatpush1.msra.mxu0 0.0
          %1286 = vmatprep.subr.mxu0 0.0
          %1287 = vmatpush1.msra.mxu0 0.0
          %1288 = vmatprep.subr.mxu0 0.0
          %1289 = vmatpush1.msra.mxu0 0.0
          %1290 = vmatprep.subr.mxu0 0.0
          %1291 = vmatpush1.msra.mxu0 0.0
          %1292 = vmatprep.subr.mxu0 0.0
          %1293 = vmatpush1.msra.mxu0 0.0
          %1294 = vmatprep.subr.mxu0 0.0
          %1295 = vmatpush1.msra.mxu0 0.0
          %1296 = vmatprep.subr.mxu0 0.0
          %1297 = vmatpush1.msra.mxu0 0.0
          %1298 = vmatprep.subr.mxu0 0.0
          %1299 = vmatpush1.msra.mxu0 0.0
          %1300 = vmatprep.subr.mxu0 0.0
          %1301 = vmatpush1.msra.mxu0 0.0
          %1302 = vmatprep.subr.mxu0 0.0
          %1303 = vmatpush1.msra.mxu0 0.0
          %1304 = vmatprep.subr.mxu0 0.0
          %1305 = vmatpush1.msra.mxu0 0.0
          %1306 = vmatprep.subr.mxu0 0.0
          %1307 = vmatpush1.msra.mxu0 0.0
          %1308 = vmatprep.subr.mxu0 0.0
          %1309 = vmatpush1.msra.mxu0 0.0
          %1310 = vmatprep.subr.mxu0 0.0
          %1311 = vmatpush1.msra.mxu0 0.0
          %1312 = vmatprep.subr.mxu0 0.0
          %1313 = vmatpush1.msra.mxu0 0.0
          %1314 = vmatprep.subr.mxu0 0.0
          %1315 = vmatpush1.msra.mxu0 %v941
          %1316 = vmatprep.subr.mxu0 0.0
          %1317 = vmatpush2.msra.mxu0 0.0
          %1318 = vmatprep.subr.mxu0 0.0
          %1319 = vmatpush2.msra.mxu0 0.0
          %1320 = vmatprep.subr.mxu0 0.0
          %1321 = vmatpush2.msra.mxu0 0.0
          %1322 = vmatprep.subr.mxu0 0.0
          %1323 = vmatpush2.msra.mxu0 0.0
          %1324 = vmatprep.subr.mxu0 0.0
          %1325 = vmatpush2.msra.mxu0 0.0
          %1326 = vmatprep.subr.mxu0 0.0
          %1327 = vmatpush2.msra.mxu0 0.0
          %1328 = vmatprep.subr.mxu0 0.0
          %1329 = vmatpush2.msra.mxu0 0.0
          %1330 = vmatprep.subr.mxu0 0.0
          %1331 = vmatpush2.msra.mxu0 0.0
          %1332 = vmatprep.subr.mxu0 0.0
          %1333 = vmatpush2.msra.mxu0 0.0
          %1334 = vmatprep.subr.mxu0 0.0
          %1335 = vmatpush2.msra.mxu0 0.0
          %1336 = vmatprep.subr.mxu0 0.0
          %1337 = vmatpush2.msra.mxu0 0.0
          %1338 = vmatprep.subr.mxu0 0.0
          %1339 = vmatpush2.msra.mxu0 0.0
          %1340 = vmatprep.subr.mxu0 0.0
          %1341 = vmatpush2.msra.mxu0 0.0
          %1342 = vmatprep.subr.mxu0 0.0
          %1343 = vmatpush2.msra.mxu0 0.0
          %1344 = vmatprep.subr.mxu0 0.0
          %1345 = vmatpush2.msra.mxu0 0.0
          %1346 = vmatprep.subr.mxu0 0.0
          %1347 = vmatpush2.msra.mxu0 0.0
          %1348 = vmatprep.mubr.f32.mxu0 0.0
          %1349 = vmatmul.mubr.f32.gmra.mxu0 %v1282
          %v1350 = vpop.f32.mrf.mxu0
          %v1351 = vadd.f32 %v1279, %v1350
          %v1352 = vpop.f32.mrf.mxu0
          %1353 = vdwg.mxu0
          %v1355 = vlaneseq
          %v1356 = vshrl.u32 %v1355, 7
          %v1357 = vsub.s32 0, %v1356
          %v1358 = vrot.slane %v953, %v1357
          %v1361 = vsel %vm712, %v992, 0
          %1363 = vmatprep.subr.mxu0 0.0
          %1364 = vmatpush1.msra.mxu0 0.0
          %1365 = vmatprep.subr.mxu0 0.0
          %1366 = vmatpush1.msra.mxu0 0.0
          %1367 = vmatprep.subr.mxu0 0.0
          %1368 = vmatpush1.msra.mxu0 0.0
          %1369 = vmatprep.subr.mxu0 0.0
          %1370 = vmatpush1.msra.mxu0 0.0
          %1371 = vmatprep.subr.mxu0 0.0
          %1372 = vmatpush1.msra.mxu0 0.0
          %1373 = vmatprep.subr.mxu0 0.0
          %1374 = vmatpush1.msra.mxu0 0.0
          %1375 = vmatprep.subr.mxu0 0.0
          %1376 = vmatpush1.msra.mxu0 0.0
          %1377 = vmatprep.subr.mxu0 0.0
          %1378 = vmatpush1.msra.mxu0 0.0
          %1379 = vmatprep.subr.mxu0 0.0
          %1380 = vmatpush1.msra.mxu0 0.0
          %1381 = vmatprep.subr.mxu0 0.0
          %1382 = vmatpush1.msra.mxu0 0.0
          %1383 = vmatprep.subr.mxu0 0.0
          %1384 = vmatpush1.msra.mxu0 0.0
          %1385 = vmatprep.subr.mxu0 0.0
          %1386 = vmatpush1.msra.mxu0 0.0
          %1387 = vmatprep.subr.mxu0 0.0
          %1388 = vmatpush1.msra.mxu0 0.0
          %1389 = vmatprep.subr.mxu0 0.0
          %1390 = vmatpush1.msra.mxu0 0.0
          %1391 = vmatprep.subr.mxu0 0.0
          %1392 = vmatpush1.msra.mxu0 0.0
          %1393 = vmatprep.subr.mxu0 0.0
          %1394 = vmatpush1.msra.mxu0 %v945
          %1395 = vmatprep.subr.mxu0 0.0
          %1396 = vmatpush2.msra.mxu0 0.0
          %1397 = vmatprep.subr.mxu0 0.0
          %1398 = vmatpush2.msra.mxu0 0.0
          %1399 = vmatprep.subr.mxu0 0.0
          %1400 = vmatpush2.msra.mxu0 0.0
          %1401 = vmatprep.subr.mxu0 0.0
          %1402 = vmatpush2.msra.mxu0 0.0
          %1403 = vmatprep.subr.mxu0 0.0
          %1404 = vmatpush2.msra.mxu0 0.0
          %1405 = vmatprep.subr.mxu0 0.0
          %1406 = vmatpush2.msra.mxu0 0.0
          %1407 = vmatprep.subr.mxu0 0.0
          %1408 = vmatpush2.msra.mxu0 0.0
          %1409 = vmatprep.subr.mxu0 0.0
          %1410 = vmatpush2.msra.mxu0 0.0
          %1411 = vmatprep.subr.mxu0 0.0
          %1412 = vmatpush2.msra.mxu0 0.0
          %1413 = vmatprep.subr.mxu0 0.0
          %1414 = vmatpush2.msra.mxu0 0.0
          %1415 = vmatprep.subr.mxu0 0.0
          %1416 = vmatpush2.msra.mxu0 0.0
          %1417 = vmatprep.subr.mxu0 0.0
          %1418 = vmatpush2.msra.mxu0 0.0
          %1419 = vmatprep.subr.mxu0 0.0
          %1420 = vmatpush2.msra.mxu0 0.0
          %1421 = vmatprep.subr.mxu0 0.0
          %1422 = vmatpush2.msra.mxu0 0.0
          %1423 = vmatprep.subr.mxu0 0.0
          %1424 = vmatpush2.msra.mxu0 0.0
          %1425 = vmatprep.subr.mxu0 0.0
          %1426 = vmatpush2.msra.mxu0 0.0
          %1427 = vmatprep.mubr.f32.mxu0 0.0
          %1428 = vmatmul.mubr.f32.gmra.mxu0 %v1361
          %v1429 = vpop.f32.mrf.mxu0
          %v1430 = vadd.f32 %v1358, %v1429
          %v1431 = vpop.f32.mrf.mxu0
          %1432 = vdwg.mxu0
          %v1433 = vadd.f32 %v1351, %v1430
          %v1434 = vxor.u32 %v1433, 2147483648
          %v1435 = vmul.f32 %v1434, 1.442695
          %v1436 = vpow.pop %v1435
          %v1437 = vadd.f32 %v1436, 1.0
          %v1438 = vrcp.pop %v1437
          %v1439 = vmul.f32 1.0, %v1438
          %1441 = vrot.lane.b32.xlu0 %v1430, 112
          %v1442 = vpop.permute.xlu0 %1441
          %v1444 = vmul.f32 %v1439, %v1442
          %1446 = vrot.lane.b32.xlu0 %v1444, 16
          %v1447 = vpop.permute.xlu0 %1446
          %v1449 = vadd.f32 %v1351, %v1447
          %v1450 = vtanh.pop %v1449
          %v1451 = vsub.f32 1.0, %v1439
          %1453 = vrot.lane.b32.xlu0 %v1450, 120
          %v1454 = vpop.permute.xlu0 %1453
          %v1456 = vmul.f32 %v1451, %v1454
          %1457 = vrot.lane.b32.xlu0 %v992, 8
          %v1458 = vpop.permute.xlu0 %1457
          %v1460 = vmul.f32 %v1439, %v1458
          %v1461 = vadd.f32 %v1456, %v1460
          %1463 = vrot.lane.b32.xlu0 %v1461, 120
          %v1464 = vpop.permute.xlu0 %1463
          %vm1466 = vcmask 60416
          %v1467 = vsel %vm1466, %v1464, 0.0
          %1468 = vadd.xlane.f32.xlu0 %v1467
          %v1469 = vpop.xlane.xlu0 %1468
          %v1470 = vmul.f32 %v1469, %v719
          %v1471 = vsub.f32 %v1461, %v1470
          %v1472 = vmul.f32 %v1471, %v1471
          %1474 = vrot.lane.b32.xlu0 %v1472, 120
          %v1475 = vpop.permute.xlu0 %1474
          %v1477 = vsel %vm1466, %v1475, 0.0
          %1478 = vadd.xlane.f32.xlu0 %v1477
          %v1479 = vpop.xlane.xlu0 %1478
          %v1480 = vmul.f32 %v1479, %v719
          %v1481 = vadd.f32 %v1480, 1e-05
          %v1482 = vrsqrt.pop %v1481
          %v1483 = vmul.f32 %v1471, %v1482
          %v1485 = vlaneseq
          %v1486 = vshrl.u32 %v1485, 7
          %v1487 = vsub.s32 0, %v1486
          %v1488 = vrot.slane %v961, %v1487
          %1491 = vrot.lane.b32.xlu0 %v1483, 120
          %v1492 = vpop.permute.xlu0 %1491
          %v1493 = vsel %vm712, %v1492, 0
          %1495 = vmatprep.subr.mxu0 0.0
          %1496 = vmatpush1.msra.mxu0 0.0
          %1497 = vmatprep.subr.mxu0 0.0
          %1498 = vmatpush1.msra.mxu0 0.0
          %1499 = vmatprep.subr.mxu0 0.0
          %1500 = vmatpush1.msra.mxu0 0.0
          %1501 = vmatprep.subr.mxu0 0.0
          %1502 = vmatpush1.msra.mxu0 0.0
          %1503 = vmatprep.subr.mxu0 0.0
          %1504 = vmatpush1.msra.mxu0 0.0
          %1505 = vmatprep.subr.mxu0 0.0
          %1506 = vmatpush1.msra.mxu0 0.0
          %1507 = vmatprep.subr.mxu0 0.0
          %1508 = vmatpush1.msra.mxu0 0.0
          %1509 = vmatprep.subr.mxu0 0.0
          %1510 = vmatpush1.msra.mxu0 0.0
          %1511 = vmatprep.subr.mxu0 0.0
          %1512 = vmatpush1.msra.mxu0 0.0
          %1513 = vmatprep.subr.mxu0 0.0
          %1514 = vmatpush1.msra.mxu0 0.0
          %1515 = vmatprep.subr.mxu0 0.0
          %1516 = vmatpush1.msra.mxu0 0.0
          %1517 = vmatprep.subr.mxu0 0.0
          %1518 = vmatpush1.msra.mxu0 0.0
          %1519 = vmatprep.subr.mxu0 0.0
          %1520 = vmatpush1.msra.mxu0 0.0
          %1521 = vmatprep.subr.mxu0 0.0
          %1522 = vmatpush1.msra.mxu0 0.0
          %1523 = vmatprep.subr.mxu0 0.0
          %1524 = vmatpush1.msra.mxu0 0.0
          %1525 = vmatprep.subr.mxu0 0.0
          %1526 = vmatpush1.msra.mxu0 %v957
          %1527 = vmatprep.subr.mxu0 0.0
          %1528 = vmatpush2.msra.mxu0 0.0
          %1529 = vmatprep.subr.mxu0 0.0
          %1530 = vmatpush2.msra.mxu0 0.0
          %1531 = vmatprep.subr.mxu0 0.0
          %1532 = vmatpush2.msra.mxu0 0.0
          %1533 = vmatprep.subr.mxu0 0.0
          %1534 = vmatpush2.msra.mxu0 0.0
          %1535 = vmatprep.subr.mxu0 0.0
          %1536 = vmatpush2.msra.mxu0 0.0
          %1537 = vmatprep.subr.mxu0 0.0
          %1538 = vmatpush2.msra.mxu0 0.0
          %1539 = vmatprep.subr.mxu0 0.0
          %1540 = vmatpush2.msra.mxu0 0.0
          %1541 = vmatprep.subr.mxu0 0.0
          %1542 = vmatpush2.msra.mxu0 0.0
          %1543 = vmatprep.subr.mxu0 0.0
          %1544 = vmatpush2.msra.mxu0 0.0
          %1545 = vmatprep.subr.mxu0 0.0
          %1546 = vmatpush2.msra.mxu0 0.0
          %1547 = vmatprep.subr.mxu0 0.0
          %1548 = vmatpush2.msra.mxu0 0.0
          %1549 = vmatprep.subr.mxu0 0.0
          %1550 = vmatpush2.msra.mxu0 0.0
          %1551 = vmatprep.subr.mxu0 0.0
          %1552 = vmatpush2.msra.mxu0 0.0
          %1553 = vmatprep.subr.mxu0 0.0
          %1554 = vmatpush2.msra.mxu0 0.0
          %1555 = vmatprep.subr.mxu0 0.0
          %1556 = vmatpush2.msra.mxu0 0.0
          %1557 = vmatprep.subr.mxu0 0.0
          %1558 = vmatpush2.msra.mxu0 0.0
          %1559 = vmatprep.mubr.f32.mxu0 0.0
          %1560 = vmatmul.mubr.f32.gmra.mxu0 %v1493
          %v1561 = vpop.f32.mrf.mxu0
          %v1562 = vadd.f32 %v1488, %v1561
          %v1563 = vpop.f32.mrf.mxu0
          %1564 = vdwg.mxu0
          %v1565 = vmax.f32 %v1562, 0.0
          %v1567 = vsel %vm1029, %v1565, 0
          %1569 = vmatprep.subr.mxu0 0.0
          %1570 = vmatpush1.msra.mxu0 0.0
          %1571 = vmatprep.subr.mxu0 0.0
          %1572 = vmatpush1.msra.mxu0 0.0
          %1573 = vmatprep.subr.mxu0 0.0
          %1574 = vmatpush1.msra.mxu0 0.0
          %1575 = vmatprep.subr.mxu0 0.0
          %1576 = vmatpush1.msra.mxu0 0.0
          %1577 = vmatprep.subr.mxu0 0.0
          %1578 = vmatpush1.msra.mxu0 0.0
          %1579 = vmatprep.subr.mxu0 0.0
          %1580 = vmatpush1.msra.mxu0 0.0
          %1581 = vmatprep.subr.mxu0 0.0
          %1582 = vmatpush1.msra.mxu0 0.0
          %1583 = vmatprep.subr.mxu0 0.0
          %1584 = vmatpush1.msra.mxu0 0.0
          %1585 = vmatprep.subr.mxu0 0.0
          %1586 = vmatpush1.msra.mxu0 0.0
          %1587 = vmatprep.subr.mxu0 0.0
          %1588 = vmatpush1.msra.mxu0 0.0
          %1589 = vmatprep.subr.mxu0 0.0
          %1590 = vmatpush1.msra.mxu0 0.0
          %1591 = vmatprep.subr.mxu0 0.0
          %1592 = vmatpush1.msra.mxu0 0.0
          %1593 = vmatprep.subr.mxu0 0.0
          %1594 = vmatpush1.msra.mxu0 %v968
          %1595 = vmatprep.subr.mxu0 0.0
          %1596 = vmatpush1.msra.mxu0 %v967
          %1597 = vmatprep.subr.mxu0 0.0
          %1598 = vmatpush1.msra.mxu0 %v966
          %1599 = vmatprep.subr.mxu0 0.0
          %1600 = vmatpush1.msra.mxu0 %v965
          %1601 = vmatprep.subr.mxu0 0.0
          %1602 = vmatpush2.msra.mxu0 0.0
          %1603 = vmatprep.subr.mxu0 0.0
          %1604 = vmatpush2.msra.mxu0 0.0
          %1605 = vmatprep.subr.mxu0 0.0
          %1606 = vmatpush2.msra.mxu0 0.0
          %1607 = vmatprep.subr.mxu0 0.0
          %1608 = vmatpush2.msra.mxu0 0.0
          %1609 = vmatprep.subr.mxu0 0.0
          %1610 = vmatpush2.msra.mxu0 0.0
          %1611 = vmatprep.subr.mxu0 0.0
          %1612 = vmatpush2.msra.mxu0 0.0
          %1613 = vmatprep.subr.mxu0 0.0
          %1614 = vmatpush2.msra.mxu0 0.0
          %1615 = vmatprep.subr.mxu0 0.0
          %1616 = vmatpush2.msra.mxu0 0.0
          %1617 = vmatprep.subr.mxu0 0.0
          %1618 = vmatpush2.msra.mxu0 0.0
          %1619 = vmatprep.subr.mxu0 0.0
          %1620 = vmatpush2.msra.mxu0 0.0
          %1621 = vmatprep.subr.mxu0 0.0
          %1622 = vmatpush2.msra.mxu0 0.0
          %1623 = vmatprep.subr.mxu0 0.0
          %1624 = vmatpush2.msra.mxu0 0.0
          %1625 = vmatprep.subr.mxu0 0.0
          %1626 = vmatpush2.msra.mxu0 0.0
          %1627 = vmatprep.subr.mxu0 0.0
          %1628 = vmatpush2.msra.mxu0 0.0
          %1629 = vmatprep.subr.mxu0 0.0
          %1630 = vmatpush2.msra.mxu0 0.0
          %1631 = vmatprep.subr.mxu0 0.0
          %1632 = vmatpush2.msra.mxu0 0.0
          %1633 = vmatprep.mubr.f32.mxu0 0.0
          %1634 = vmatmul.mubr.f32.gmra.mxu0 %v1567
          %v1635 = vpop.f32.mrf.mxu0
          %v1636 = vadd.f32 0.0, %v1635
          %v1637 = vpop.f32.mrf.mxu0
          %1638 = vdwg.mxu0
          %1640 = vrot.lane.b32.xlu0 %v1636, 8
          %v1641 = vpop.permute.xlu0 %1640
          %v1643 = vadd.f32 %v1461, %v1641
          %v1645 = vlaneseq
          %v1646 = vshrl.u32 %v1645, 7
          %v1647 = vsub.s32 0, %v1646
          %v1648 = vrot.slane %v981, %v1647
          %1649 = vrot.lane.b32.xlu0 %v1648, 8
          %v1650 = vpop.permute.xlu0 %1649
          %v1652 = vadd.f32 %v1643, %v1650
          %1654 = vrot.lane.b32.xlu0 %v1652, 120
          %v1655 = vpop.permute.xlu0 %1654
          %v1657 = vsel %vm1466, %v1655, 0.0
          %1658 = vadd.xlane.f32.xlu0 %v1657
          %v1659 = vpop.xlane.xlu0 %1658
          %v1660 = vmul.f32 %v1659, %v719
          %v1661 = vsub.f32 %v1652, %v1660
          %v1662 = vmul.f32 %v1661, %v1661
          %1664 = vrot.lane.b32.xlu0 %v1662, 120
          %v1665 = vpop.permute.xlu0 %1664
          %v1667 = vsel %vm1466, %v1665, 0.0
          %1668 = vadd.xlane.f32.xlu0 %v1667
          %v1669 = vpop.xlane.xlu0 %1668
          %v1670 = vmul.f32 %v1669, %v719
          %v1671 = vadd.f32 %v1670, 1e-05
          %v1672 = vrsqrt.pop %v1671
          %v1673 = vmul.f32 %v1661, %v1672
          %v1674 = vmul.f32 %v1673, 0.35355338
          %1676 = vrot.lane.b32.xlu0 %v1674, 120
          %v1677 = vpop.permute.xlu0 %1676
          %v1678 = vsel %vm712, %v1677, 0
          %v1681 = vsel %vm712, %v930, 0
          %1683 = vmatprep.subr.mxu0 0.0
          %1684 = vmatpush1.xpose.msra.mxu0 0.0
          %1685 = vmatprep.subr.mxu0 0.0
          %1686 = vmatpush1.xpose.msra.mxu0 0.0
          %1687 = vmatprep.subr.mxu0 0.0
          %1688 = vmatpush1.xpose.msra.mxu0 0.0
          %1689 = vmatprep.subr.mxu0 0.0
          %1690 = vmatpush1.xpose.msra.mxu0 0.0
          %1691 = vmatprep.subr.mxu0 0.0
          %1692 = vmatpush1.xpose.msra.mxu0 0.0
          %1693 = vmatprep.subr.mxu0 0.0
          %1694 = vmatpush1.xpose.msra.mxu0 0.0
          %1695 = vmatprep.subr.mxu0 0.0
          %1696 = vmatpush1.xpose.msra.mxu0 0.0
          %1697 = vmatprep.subr.mxu0 0.0
          %1698 = vmatpush1.xpose.msra.mxu0 0.0
          %1699 = vmatprep.subr.mxu0 0.0
          %1700 = vmatpush1.xpose.msra.mxu0 0.0
          %1701 = vmatprep.subr.mxu0 0.0
          %1702 = vmatpush1.xpose.msra.mxu0 0.0
          %1703 = vmatprep.subr.mxu0 0.0
          %1704 = vmatpush1.xpose.msra.mxu0 0.0
          %1705 = vmatprep.subr.mxu0 0.0
          %1706 = vmatpush1.xpose.msra.mxu0 0.0
          %1707 = vmatprep.subr.mxu0 0.0
          %1708 = vmatpush1.xpose.msra.mxu0 0.0
          %1709 = vmatprep.subr.mxu0 0.0
          %1710 = vmatpush1.xpose.msra.mxu0 0.0
          %1711 = vmatprep.subr.mxu0 0.0
          %1712 = vmatpush1.xpose.msra.mxu0 0.0
          %1713 = vmatprep.subr.mxu0 0.0
          %1714 = vmatpush1.xpose.msra.mxu0 %v1681
          %1715 = vmatprep.subr.mxu0 0.0
          %1716 = vmatpush2.xpose.msra.mxu0 0.0
          %1717 = vmatprep.subr.mxu0 0.0
          %1718 = vmatpush2.xpose.msra.mxu0 0.0
          %1719 = vmatprep.subr.mxu0 0.0
          %1720 = vmatpush2.xpose.msra.mxu0 0.0
          %1721 = vmatprep.subr.mxu0 0.0
          %1722 = vmatpush2.xpose.msra.mxu0 0.0
          %1723 = vmatprep.subr.mxu0 0.0
          %1724 = vmatpush2.xpose.msra.mxu0 0.0
          %1725 = vmatprep.subr.mxu0 0.0
          %1726 = vmatpush2.xpose.msra.mxu0 0.0
          %1727 = vmatprep.subr.mxu0 0.0
          %1728 = vmatpush2.xpose.msra.mxu0 0.0
          %1729 = vmatprep.subr.mxu0 0.0
          %1730 = vmatpush2.xpose.msra.mxu0 0.0
          %1731 = vmatprep.subr.mxu0 0.0
          %1732 = vmatpush2.xpose.msra.mxu0 0.0
          %1733 = vmatprep.subr.mxu0 0.0
          %1734 = vmatpush2.xpose.msra.mxu0 0.0
          %1735 = vmatprep.subr.mxu0 0.0
          %1736 = vmatpush2.xpose.msra.mxu0 0.0
          %1737 = vmatprep.subr.mxu0 0.0
          %1738 = vmatpush2.xpose.msra.mxu0 0.0
          %1739 = vmatprep.subr.mxu0 0.0
          %1740 = vmatpush2.xpose.msra.mxu0 0.0
          %1741 = vmatprep.subr.mxu0 0.0
          %1742 = vmatpush2.xpose.msra.mxu0 0.0
          %1743 = vmatprep.subr.mxu0 0.0
          %1744 = vmatpush2.xpose.msra.mxu0 0.0
          %1745 = vmatprep.subr.mxu0 0.0
          %1746 = vmatpush2.xpose.msra.mxu0 0.0
          %1747 = vmatprep.mubr.f32.mxu0 0.0
          %1748 = vmatmul.mubr.f32.gmra.mxu0 %v1678
          %v1749 = vpop.f32.mrf.mxu0
          %v1750 = vadd.f32 0.0, %v1749
          %v1751 = vpop.f32.mrf.mxu0
          %1752 = vdwg.mxu0
          %v1753 = vsel %vm1466, %v1750, -inf
          %1754 = vmax.xlane.f32.xlu0 %v1753
          %v1755 = vpop.xlane.xlu0 %1754
          %v1756 = vsub.f32 %v1750, %v1755
          %v1757 = vmul.f32 %v1756, 1.442695
          %v1758 = vpow.pop %v1757
          %v1759 = vsel %vm1466, %v1758, 0.0
          %1760 = vadd.xlane.f32.xlu0 %v1759
          %v1761 = vpop.xlane.xlu0 %1760
          %v1762 = vrcp.pop %v1761
          %v1763 = vmul.f32 %v1758, %v1762
          %v1765 = vsel %vm712, %v1763, 0
          %1767 = vmatprep.subr.mxu0 0.0
          %1768 = vmatpush1.msra.mxu0 0.0
          %1769 = vmatprep.subr.mxu0 0.0
          %1770 = vmatpush1.msra.mxu0 0.0
          %1771 = vmatprep.subr.mxu0 0.0
          %1772 = vmatpush1.msra.mxu0 0.0
          %1773 = vmatprep.subr.mxu0 0.0
          %1774 = vmatpush1.msra.mxu0 0.0
          %1775 = vmatprep.subr.mxu0 0.0
          %1776 = vmatpush1.msra.mxu0 0.0
          %1777 = vmatprep.subr.mxu0 0.0
          %1778 = vmatpush1.msra.mxu0 0.0
          %1779 = vmatprep.subr.mxu0 0.0
          %1780 = vmatpush1.msra.mxu0 0.0
          %1781 = vmatprep.subr.mxu0 0.0
          %1782 = vmatpush1.msra.mxu0 0.0
          %1783 = vmatprep.subr.mxu0 0.0
          %1784 = vmatpush1.msra.mxu0 0.0
          %1785 = vmatprep.subr.mxu0 0.0
          %1786 = vmatpush1.msra.mxu0 0.0
          %1787 = vmatprep.subr.mxu0 0.0
          %1788 = vmatpush1.msra.mxu0 0.0
          %1789 = vmatprep.subr.mxu0 0.0
          %1790 = vmatpush1.msra.mxu0 0.0
          %1791 = vmatprep.subr.mxu0 0.0
          %1792 = vmatpush1.msra.mxu0 0.0
          %1793 = vmatprep.subr.mxu0 0.0
          %1794 = vmatpush1.msra.mxu0 0.0
          %1795 = vmatprep.subr.mxu0 0.0
          %1796 = vmatpush1.msra.mxu0 0.0
          %1797 = vmatprep.subr.mxu0 0.0
          %1798 = vmatpush1.msra.mxu0 %v930
          %1799 = vmatprep.subr.mxu0 0.0
          %1800 = vmatpush2.msra.mxu0 0.0
          %1801 = vmatprep.subr.mxu0 0.0
          %1802 = vmatpush2.msra.mxu0 0.0
          %1803 = vmatprep.subr.mxu0 0.0
          %1804 = vmatpush2.msra.mxu0 0.0
          %1805 = vmatprep.subr.mxu0 0.0
          %1806 = vmatpush2.msra.mxu0 0.0
          %1807 = vmatprep.subr.mxu0 0.0
          %1808 = vmatpush2.msra.mxu0 0.0
          %1809 = vmatprep.subr.mxu0 0.0
          %1810 = vmatpush2.msra.mxu0 0.0
          %1811 = vmatprep.subr.mxu0 0.0
          %1812 = vmatpush2.msra.mxu0 0.0
          %1813 = vmatprep.subr.mxu0 0.0
          %1814 = vmatpush2.msra.mxu0 0.0
          %1815 = vmatprep.subr.mxu0 0.0
          %1816 = vmatpush2.msra.mxu0 0.0
          %1817 = vmatprep.subr.mxu0 0.0
          %1818 = vmatpush2.msra.mxu0 0.0
          %1819 = vmatprep.subr.mxu0 0.0
          %1820 = vmatpush2.msra.mxu0 0.0
          %1821 = vmatprep.subr.mxu0 0.0
          %1822 = vmatpush2.msra.mxu0 0.0
          %1823 = vmatprep.subr.mxu0 0.0
          %1824 = vmatpush2.msra.mxu0 0.0
          %1825 = vmatprep.subr.mxu0 0.0
          %1826 = vmatpush2.msra.mxu0 0.0
          %1827 = vmatprep.subr.mxu0 0.0
          %1828 = vmatpush2.msra.mxu0 0.0
          %1829 = vmatprep.subr.mxu0 0.0
          %1830 = vmatpush2.msra.mxu0 0.0
          %1831 = vmatprep.mubr.f32.mxu0 0.0
          %1832 = vmatmul.mubr.f32.gmra.mxu0 %v1765
          %v1833 = vpop.f32.mrf.mxu0
          %v1834 = vadd.f32 0.0, %v1833
          %v1835 = vpop.f32.mrf.mxu0
          %1836 = vdwg.mxu0
          %v1838 = vlaneseq
          %v1839 = vshrl.u32 %v1838, 7
          %v1840 = vsub.s32 0, %v1839
          %v1841 = vrot.slane %v950, %v1840
          %1843 = vrot.lane.b32.xlu0 %v1272, 120
          %v1844 = vpop.permute.xlu0 %1843
          %v1845 = vsel %vm712, %v1844, 0
          %1847 = vmatprep.subr.mxu0 0.0
          %1848 = vmatpush1.msra.mxu0 0.0
          %1849 = vmatprep.subr.mxu0 0.0
          %1850 = vmatpush1.msra.mxu0 0.0
          %1851 = vmatprep.subr.mxu0 0.0
          %1852 = vmatpush1.msra.mxu0 0.0
          %1853 = vmatprep.subr.mxu0 0.0
          %1854 = vmatpush1.msra.mxu0 0.0
          %1855 = vmatprep.subr.mxu0 0.0
          %1856 = vmatpush1.msra.mxu0 0.0
          %1857 = vmatprep.subr.mxu0 0.0
          %1858 = vmatpush1.msra.mxu0 0.0
          %1859 = vmatprep.subr.mxu0 0.0
          %1860 = vmatpush1.msra.mxu0 0.0
          %1861 = vmatprep.subr.mxu0 0.0
          %1862 = vmatpush1.msra.mxu0 0.0
          %1863 = vmatprep.subr.mxu0 0.0
          %1864 = vmatpush1.msra.mxu0 0.0
          %1865 = vmatprep.subr.mxu0 0.0
          %1866 = vmatpush1.msra.mxu0 0.0
          %1867 = vmatprep.subr.mxu0 0.0
          %1868 = vmatpush1.msra.mxu0 0.0
          %1869 = vmatprep.subr.mxu0 0.0
          %1870 = vmatpush1.msra.mxu0 0.0
          %1871 = vmatprep.subr.mxu0 0.0
          %1872 = vmatpush1.msra.mxu0 0.0
          %1873 = vmatprep.subr.mxu0 0.0
          %1874 = vmatpush1.msra.mxu0 0.0
          %1875 = vmatprep.subr.mxu0 0.0
          %1876 = vmatpush1.msra.mxu0 0.0
          %1877 = vmatprep.subr.mxu0 0.0
          %1878 = vmatpush1.msra.mxu0 %v942
          %1879 = vmatprep.subr.mxu0 0.0
          %1880 = vmatpush2.msra.mxu0 0.0
          %1881 = vmatprep.subr.mxu0 0.0
          %1882 = vmatpush2.msra.mxu0 0.0
          %1883 = vmatprep.subr.mxu0 0.0
          %1884 = vmatpush2.msra.mxu0 0.0
          %1885 = vmatprep.subr.mxu0 0.0
          %1886 = vmatpush2.msra.mxu0 0.0
          %1887 = vmatprep.subr.mxu0 0.0
          %1888 = vmatpush2.msra.mxu0 0.0
          %1889 = vmatprep.subr.mxu0 0.0
          %1890 = vmatpush2.msra.mxu0 0.0
          %1891 = vmatprep.subr.mxu0 0.0
          %1892 = vmatpush2.msra.mxu0 0.0
          %1893 = vmatprep.subr.mxu0 0.0
          %1894 = vmatpush2.msra.mxu0 0.0
          %1895 = vmatprep.subr.mxu0 0.0
          %1896 = vmatpush2.msra.mxu0 0.0
          %1897 = vmatprep.subr.mxu0 0.0
          %1898 = vmatpush2.msra.mxu0 0.0
          %1899 = vmatprep.subr.mxu0 0.0
          %1900 = vmatpush2.msra.mxu0 0.0
          %1901 = vmatprep.subr.mxu0 0.0
          %1902 = vmatpush2.msra.mxu0 0.0
          %1903 = vmatprep.subr.mxu0 0.0
          %1904 = vmatpush2.msra.mxu0 0.0
          %1905 = vmatprep.subr.mxu0 0.0
          %1906 = vmatpush2.msra.mxu0 0.0
          %1907 = vmatprep.subr.mxu0 0.0
          %1908 = vmatpush2.msra.mxu0 0.0
          %1909 = vmatprep.subr.mxu0 0.0
          %1910 = vmatpush2.msra.mxu0 0.0
          %1911 = vmatprep.mubr.f32.mxu0 0.0
          %1912 = vmatmul.mubr.f32.gmra.mxu0 %v1845
          %v1913 = vpop.f32.mrf.mxu0
          %v1914 = vadd.f32 %v1841, %v1913
          %v1915 = vpop.f32.mrf.mxu0
          %1916 = vdwg.mxu0
          %v1918 = vlaneseq
          %v1919 = vshrl.u32 %v1918, 7
          %v1920 = vsub.s32 0, %v1919
          %v1921 = vrot.slane %v954, %v1920
          %1923 = vrot.lane.b32.xlu0 %v992, 120
          %v1924 = vpop.permute.xlu0 %1923
          %v1925 = vsel %vm712, %v1924, 0
          %1927 = vmatprep.subr.mxu0 0.0
          %1928 = vmatpush1.msra.mxu0 0.0
          %1929 = vmatprep.subr.mxu0 0.0
          %1930 = vmatpush1.msra.mxu0 0.0
          %1931 = vmatprep.subr.mxu0 0.0
          %1932 = vmatpush1.msra.mxu0 0.0
          %1933 = vmatprep.subr.mxu0 0.0
          %1934 = vmatpush1.msra.mxu0 0.0
          %1935 = vmatprep.subr.mxu0 0.0
          %1936 = vmatpush1.msra.mxu0 0.0
          %1937 = vmatprep.subr.mxu0 0.0
          %1938 = vmatpush1.msra.mxu0 0.0
          %1939 = vmatprep.subr.mxu0 0.0
          %1940 = vmatpush1.msra.mxu0 0.0
          %1941 = vmatprep.subr.mxu0 0.0
          %1942 = vmatpush1.msra.mxu0 0.0
          %1943 = vmatprep.subr.mxu0 0.0
          %1944 = vmatpush1.msra.mxu0 0.0
          %1945 = vmatprep.subr.mxu0 0.0
          %1946 = vmatpush1.msra.mxu0 0.0
          %1947 = vmatprep.subr.mxu0 0.0
          %1948 = vmatpush1.msra.mxu0 0.0
          %1949 = vmatprep.subr.mxu0 0.0
          %1950 = vmatpush1.msra.mxu0 0.0
          %1951 = vmatprep.subr.mxu0 0.0
          %1952 = vmatpush1.msra.mxu0 0.0
          %1953 = vmatprep.subr.mxu0 0.0
          %1954 = vmatpush1.msra.mxu0 0.0
          %1955 = vmatprep.subr.mxu0 0.0
          %1956 = vmatpush1.msra.mxu0 0.0
          %1957 = vmatprep.subr.mxu0 0.0
          %1958 = vmatpush1.msra.mxu0 %v946
          %1959 = vmatprep.subr.mxu0 0.0
          %1960 = vmatpush2.msra.mxu0 0.0
          %1961 = vmatprep.subr.mxu0 0.0
          %1962 = vmatpush2.msra.mxu0 0.0
          %1963 = vmatprep.subr.mxu0 0.0
          %1964 = vmatpush2.msra.mxu0 0.0
          %1965 = vmatprep.subr.mxu0 0.0
          %1966 = vmatpush2.msra.mxu0 0.0
          %1967 = vmatprep.subr.mxu0 0.0
          %1968 = vmatpush2.msra.mxu0 0.0
          %1969 = vmatprep.subr.mxu0 0.0
          %1970 = vmatpush2.msra.mxu0 0.0
          %1971 = vmatprep.subr.mxu0 0.0
          %1972 = vmatpush2.msra.mxu0 0.0
          %1973 = vmatprep.subr.mxu0 0.0
          %1974 = vmatpush2.msra.mxu0 0.0
          %1975 = vmatprep.subr.mxu0 0.0
          %1976 = vmatpush2.msra.mxu0 0.0
          %1977 = vmatprep.subr.mxu0 0.0
          %1978 = vmatpush2.msra.mxu0 0.0
          %1979 = vmatprep.subr.mxu0 0.0
          %1980 = vmatpush2.msra.mxu0 0.0
          %1981 = vmatprep.subr.mxu0 0.0
          %1982 = vmatpush2.msra.mxu0 0.0
          %1983 = vmatprep.subr.mxu0 0.0
          %1984 = vmatpush2.msra.mxu0 0.0
          %1985 = vmatprep.subr.mxu0 0.0
          %1986 = vmatpush2.msra.mxu0 0.0
          %1987 = vmatprep.subr.mxu0 0.0
          %1988 = vmatpush2.msra.mxu0 0.0
          %1989 = vmatprep.subr.mxu0 0.0
          %1990 = vmatpush2.msra.mxu0 0.0
          %1991 = vmatprep.mubr.f32.mxu0 0.0
          %1992 = vmatmul.mubr.f32.gmra.mxu0 %v1925
          %v1993 = vpop.f32.mrf.mxu0
          %v1994 = vadd.f32 %v1921, %v1993
          %v1995 = vpop.f32.mrf.mxu0
          %1996 = vdwg.mxu0
          %v1997 = vadd.f32 %v1914, %v1994
          %v1998 = vxor.u32 %v1997, 2147483648
          %v1999 = vmul.f32 %v1998, 1.442695
          %v2000 = vpow.pop %v1999
          %v2001 = vadd.f32 %v2000, 1.0
          %v2002 = vrcp.pop %v2001
          %v2003 = vmul.f32 1.0, %v2002
          %2005 = vrot.lane.b32.xlu0 %v1994, 112
          %v2006 = vpop.permute.xlu0 %2005
          %v2008 = vmul.f32 %v2003, %v2006
          %2010 = vrot.lane.b32.xlu0 %v2008, 16
          %v2011 = vpop.permute.xlu0 %2010
          %v2013 = vadd.f32 %v1914, %v2011
          %v2014 = vtanh.pop %v2013
          %v2015 = vsub.f32 1.0, %v2003
          %2017 = vrot.lane.b32.xlu0 %v2014, 120
          %v2018 = vpop.permute.xlu0 %2017
          %v2020 = vmul.f32 %v2015, %v2018
          %v2021 = vmul.f32 %v2003, %v992
          %v2022 = vadd.f32 %v2020, %v2021
          %2024 = vrot.lane.b32.xlu0 %v2022, 120
          %v2025 = vpop.permute.xlu0 %2024
          %v2027 = vsel %vm1466, %v2025, 0.0
          %2028 = vadd.xlane.f32.xlu0 %v2027
          %v2029 = vpop.xlane.xlu0 %2028
          %v2030 = vmul.f32 %v2029, %v719
          %v2031 = vsub.f32 %v2022, %v2030
          %v2032 = vmul.f32 %v2031, %v2031
          %2034 = vrot.lane.b32.xlu0 %v2032, 120
          %v2035 = vpop.permute.xlu0 %2034
          %v2037 = vsel %vm1466, %v2035, 0.0
          %2038 = vadd.xlane.f32.xlu0 %v2037
          %v2039 = vpop.xlane.xlu0 %2038
          %v2040 = vmul.f32 %v2039, %v719
          %v2041 = vadd.f32 %v2040, 1e-05
          %v2042 = vrsqrt.pop %v2041
          %v2043 = vmul.f32 %v2031, %v2042
          %v2045 = vlaneseq
          %v2046 = vshrl.u32 %v2045, 7
          %v2047 = vsub.s32 0, %v2046
          %v2048 = vrot.slane %v962, %v2047
          %2051 = vrot.lane.b32.xlu0 %v2043, 120
          %v2052 = vpop.permute.xlu0 %2051
          %v2053 = vsel %vm712, %v2052, 0
          %2055 = vmatprep.subr.mxu0 0.0
          %2056 = vmatpush1.msra.mxu0 0.0
          %2057 = vmatprep.subr.mxu0 0.0
          %2058 = vmatpush1.msra.mxu0 0.0
          %2059 = vmatprep.subr.mxu0 0.0
          %2060 = vmatpush1.msra.mxu0 0.0
          %2061 = vmatprep.subr.mxu0 0.0
          %2062 = vmatpush1.msra.mxu0 0.0
          %2063 = vmatprep.subr.mxu0 0.0
          %2064 = vmatpush1.msra.mxu0 0.0
          %2065 = vmatprep.subr.mxu0 0.0
          %2066 = vmatpush1.msra.mxu0 0.0
          %2067 = vmatprep.subr.mxu0 0.0
          %2068 = vmatpush1.msra.mxu0 0.0
          %2069 = vmatprep.subr.mxu0 0.0
          %2070 = vmatpush1.msra.mxu0 0.0
          %2071 = vmatprep.subr.mxu0 0.0
          %2072 = vmatpush1.msra.mxu0 0.0
          %2073 = vmatprep.subr.mxu0 0.0
          %2074 = vmatpush1.msra.mxu0 0.0
          %2075 = vmatprep.subr.mxu0 0.0
          %2076 = vmatpush1.msra.mxu0 0.0
          %2077 = vmatprep.subr.mxu0 0.0
          %2078 = vmatpush1.msra.mxu0 0.0
          %2079 = vmatprep.subr.mxu0 0.0
          %2080 = vmatpush1.msra.mxu0 0.0
          %2081 = vmatprep.subr.mxu0 0.0
          %2082 = vmatpush1.msra.mxu0 0.0
          %2083 = vmatprep.subr.mxu0 0.0
          %2084 = vmatpush1.msra.mxu0 0.0
          %2085 = vmatprep.subr.mxu0 0.0
          %2086 = vmatpush1.msra.mxu0 %v958
          %2087 = vmatprep.subr.mxu0 0.0
          %2088 = vmatpush2.msra.mxu0 0.0
          %2089 = vmatprep.subr.mxu0 0.0
          %2090 = vmatpush2.msra.mxu0 0.0
          %2091 = vmatprep.subr.mxu0 0.0
          %2092 = vmatpush2.msra.mxu0 0.0
          %2093 = vmatprep.subr.mxu0 0.0
          %2094 = vmatpush2.msra.mxu0 0.0
          %2095 = vmatprep.subr.mxu0 0.0
          %2096 = vmatpush2.msra.mxu0 0.0
          %2097 = vmatprep.subr.mxu0 0.0
          %2098 = vmatpush2.msra.mxu0 0.0
          %2099 = vmatprep.subr.mxu0 0.0
          %2100 = vmatpush2.msra.mxu0 0.0
          %2101 = vmatprep.subr.mxu0 0.0
          %2102 = vmatpush2.msra.mxu0 0.0
          %2103 = vmatprep.subr.mxu0 0.0
          %2104 = vmatpush2.msra.mxu0 0.0
          %2105 = vmatprep.subr.mxu0 0.0
          %2106 = vmatpush2.msra.mxu0 0.0
          %2107 = vmatprep.subr.mxu0 0.0
          %2108 = vmatpush2.msra.mxu0 0.0
          %2109 = vmatprep.subr.mxu0 0.0
          %2110 = vmatpush2.msra.mxu0 0.0
          %2111 = vmatprep.subr.mxu0 0.0
          %2112 = vmatpush2.msra.mxu0 0.0
          %2113 = vmatprep.subr.mxu0 0.0
          %2114 = vmatpush2.msra.mxu0 0.0
          %2115 = vmatprep.subr.mxu0 0.0
          %2116 = vmatpush2.msra.mxu0 0.0
          %2117 = vmatprep.subr.mxu0 0.0
          %2118 = vmatpush2.msra.mxu0 0.0
          %2119 = vmatprep.mubr.f32.mxu0 0.0
          %2120 = vmatmul.mubr.f32.gmra.mxu0 %v2053
          %v2121 = vpop.f32.mrf.mxu0
          %v2122 = vadd.f32 %v2048, %v2121
          %v2123 = vpop.f32.mrf.mxu0
          %2124 = vdwg.mxu0
          %v2125 = vmax.f32 %v2122, 0.0
          %v2127 = vsel %vm1029, %v2125, 0
          %2129 = vmatprep.subr.mxu0 0.0
          %2130 = vmatpush1.msra.mxu0 0.0
          %2131 = vmatprep.subr.mxu0 0.0
          %2132 = vmatpush1.msra.mxu0 0.0
          %2133 = vmatprep.subr.mxu0 0.0
          %2134 = vmatpush1.msra.mxu0 0.0
          %2135 = vmatprep.subr.mxu0 0.0
          %2136 = vmatpush1.msra.mxu0 0.0
          %2137 = vmatprep.subr.mxu0 0.0
          %2138 = vmatpush1.msra.mxu0 0.0
          %2139 = vmatprep.subr.mxu0 0.0
          %2140 = vmatpush1.msra.mxu0 0.0
          %2141 = vmatprep.subr.mxu0 0.0
          %2142 = vmatpush1.msra.mxu0 0.0
          %2143 = vmatprep.subr.mxu0 0.0
          %2144 = vmatpush1.msra.mxu0 0.0
          %2145 = vmatprep.subr.mxu0 0.0
          %2146 = vmatpush1.msra.mxu0 0.0
          %2147 = vmatprep.subr.mxu0 0.0
          %2148 = vmatpush1.msra.mxu0 0.0
          %2149 = vmatprep.subr.mxu0 0.0
          %2150 = vmatpush1.msra.mxu0 0.0
          %2151 = vmatprep.subr.mxu0 0.0
          %2152 = vmatpush1.msra.mxu0 0.0
          %2153 = vmatprep.subr.mxu0 0.0
          %2154 = vmatpush1.msra.mxu0 %v972
          %2155 = vmatprep.subr.mxu0 0.0
          %2156 = vmatpush1.msra.mxu0 %v971
          %2157 = vmatprep.subr.mxu0 0.0
          %2158 = vmatpush1.msra.mxu0 %v970
          %2159 = vmatprep.subr.mxu0 0.0
          %2160 = vmatpush1.msra.mxu0 %v969
          %2161 = vmatprep.subr.mxu0 0.0
          %2162 = vmatpush2.msra.mxu0 0.0
          %2163 = vmatprep.subr.mxu0 0.0
          %2164 = vmatpush2.msra.mxu0 0.0
          %2165 = vmatprep.subr.mxu0 0.0
          %2166 = vmatpush2.msra.mxu0 0.0
          %2167 = vmatprep.subr.mxu0 0.0
          %2168 = vmatpush2.msra.mxu0 0.0
          %2169 = vmatprep.subr.mxu0 0.0
          %2170 = vmatpush2.msra.mxu0 0.0
          %2171 = vmatprep.subr.mxu0 0.0
          %2172 = vmatpush2.msra.mxu0 0.0
          %2173 = vmatprep.subr.mxu0 0.0
          %2174 = vmatpush2.msra.mxu0 0.0
          %2175 = vmatprep.subr.mxu0 0.0
          %2176 = vmatpush2.msra.mxu0 0.0
          %2177 = vmatprep.subr.mxu0 0.0
          %2178 = vmatpush2.msra.mxu0 0.0
          %2179 = vmatprep.subr.mxu0 0.0
          %2180 = vmatpush2.msra.mxu0 0.0
          %2181 = vmatprep.subr.mxu0 0.0
          %2182 = vmatpush2.msra.mxu0 0.0
          %2183 = vmatprep.subr.mxu0 0.0
          %2184 = vmatpush2.msra.mxu0 0.0
          %2185 = vmatprep.subr.mxu0 0.0
          %2186 = vmatpush2.msra.mxu0 0.0
          %2187 = vmatprep.subr.mxu0 0.0
          %2188 = vmatpush2.msra.mxu0 0.0
          %2189 = vmatprep.subr.mxu0 0.0
          %2190 = vmatpush2.msra.mxu0 0.0
          %2191 = vmatprep.subr.mxu0 0.0
          %2192 = vmatpush2.msra.mxu0 0.0
          %2193 = vmatprep.mubr.f32.mxu0 0.0
          %2194 = vmatmul.mubr.f32.gmra.mxu0 %v2127
          %v2195 = vpop.f32.mrf.mxu0
          %v2196 = vadd.f32 0.0, %v2195
          %v2197 = vpop.f32.mrf.mxu0
          %2198 = vdwg.mxu0
          %2200 = vrot.lane.b32.xlu0 %v2196, 8
          %v2201 = vpop.permute.xlu0 %2200
          %v2203 = vadd.f32 %v2022, %v2201
          %v2205 = vlaneseq
          %v2206 = vshrl.u32 %v2205, 7
          %v2207 = vsub.s32 0, %v2206
          %v2208 = vrot.slane %v982, %v2207
          %2209 = vrot.lane.b32.xlu0 %v2208, 8
          %v2210 = vpop.permute.xlu0 %2209
          %v2212 = vadd.f32 %v2203, %v2210
          %2214 = vrot.lane.b32.xlu0 %v2212, 120
          %v2215 = vpop.permute.xlu0 %2214
          %v2217 = vsel %vm1466, %v2215, 0.0
          %2218 = vadd.xlane.f32.xlu0 %v2217
          %v2219 = vpop.xlane.xlu0 %2218
          %v2220 = vmul.f32 %v2219, %v719
          %v2221 = vsub.f32 %v2212, %v2220
          %v2222 = vmul.f32 %v2221, %v2221
          %2224 = vrot.lane.b32.xlu0 %v2222, 120
          %v2225 = vpop.permute.xlu0 %2224
          %v2227 = vsel %vm1466, %v2225, 0.0
          %2228 = vadd.xlane.f32.xlu0 %v2227
          %v2229 = vpop.xlane.xlu0 %2228
          %v2230 = vmul.f32 %v2229, %v719
          %v2231 = vadd.f32 %v2230, 1e-05
          %v2232 = vrsqrt.pop %v2231
          %v2233 = vmul.f32 %v2221, %v2232
          %v2234 = vmul.f32 %v2233, 0.35355338
          %2236 = vrot.lane.b32.xlu0 %v2234, 120
          %v2237 = vpop.permute.xlu0 %2236
          %v2238 = vsel %vm712, %v2237, 0
          %v2241 = vsel %vm712, %v931, 0
          %2243 = vmatprep.subr.mxu0 0.0
          %2244 = vmatpush1.xpose.msra.mxu0 0.0
          %2245 = vmatprep.subr.mxu0 0.0
          %2246 = vmatpush1.xpose.msra.mxu0 0.0
          %2247 = vmatprep.subr.mxu0 0.0
          %2248 = vmatpush1.xpose.msra.mxu0 0.0
          %2249 = vmatprep.subr.mxu0 0.0
          %2250 = vmatpush1.xpose.msra.mxu0 0.0
          %2251 = vmatprep.subr.mxu0 0.0
          %2252 = vmatpush1.xpose.msra.mxu0 0.0
          %2253 = vmatprep.subr.mxu0 0.0
          %2254 = vmatpush1.xpose.msra.mxu0 0.0
          %2255 = vmatprep.subr.mxu0 0.0
          %2256 = vmatpush1.xpose.msra.mxu0 0.0
          %2257 = vmatprep.subr.mxu0 0.0
          %2258 = vmatpush1.xpose.msra.mxu0 0.0
          %2259 = vmatprep.subr.mxu0 0.0
          %2260 = vmatpush1.xpose.msra.mxu0 0.0
          %2261 = vmatprep.subr.mxu0 0.0
          %2262 = vmatpush1.xpose.msra.mxu0 0.0
          %2263 = vmatprep.subr.mxu0 0.0
          %2264 = vmatpush1.xpose.msra.mxu0 0.0
          %2265 = vmatprep.subr.mxu0 0.0
          %2266 = vmatpush1.xpose.msra.mxu0 0.0
          %2267 = vmatprep.subr.mxu0 0.0
          %2268 = vmatpush1.xpose.msra.mxu0 0.0
          %2269 = vmatprep.subr.mxu0 0.0
          %2270 = vmatpush1.xpose.msra.mxu0 0.0
          %2271 = vmatprep.subr.mxu0 0.0
          %2272 = vmatpush1.xpose.msra.mxu0 0.0
          %2273 = vmatprep.subr.mxu0 0.0
          %2274 = vmatpush1.xpose.msra.mxu0 %v2241
          %2275 = vmatprep.subr.mxu0 0.0
          %2276 = vmatpush2.xpose.msra.mxu0 0.0
          %2277 = vmatprep.subr.mxu0 0.0
          %2278 = vmatpush2.xpose.msra.mxu0 0.0
          %2279 = vmatprep.subr.mxu0 0.0
          %2280 = vmatpush2.xpose.msra.mxu0 0.0
          %2281 = vmatprep.subr.mxu0 0.0
          %2282 = vmatpush2.xpose.msra.mxu0 0.0
          %2283 = vmatprep.subr.mxu0 0.0
          %2284 = vmatpush2.xpose.msra.mxu0 0.0
          %2285 = vmatprep.subr.mxu0 0.0
          %2286 = vmatpush2.xpose.msra.mxu0 0.0
          %2287 = vmatprep.subr.mxu0 0.0
          %2288 = vmatpush2.xpose.msra.mxu0 0.0
          %2289 = vmatprep.subr.mxu0 0.0
          %2290 = vmatpush2.xpose.msra.mxu0 0.0
          %2291 = vmatprep.subr.mxu0 0.0
          %2292 = vmatpush2.xpose.msra.mxu0 0.0
          %2293 = vmatprep.subr.mxu0 0.0
          %2294 = vmatpush2.xpose.msra.mxu0 0.0
          %2295 = vmatprep.subr.mxu0 0.0
          %2296 = vmatpush2.xpose.msra.mxu0 0.0
          %2297 = vmatprep.subr.mxu0 0.0
          %2298 = vmatpush2.xpose.msra.mxu0 0.0
          %2299 = vmatprep.subr.mxu0 0.0
          %2300 = vmatpush2.xpose.msra.mxu0 0.0
          %2301 = vmatprep.subr.mxu0 0.0
          %2302 = vmatpush2.xpose.msra.mxu0 0.0
          %2303 = vmatprep.subr.mxu0 0.0
          %2304 = vmatpush2.xpose.msra.mxu0 0.0
          %2305 = vmatprep.subr.mxu0 0.0
          %2306 = vmatpush2.xpose.msra.mxu0 0.0
          %2307 = vmatprep.mubr.f32.mxu0 0.0
          %2308 = vmatmul.mubr.f32.gmra.mxu0 %v2238
          %v2309 = vpop.f32.mrf.mxu0
          %v2310 = vadd.f32 0.0, %v2309
          %v2311 = vpop.f32.mrf.mxu0
          %2312 = vdwg.mxu0
          %v2313 = vsel %vm1466, %v2310, -inf
          %2314 = vmax.xlane.f32.xlu0 %v2313
          %v2315 = vpop.xlane.xlu0 %2314
          %v2316 = vsub.f32 %v2310, %v2315
          %v2317 = vmul.f32 %v2316, 1.442695
          %v2318 = vpow.pop %v2317
          %v2319 = vsel %vm1466, %v2318, 0.0
          %2320 = vadd.xlane.f32.xlu0 %v2319
          %v2321 = vpop.xlane.xlu0 %2320
          %v2322 = vrcp.pop %v2321
          %v2323 = vmul.f32 %v2318, %v2322
          %v2325 = vsel %vm712, %v2323, 0
          %2327 = vmatprep.subr.mxu0 0.0
          %2328 = vmatpush1.msra.mxu0 0.0
          %2329 = vmatprep.subr.mxu0 0.0
          %2330 = vmatpush1.msra.mxu0 0.0
          %2331 = vmatprep.subr.mxu0 0.0
          %2332 = vmatpush1.msra.mxu0 0.0
          %2333 = vmatprep.subr.mxu0 0.0
          %2334 = vmatpush1.msra.mxu0 0.0
          %2335 = vmatprep.subr.mxu0 0.0
          %2336 = vmatpush1.msra.mxu0 0.0
          %2337 = vmatprep.subr.mxu0 0.0
          %2338 = vmatpush1.msra.mxu0 0.0
          %2339 = vmatprep.subr.mxu0 0.0
          %2340 = vmatpush1.msra.mxu0 0.0
          %2341 = vmatprep.subr.mxu0 0.0
          %2342 = vmatpush1.msra.mxu0 0.0
          %2343 = vmatprep.subr.mxu0 0.0
          %2344 = vmatpush1.msra.mxu0 0.0
          %2345 = vmatprep.subr.mxu0 0.0
          %2346 = vmatpush1.msra.mxu0 0.0
          %2347 = vmatprep.subr.mxu0 0.0
          %2348 = vmatpush1.msra.mxu0 0.0
          %2349 = vmatprep.subr.mxu0 0.0
          %2350 = vmatpush1.msra.mxu0 0.0
          %2351 = vmatprep.subr.mxu0 0.0
          %2352 = vmatpush1.msra.mxu0 0.0
          %2353 = vmatprep.subr.mxu0 0.0
          %2354 = vmatpush1.msra.mxu0 0.0
          %2355 = vmatprep.subr.mxu0 0.0
          %2356 = vmatpush1.msra.mxu0 0.0
          %2357 = vmatprep.subr.mxu0 0.0
          %2358 = vmatpush1.msra.mxu0 %v931
          %2359 = vmatprep.subr.mxu0 0.0
          %2360 = vmatpush2.msra.mxu0 0.0
          %2361 = vmatprep.subr.mxu0 0.0
          %2362 = vmatpush2.msra.mxu0 0.0
          %2363 = vmatprep.subr.mxu0 0.0
          %2364 = vmatpush2.msra.mxu0 0.0
          %2365 = vmatprep.subr.mxu0 0.0
          %2366 = vmatpush2.msra.mxu0 0.0
          %2367 = vmatprep.subr.mxu0 0.0
          %2368 = vmatpush2.msra.mxu0 0.0
          %2369 = vmatprep.subr.mxu0 0.0
          %2370 = vmatpush2.msra.mxu0 0.0
          %2371 = vmatprep.subr.mxu0 0.0
          %2372 = vmatpush2.msra.mxu0 0.0
          %2373 = vmatprep.subr.mxu0 0.0
          %2374 = vmatpush2.msra.mxu0 0.0
          %2375 = vmatprep.subr.mxu0 0.0
          %2376 = vmatpush2.msra.mxu0 0.0
          %2377 = vmatprep.subr.mxu0 0.0
          %2378 = vmatpush2.msra.mxu0 0.0
          %2379 = vmatprep.subr.mxu0 0.0
          %2380 = vmatpush2.msra.mxu0 0.0
          %2381 = vmatprep.subr.mxu0 0.0
          %2382 = vmatpush2.msra.mxu0 0.0
          %2383 = vmatprep.subr.mxu0 0.0
          %2384 = vmatpush2.msra.mxu0 0.0
          %2385 = vmatprep.subr.mxu0 0.0
          %2386 = vmatpush2.msra.mxu0 0.0
          %2387 = vmatprep.subr.mxu0 0.0
          %2388 = vmatpush2.msra.mxu0 0.0
          %2389 = vmatprep.subr.mxu0 0.0
          %2390 = vmatpush2.msra.mxu0 0.0
          %2391 = vmatprep.mubr.f32.mxu0 0.0
          %2392 = vmatmul.mubr.f32.gmra.mxu0 %v2325
          %v2393 = vpop.f32.mrf.mxu0
          %v2394 = vadd.f32 0.0, %v2393
          %v2395 = vpop.f32.mrf.mxu0
          %2396 = vdwg.mxu0
          %v2398 = vlaneseq
          %v2399 = vshrl.u32 %v2398, 7
          %v2400 = vsub.s32 0, %v2399
          %v2401 = vrot.slane %v951, %v2400
          %2403 = vrot.lane.b32.xlu0 %v1272, 112
          %v2404 = vpop.permute.xlu0 %2403
          %v2405 = vsel %vm712, %v2404, 0
          %2407 = vmatprep.subr.mxu0 0.0
          %2408 = vmatpush1.msra.mxu0 0.0
          %2409 = vmatprep.subr.mxu0 0.0
          %2410 = vmatpush1.msra.mxu0 0.0
          %2411 = vmatprep.subr.mxu0 0.0
          %2412 = vmatpush1.msra.mxu0 0.0
          %2413 = vmatprep.subr.mxu0 0.0
          %2414 = vmatpush1.msra.mxu0 0.0
          %2415 = vmatprep.subr.mxu0 0.0
          %2416 = vmatpush1.msra.mxu0 0.0
          %2417 = vmatprep.subr.mxu0 0.0
          %2418 = vmatpush1.msra.mxu0 0.0
          %2419 = vmatprep.subr.mxu0 0.0
          %2420 = vmatpush1.msra.mxu0 0.0
          %2421 = vmatprep.subr.mxu0 0.0
          %2422 = vmatpush1.msra.mxu0 0.0
          %2423 = vmatprep.subr.mxu0 0.0
          %2424 = vmatpush1.msra.mxu0 0.0
          %2425 = vmatprep.subr.mxu0 0.0
          %2426 = vmatpush1.msra.mxu0 0.0
          %2427 = vmatprep.subr.mxu0 0.0
          %2428 = vmatpush1.msra.mxu0 0.0
          %2429 = vmatprep.subr.mxu0 0.0
          %2430 = vmatpush1.msra.mxu0 0.0
          %2431 = vmatprep.subr.mxu0 0.0
          %2432 = vmatpush1.msra.mxu0 0.0
          %2433 = vmatprep.subr.mxu0 0.0
          %2434 = vmatpush1.msra.mxu0 0.0
          %2435 = vmatprep.subr.mxu0 0.0
          %2436 = vmatpush1.msra.mxu0 0.0
          %2437 = vmatprep.subr.mxu0 0.0
          %2438 = vmatpush1.msra.mxu0 %v943
          %2439 = vmatprep.subr.mxu0 0.0
          %2440 = vmatpush2.msra.mxu0 0.0
          %2441 = vmatprep.subr.mxu0 0.0
          %2442 = vmatpush2.msra.mxu0 0.0
          %2443 = vmatprep.subr.mxu0 0.0
          %2444 = vmatpush2.msra.mxu0 0.0
          %2445 = vmatprep.subr.mxu0 0.0
          %2446 = vmatpush2.msra.mxu0 0.0
          %2447 = vmatprep.subr.mxu0 0.0
          %2448 = vmatpush2.msra.mxu0 0.0
          %2449 = vmatprep.subr.mxu0 0.0
          %2450 = vmatpush2.msra.mxu0 0.0
          %2451 = vmatprep.subr.mxu0 0.0
          %2452 = vmatpush2.msra.mxu0 0.0
          %2453 = vmatprep.subr.mxu0 0.0
          %2454 = vmatpush2.msra.mxu0 0.0
          %2455 = vmatprep.subr.mxu0 0.0
          %2456 = vmatpush2.msra.mxu0 0.0
          %2457 = vmatprep.subr.mxu0 0.0
          %2458 = vmatpush2.msra.mxu0 0.0
          %2459 = vmatprep.subr.mxu0 0.0
          %2460 = vmatpush2.msra.mxu0 0.0
          %2461 = vmatprep.subr.mxu0 0.0
          %2462 = vmatpush2.msra.mxu0 0.0
          %2463 = vmatprep.subr.mxu0 0.0
          %2464 = vmatpush2.msra.mxu0 0.0
          %2465 = vmatprep.subr.mxu0 0.0
          %2466 = vmatpush2.msra.mxu0 0.0
          %2467 = vmatprep.subr.mxu0 0.0
          %2468 = vmatpush2.msra.mxu0 0.0
          %2469 = vmatprep.subr.mxu0 0.0
          %2470 = vmatpush2.msra.mxu0 0.0
          %2471 = vmatprep.mubr.f32.mxu0 0.0
          %2472 = vmatmul.mubr.f32.gmra.mxu0 %v2405
          %v2473 = vpop.f32.mrf.mxu0
          %v2474 = vadd.f32 %v2401, %v2473
          %v2475 = vpop.f32.mrf.mxu0
          %2476 = vdwg.mxu0
          %v2478 = vlaneseq
          %v2479 = vshrl.u32 %v2478, 7
          %v2480 = vsub.s32 0, %v2479
          %v2481 = vrot.slane %v955, %v2480
          %2483 = vrot.lane.b32.xlu0 %v992, 112
          %v2484 = vpop.permute.xlu0 %2483
          %v2485 = vsel %vm712, %v2484, 0
          %2487 = vmatprep.subr.mxu0 0.0
          %2488 = vmatpush1.msra.mxu0 0.0
          %2489 = vmatprep.subr.mxu0 0.0
          %2490 = vmatpush1.msra.mxu0 0.0
          %2491 = vmatprep.subr.mxu0 0.0
          %2492 = vmatpush1.msra.mxu0 0.0
          %2493 = vmatprep.subr.mxu0 0.0
          %2494 = vmatpush1.msra.mxu0 0.0
          %2495 = vmatprep.subr.mxu0 0.0
          %2496 = vmatpush1.msra.mxu0 0.0
          %2497 = vmatprep.subr.mxu0 0.0
          %2498 = vmatpush1.msra.mxu0 0.0
          %2499 = vmatprep.subr.mxu0 0.0
          %2500 = vmatpush1.msra.mxu0 0.0
          %2501 = vmatprep.subr.mxu0 0.0
          %2502 = vmatpush1.msra.mxu0 0.0
          %2503 = vmatprep.subr.mxu0 0.0
          %2504 = vmatpush1.msra.mxu0 0.0
          %2505 = vmatprep.subr.mxu0 0.0
          %2506 = vmatpush1.msra.mxu0 0.0
          %2507 = vmatprep.subr.mxu0 0.0
          %2508 = vmatpush1.msra.mxu0 0.0
          %2509 = vmatprep.subr.mxu0 0.0
          %2510 = vmatpush1.msra.mxu0 0.0
          %2511 = vmatprep.subr.mxu0 0.0
          %2512 = vmatpush1.msra.mxu0 0.0
          %2513 = vmatprep.subr.mxu0 0.0
          %2514 = vmatpush1.msra.mxu0 0.0
          %2515 = vmatprep.subr.mxu0 0.0
          %2516 = vmatpush1.msra.mxu0 0.0
          %2517 = vmatprep.subr.mxu0 0.0
          %2518 = vmatpush1.msra.mxu0 %v947
          %2519 = vmatprep.subr.mxu0 0.0
          %2520 = vmatpush2.msra.mxu0 0.0
          %2521 = vmatprep.subr.mxu0 0.0
          %2522 = vmatpush2.msra.mxu0 0.0
          %2523 = vmatprep.subr.mxu0 0.0
          %2524 = vmatpush2.msra.mxu0 0.0
          %2525 = vmatprep.subr.mxu0 0.0
          %2526 = vmatpush2.msra.mxu0 0.0
          %2527 = vmatprep.subr.mxu0 0.0
          %2528 = vmatpush2.msra.mxu0 0.0
          %2529 = vmatprep.subr.mxu0 0.0
          %2530 = vmatpush2.msra.mxu0 0.0
          %2531 = vmatprep.subr.mxu0 0.0
          %2532 = vmatpush2.msra.mxu0 0.0
          %2533 = vmatprep.subr.mxu0 0.0
          %2534 = vmatpush2.msra.mxu0 0.0
          %2535 = vmatprep.subr.mxu0 0.0
          %2536 = vmatpush2.msra.mxu0 0.0
          %2537 = vmatprep.subr.mxu0 0.0
          %2538 = vmatpush2.msra.mxu0 0.0
          %2539 = vmatprep.subr.mxu0 0.0
          %2540 = vmatpush2.msra.mxu0 0.0
          %2541 = vmatprep.subr.mxu0 0.0
          %2542 = vmatpush2.msra.mxu0 0.0
          %2543 = vmatprep.subr.mxu0 0.0
          %2544 = vmatpush2.msra.mxu0 0.0
          %2545 = vmatprep.subr.mxu0 0.0
          %2546 = vmatpush2.msra.mxu0 0.0
          %2547 = vmatprep.subr.mxu0 0.0
          %2548 = vmatpush2.msra.mxu0 0.0
          %2549 = vmatprep.subr.mxu0 0.0
          %2550 = vmatpush2.msra.mxu0 0.0
          %2551 = vmatprep.mubr.f32.mxu0 0.0
          %2552 = vmatmul.mubr.f32.gmra.mxu0 %v2485
          %v2553 = vpop.f32.mrf.mxu0
          %v2554 = vadd.f32 %v2481, %v2553
          %v2555 = vpop.f32.mrf.mxu0
          %2556 = vdwg.mxu0
          %v2557 = vadd.f32 %v2474, %v2554
          %v2558 = vxor.u32 %v2557, 2147483648
          %v2559 = vmul.f32 %v2558, 1.442695
          %v2560 = vpow.pop %v2559
          %v2561 = vadd.f32 %v2560, 1.0
          %v2562 = vrcp.pop %v2561
          %v2563 = vmul.f32 1.0, %v2562
          %2565 = vrot.lane.b32.xlu0 %v2554, 112
          %v2566 = vpop.permute.xlu0 %2565
          %v2568 = vmul.f32 %v2563, %v2566
          %2570 = vrot.lane.b32.xlu0 %v2568, 16
          %v2571 = vpop.permute.xlu0 %2570
          %v2573 = vadd.f32 %v2474, %v2571
          %v2574 = vtanh.pop %v2573
          %v2575 = vsub.f32 1.0, %v2563
          %2577 = vrot.lane.b32.xlu0 %v2574, 120
          %v2578 = vpop.permute.xlu0 %2577
          %v2580 = vmul.f32 %v2575, %v2578
          %v2582 = vmul.f32 %v2563, %v1924
          %v2583 = vadd.f32 %v2580, %v2582
          %2585 = vrot.lane.b32.xlu0 %v2583, 120
          %v2586 = vpop.permute.xlu0 %2585
          %v2588 = vsel %vm1466, %v2586, 0.0
          %2589 = vadd.xlane.f32.xlu0 %v2588
          %v2590 = vpop.xlane.xlu0 %2589
          %v2591 = vmul.f32 %v2590, %v719
          %v2592 = vsub.f32 %v2583, %v2591
          %v2593 = vmul.f32 %v2592, %v2592
          %2595 = vrot.lane.b32.xlu0 %v2593, 120
          %v2596 = vpop.permute.xlu0 %2595
          %v2598 = vsel %vm1466, %v2596, 0.0
          %2599 = vadd.xlane.f32.xlu0 %v2598
          %v2600 = vpop.xlane.xlu0 %2599
          %v2601 = vmul.f32 %v2600, %v719
          %v2602 = vadd.f32 %v2601, 1e-05
          %v2603 = vrsqrt.pop %v2602
          %v2604 = vmul.f32 %v2592, %v2603
          %v2606 = vlaneseq
          %v2607 = vshrl.u32 %v2606, 7
          %v2608 = vsub.s32 0, %v2607
          %v2609 = vrot.slane %v963, %v2608
          %2612 = vrot.lane.b32.xlu0 %v2604, 120
          %v2613 = vpop.permute.xlu0 %2612
          %v2614 = vsel %vm712, %v2613, 0
          %2616 = vmatprep.subr.mxu0 0.0
          %2617 = vmatpush1.msra.mxu0 0.0
          %2618 = vmatprep.subr.mxu0 0.0
          %2619 = vmatpush1.msra.mxu0 0.0
          %2620 = vmatprep.subr.mxu0 0.0
          %2621 = vmatpush1.msra.mxu0 0.0
          %2622 = vmatprep.subr.mxu0 0.0
          %2623 = vmatpush1.msra.mxu0 0.0
          %2624 = vmatprep.subr.mxu0 0.0
          %2625 = vmatpush1.msra.mxu0 0.0
          %2626 = vmatprep.subr.mxu0 0.0
          %2627 = vmatpush1.msra.mxu0 0.0
          %2628 = vmatprep.subr.mxu0 0.0
          %2629 = vmatpush1.msra.mxu0 0.0
          %2630 = vmatprep.subr.mxu0 0.0
          %2631 = vmatpush1.msra.mxu0 0.0
          %2632 = vmatprep.subr.mxu0 0.0
          %2633 = vmatpush1.msra.mxu0 0.0
          %2634 = vmatprep.subr.mxu0 0.0
          %2635 = vmatpush1.msra.mxu0 0.0
          %2636 = vmatprep.subr.mxu0 0.0
          %2637 = vmatpush1.msra.mxu0 0.0
          %2638 = vmatprep.subr.mxu0 0.0
          %2639 = vmatpush1.msra.mxu0 0.0
          %2640 = vmatprep.subr.mxu0 0.0
          %2641 = vmatpush1.msra.mxu0 0.0
          %2642 = vmatprep.subr.mxu0 0.0
          %2643 = vmatpush1.msra.mxu0 0.0
          %2644 = vmatprep.subr.mxu0 0.0
          %2645 = vmatpush1.msra.mxu0 0.0
          %2646 = vmatprep.subr.mxu0 0.0
          %2647 = vmatpush1.msra.mxu0 %v959
          %2648 = vmatprep.subr.mxu0 0.0
          %2649 = vmatpush2.msra.mxu0 0.0
          %2650 = vmatprep.subr.mxu0 0.0
          %2651 = vmatpush2.msra.mxu0 0.0
          %2652 = vmatprep.subr.mxu0 0.0
          %2653 = vmatpush2.msra.mxu0 0.0
          %2654 = vmatprep.subr.mxu0 0.0
          %2655 = vmatpush2.msra.mxu0 0.0
          %2656 = vmatprep.subr.mxu0 0.0
          %2657 = vmatpush2.msra.mxu0 0.0
          %2658 = vmatprep.subr.mxu0 0.0
          %2659 = vmatpush2.msra.mxu0 0.0
          %2660 = vmatprep.subr.mxu0 0.0
          %2661 = vmatpush2.msra.mxu0 0.0
          %2662 = vmatprep.subr.mxu0 0.0
          %2663 = vmatpush2.msra.mxu0 0.0
          %2664 = vmatprep.subr.mxu0 0.0
          %2665 = vmatpush2.msra.mxu0 0.0
          %2666 = vmatprep.subr.mxu0 0.0
          %2667 = vmatpush2.msra.mxu0 0.0
          %2668 = vmatprep.subr.mxu0 0.0
          %2669 = vmatpush2.msra.mxu0 0.0
          %2670 = vmatprep.subr.mxu0 0.0
          %2671 = vmatpush2.msra.mxu0 0.0
          %2672 = vmatprep.subr.mxu0 0.0
          %2673 = vmatpush2.msra.mxu0 0.0
          %2674 = vmatprep.subr.mxu0 0.0
          %2675 = vmatpush2.msra.mxu0 0.0
          %2676 = vmatprep.subr.mxu0 0.0
          %2677 = vmatpush2.msra.mxu0 0.0
          %2678 = vmatprep.subr.mxu0 0.0
          %2679 = vmatpush2.msra.mxu0 0.0
          %2680 = vmatprep.mubr.f32.mxu0 0.0
          %2681 = vmatmul.mubr.f32.gmra.mxu0 %v2614
          %v2682 = vpop.f32.mrf.mxu0
          %v2683 = vadd.f32 %v2609, %v2682
          %v2684 = vpop.f32.mrf.mxu0
          %2685 = vdwg.mxu0
          %v2686 = vmax.f32 %v2683, 0.0
          %v2688 = vsel %vm1029, %v2686, 0
          %2690 = vmatprep.subr.mxu0 0.0
          %2691 = vmatpush1.msra.mxu0 0.0
          %2692 = vmatprep.subr.mxu0 0.0
          %2693 = vmatpush1.msra.mxu0 0.0
          %2694 = vmatprep.subr.mxu0 0.0
          %2695 = vmatpush1.msra.mxu0 0.0
          %2696 = vmatprep.subr.mxu0 0.0
          %2697 = vmatpush1.msra.mxu0 0.0
          %2698 = vmatprep.subr.mxu0 0.0
          %2699 = vmatpush1.msra.mxu0 0.0
          %2700 = vmatprep.subr.mxu0 0.0
          %2701 = vmatpush1.msra.mxu0 0.0
          %2702 = vmatprep.subr.mxu0 0.0
          %2703 = vmatpush1.msra.mxu0 0.0
          %2704 = vmatprep.subr.mxu0 0.0
          %2705 = vmatpush1.msra.mxu0 0.0
          %2706 = vmatprep.subr.mxu0 0.0
          %2707 = vmatpush1.msra.mxu0 0.0
          %2708 = vmatprep.subr.mxu0 0.0
          %2709 = vmatpush1.msra.mxu0 0.0
          %2710 = vmatprep.subr.mxu0 0.0
          %2711 = vmatpush1.msra.mxu0 0.0
          %2712 = vmatprep.subr.mxu0 0.0
          %2713 = vmatpush1.msra.mxu0 0.0
          %2714 = vmatprep.subr.mxu0 0.0
          %2715 = vmatpush1.msra.mxu0 %v976
          %2716 = vmatprep.subr.mxu0 0.0
          %2717 = vmatpush1.msra.mxu0 %v975
          %2718 = vmatprep.subr.mxu0 0.0
          %2719 = vmatpush1.msra.mxu0 %v974
          %2720 = vmatprep.subr.mxu0 0.0
          %2721 = vmatpush1.msra.mxu0 %v973
          %2722 = vmatprep.subr.mxu0 0.0
          %2723 = vmatpush2.msra.mxu0 0.0
          %2724 = vmatprep.subr.mxu0 0.0
          %2725 = vmatpush2.msra.mxu0 0.0
          %2726 = vmatprep.subr.mxu0 0.0
          %2727 = vmatpush2.msra.mxu0 0.0
          %2728 = vmatprep.subr.mxu0 0.0
          %2729 = vmatpush2.msra.mxu0 0.0
          %2730 = vmatprep.subr.mxu0 0.0
          %2731 = vmatpush2.msra.mxu0 0.0
          %2732 = vmatprep.subr.mxu0 0.0
          %2733 = vmatpush2.msra.mxu0 0.0
          %2734 = vmatprep.subr.mxu0 0.0
          %2735 = vmatpush2.msra.mxu0 0.0
          %2736 = vmatprep.subr.mxu0 0.0
          %2737 = vmatpush2.msra.mxu0 0.0
          %2738 = vmatprep.subr.mxu0 0.0
          %2739 = vmatpush2.msra.mxu0 0.0
          %2740 = vmatprep.subr.mxu0 0.0
          %2741 = vmatpush2.msra.mxu0 0.0
          %2742 = vmatprep.subr.mxu0 0.0
          %2743 = vmatpush2.msra.mxu0 0.0
          %2744 = vmatprep.subr.mxu0 0.0
          %2745 = vmatpush2.msra.mxu0 0.0
          %2746 = vmatprep.subr.mxu0 0.0
          %2747 = vmatpush2.msra.mxu0 0.0
          %2748 = vmatprep.subr.mxu0 0.0
          %2749 = vmatpush2.msra.mxu0 0.0
          %2750 = vmatprep.subr.mxu0 0.0
          %2751 = vmatpush2.msra.mxu0 0.0
          %2752 = vmatprep.subr.mxu0 0.0
          %2753 = vmatpush2.msra.mxu0 0.0
          %2754 = vmatprep.mubr.f32.mxu0 0.0
          %2755 = vmatmul.mubr.f32.gmra.mxu0 %v2688
          %v2756 = vpop.f32.mrf.mxu0
          %v2757 = vadd.f32 0.0, %v2756
          %v2758 = vpop.f32.mrf.mxu0
          %2759 = vdwg.mxu0
          %2761 = vrot.lane.b32.xlu0 %v2757, 8
          %v2762 = vpop.permute.xlu0 %2761
          %v2764 = vadd.f32 %v2583, %v2762
          %v2766 = vlaneseq
          %v2767 = vshrl.u32 %v2766, 7
          %v2768 = vsub.s32 0, %v2767
          %v2769 = vrot.slane %v983, %v2768
          %2770 = vrot.lane.b32.xlu0 %v2769, 8
          %v2771 = vpop.permute.xlu0 %2770
          %v2773 = vadd.f32 %v2764, %v2771
          %2775 = vrot.lane.b32.xlu0 %v2773, 120
          %v2776 = vpop.permute.xlu0 %2775
          %v2778 = vsel %vm1466, %v2776, 0.0
          %2779 = vadd.xlane.f32.xlu0 %v2778
          %v2780 = vpop.xlane.xlu0 %2779
          %v2781 = vmul.f32 %v2780, %v719
          %v2782 = vsub.f32 %v2773, %v2781
          %v2783 = vmul.f32 %v2782, %v2782
          %2785 = vrot.lane.b32.xlu0 %v2783, 120
          %v2786 = vpop.permute.xlu0 %2785
          %v2788 = vsel %vm1466, %v2786, 0.0
          %2789 = vadd.xlane.f32.xlu0 %v2788
          %v2790 = vpop.xlane.xlu0 %2789
          %v2791 = vmul.f32 %v2790, %v719
          %v2792 = vadd.f32 %v2791, 1e-05
          %v2793 = vrsqrt.pop %v2792
          %v2794 = vmul.f32 %v2782, %v2793
          %v2795 = vmul.f32 %v2794, 0.35355338
          %2797 = vrot.lane.b32.xlu0 %v2795, 120
          %v2798 = vpop.permute.xlu0 %2797
          %v2799 = vsel %vm712, %v2798, 0
          %v2802 = vsel %vm712, %v932, 0
          %2804 = vmatprep.subr.mxu0 0.0
          %2805 = vmatpush1.xpose.msra.mxu0 0.0
          %2806 = vmatprep.subr.mxu0 0.0
          %2807 = vmatpush1.xpose.msra.mxu0 0.0
          %2808 = vmatprep.subr.mxu0 0.0
          %2809 = vmatpush1.xpose.msra.mxu0 0.0
          %2810 = vmatprep.subr.mxu0 0.0
          %2811 = vmatpush1.xpose.msra.mxu0 0.0
          %2812 = vmatprep.subr.mxu0 0.0
          %2813 = vmatpush1.xpose.msra.mxu0 0.0
          %2814 = vmatprep.subr.mxu0 0.0
          %2815 = vmatpush1.xpose.msra.mxu0 0.0
          %2816 = vmatprep.subr.mxu0 0.0
          %2817 = vmatpush1.xpose.msra.mxu0 0.0
          %2818 = vmatprep.subr.mxu0 0.0
          %2819 = vmatpush1.xpose.msra.mxu0 0.0
          %2820 = vmatprep.subr.mxu0 0.0
          %2821 = vmatpush1.xpose.msra.mxu0 0.0
          %2822 = vmatprep.subr.mxu0 0.0
          %2823 = vmatpush1.xpose.msra.mxu0 0.0
          %2824 = vmatprep.subr.mxu0 0.0
          %2825 = vmatpush1.xpose.msra.mxu0 0.0
          %2826 = vmatprep.subr.mxu0 0.0
          %2827 = vmatpush1.xpose.msra.mxu0 0.0
          %2828 = vmatprep.subr.mxu0 0.0
          %2829 = vmatpush1.xpose.msra.mxu0 0.0
          %2830 = vmatprep.subr.mxu0 0.0
          %2831 = vmatpush1.xpose.msra.mxu0 0.0
          %2832 = vmatprep.subr.mxu0 0.0
          %2833 = vmatpush1.xpose.msra.mxu0 0.0
          %2834 = vmatprep.subr.mxu0 0.0
          %2835 = vmatpush1.xpose.msra.mxu0 %v2802
          %2836 = vmatprep.subr.mxu0 0.0
          %2837 = vmatpush2.xpose.msra.mxu0 0.0
          %2838 = vmatprep.subr.mxu0 0.0
          %2839 = vmatpush2.xpose.msra.mxu0 0.0
          %2840 = vmatprep.subr.mxu0 0.0
          %2841 = vmatpush2.xpose.msra.mxu0 0.0
          %2842 = vmatprep.subr.mxu0 0.0
          %2843 = vmatpush2.xpose.msra.mxu0 0.0
          %2844 = vmatprep.subr.mxu0 0.0
          %2845 = vmatpush2.xpose.msra.mxu0 0.0
          %2846 = vmatprep.subr.mxu0 0.0
          %2847 = vmatpush2.xpose.msra.mxu0 0.0
          %2848 = vmatprep.subr.mxu0 0.0
          %2849 = vmatpush2.xpose.msra.mxu0 0.0
          %2850 = vmatprep.subr.mxu0 0.0
          %2851 = vmatpush2.xpose.msra.mxu0 0.0
          %2852 = vmatprep.subr.mxu0 0.0
          %2853 = vmatpush2.xpose.msra.mxu0 0.0
          %2854 = vmatprep.subr.mxu0 0.0
          %2855 = vmatpush2.xpose.msra.mxu0 0.0
          %2856 = vmatprep.subr.mxu0 0.0
          %2857 = vmatpush2.xpose.msra.mxu0 0.0
          %2858 = vmatprep.subr.mxu0 0.0
          %2859 = vmatpush2.xpose.msra.mxu0 0.0
          %2860 = vmatprep.subr.mxu0 0.0
          %2861 = vmatpush2.xpose.msra.mxu0 0.0
          %2862 = vmatprep.subr.mxu0 0.0
          %2863 = vmatpush2.xpose.msra.mxu0 0.0
          %2864 = vmatprep.subr.mxu0 0.0
          %2865 = vmatpush2.xpose.msra.mxu0 0.0
          %2866 = vmatprep.subr.mxu0 0.0
          %2867 = vmatpush2.xpose.msra.mxu0 0.0
          %2868 = vmatprep.mubr.f32.mxu0 0.0
          %2869 = vmatmul.mubr.f32.gmra.mxu0 %v2799
          %v2870 = vpop.f32.mrf.mxu0
          %v2871 = vadd.f32 0.0, %v2870
          %v2872 = vpop.f32.mrf.mxu0
          %2873 = vdwg.mxu0
          %v2874 = vsel %vm1466, %v2871, -inf
          %2875 = vmax.xlane.f32.xlu0 %v2874
          %v2876 = vpop.xlane.xlu0 %2875
          %v2877 = vsub.f32 %v2871, %v2876
          %v2878 = vmul.f32 %v2877, 1.442695
          %v2879 = vpow.pop %v2878
          %v2880 = vsel %vm1466, %v2879, 0.0
          %2881 = vadd.xlane.f32.xlu0 %v2880
          %v2882 = vpop.xlane.xlu0 %2881
          %v2883 = vrcp.pop %v2882
          %v2884 = vmul.f32 %v2879, %v2883
          %v2886 = vsel %vm712, %v2884, 0
          %2888 = vmatprep.subr.mxu0 0.0
          %2889 = vmatpush1.msra.mxu0 0.0
          %2890 = vmatprep.subr.mxu0 0.0
          %2891 = vmatpush1.msra.mxu0 0.0
          %2892 = vmatprep.subr.mxu0 0.0
          %2893 = vmatpush1.msra.mxu0 0.0
          %2894 = vmatprep.subr.mxu0 0.0
          %2895 = vmatpush1.msra.mxu0 0.0
          %2896 = vmatprep.subr.mxu0 0.0
          %2897 = vmatpush1.msra.mxu0 0.0
          %2898 = vmatprep.subr.mxu0 0.0
          %2899 = vmatpush1.msra.mxu0 0.0
          %2900 = vmatprep.subr.mxu0 0.0
          %2901 = vmatpush1.msra.mxu0 0.0
          %2902 = vmatprep.subr.mxu0 0.0
          %2903 = vmatpush1.msra.mxu0 0.0
          %2904 = vmatprep.subr.mxu0 0.0
          %2905 = vmatpush1.msra.mxu0 0.0
          %2906 = vmatprep.subr.mxu0 0.0
          %2907 = vmatpush1.msra.mxu0 0.0
          %2908 = vmatprep.subr.mxu0 0.0
          %2909 = vmatpush1.msra.mxu0 0.0
          %2910 = vmatprep.subr.mxu0 0.0
          %2911 = vmatpush1.msra.mxu0 0.0
          %2912 = vmatprep.subr.mxu0 0.0
          %2913 = vmatpush1.msra.mxu0 0.0
          %2914 = vmatprep.subr.mxu0 0.0
          %2915 = vmatpush1.msra.mxu0 0.0
          %2916 = vmatprep.subr.mxu0 0.0
          %2917 = vmatpush1.msra.mxu0 0.0
          %2918 = vmatprep.subr.mxu0 0.0
          %2919 = vmatpush1.msra.mxu0 %v932
          %2920 = vmatprep.subr.mxu0 0.0
          %2921 = vmatpush2.msra.mxu0 0.0
          %2922 = vmatprep.subr.mxu0 0.0
          %2923 = vmatpush2.msra.mxu0 0.0
          %2924 = vmatprep.subr.mxu0 0.0
          %2925 = vmatpush2.msra.mxu0 0.0
          %2926 = vmatprep.subr.mxu0 0.0
          %2927 = vmatpush2.msra.mxu0 0.0
          %2928 = vmatprep.subr.mxu0 0.0
          %2929 = vmatpush2.msra.mxu0 0.0
          %2930 = vmatprep.subr.mxu0 0.0
          %2931 = vmatpush2.msra.mxu0 0.0
          %2932 = vmatprep.subr.mxu0 0.0
          %2933 = vmatpush2.msra.mxu0 0.0
          %2934 = vmatprep.subr.mxu0 0.0
          %2935 = vmatpush2.msra.mxu0 0.0
          %2936 = vmatprep.subr.mxu0 0.0
          %2937 = vmatpush2.msra.mxu0 0.0
          %2938 = vmatprep.subr.mxu0 0.0
          %2939 = vmatpush2.msra.mxu0 0.0
          %2940 = vmatprep.subr.mxu0 0.0
          %2941 = vmatpush2.msra.mxu0 0.0
          %2942 = vmatprep.subr.mxu0 0.0
          %2943 = vmatpush2.msra.mxu0 0.0
          %2944 = vmatprep.subr.mxu0 0.0
          %2945 = vmatpush2.msra.mxu0 0.0
          %2946 = vmatprep.subr.mxu0 0.0
          %2947 = vmatpush2.msra.mxu0 0.0
          %2948 = vmatprep.subr.mxu0 0.0
          %2949 = vmatpush2.msra.mxu0 0.0
          %2950 = vmatprep.subr.mxu0 0.0
          %2951 = vmatpush2.msra.mxu0 0.0
          %2952 = vmatprep.mubr.f32.mxu0 0.0
          %2953 = vmatmul.mubr.f32.gmra.mxu0 %v2886
          %v2954 = vpop.f32.mrf.mxu0
          %v2955 = vadd.f32 0.0, %v2954
          %v2956 = vpop.f32.mrf.mxu0
          %2957 = vdwg.mxu0
          %v2959 = vlaneseq
          %v2960 = vshrl.u32 %v2959, 7
          %v2961 = vsub.s32 0, %v2960
          %v2962 = vrot.slane %v952, %v2961
          %2964 = vrot.lane.b32.xlu0 %v1272, 104
          %v2965 = vpop.permute.xlu0 %2964
          %v2966 = vsel %vm712, %v2965, 0
          %2968 = vmatprep.subr.mxu0 0.0
          %2969 = vmatpush1.msra.mxu0 0.0
          %2970 = vmatprep.subr.mxu0 0.0
          %2971 = vmatpush1.msra.mxu0 0.0
          %2972 = vmatprep.subr.mxu0 0.0
          %2973 = vmatpush1.msra.mxu0 0.0
          %2974 = vmatprep.subr.mxu0 0.0
          %2975 = vmatpush1.msra.mxu0 0.0
          %2976 = vmatprep.subr.mxu0 0.0
          %2977 = vmatpush1.msra.mxu0 0.0
          %2978 = vmatprep.subr.mxu0 0.0
          %2979 = vmatpush1.msra.mxu0 0.0
          %2980 = vmatprep.subr.mxu0 0.0
          %2981 = vmatpush1.msra.mxu0 0.0
          %2982 = vmatprep.subr.mxu0 0.0
          %2983 = vmatpush1.msra.mxu0 0.0
          %2984 = vmatprep.subr.mxu0 0.0
          %2985 = vmatpush1.msra.mxu0 0.0
          %2986 = vmatprep.subr.mxu0 0.0
          %2987 = vmatpush1.msra.mxu0 0.0
          %2988 = vmatprep.subr.mxu0 0.0
          %2989 = vmatpush1.msra.mxu0 0.0
          %2990 = vmatprep.subr.mxu0 0.0
          %2991 = vmatpush1.msra.mxu0 0.0
          %2992 = vmatprep.subr.mxu0 0.0
          %2993 = vmatpush1.msra.mxu0 0.0
          %2994 = vmatprep.subr.mxu0 0.0
          %2995 = vmatpush1.msra.mxu0 0.0
          %2996 = vmatprep.subr.mxu0 0.0
          %2997 = vmatpush1.msra.mxu0 0.0
          %2998 = vmatprep.subr.mxu0 0.0
          %2999 = vmatpush1.msra.mxu0 %v944
          %3000 = vmatprep.subr.mxu0 0.0
          %3001 = vmatpush2.msra.mxu0 0.0
          %3002 = vmatprep.subr.mxu0 0.0
          %3003 = vmatpush2.msra.mxu0 0.0
          %3004 = vmatprep.subr.mxu0 0.0
          %3005 = vmatpush2.msra.mxu0 0.0
          %3006 = vmatprep.subr.mxu0 0.0
          %3007 = vmatpush2.msra.mxu0 0.0
          %3008 = vmatprep.subr.mxu0 0.0
          %3009 = vmatpush2.msra.mxu0 0.0
          %3010 = vmatprep.subr.mxu0 0.0
          %3011 = vmatpush2.msra.mxu0 0.0
          %3012 = vmatprep.subr.mxu0 0.0
          %3013 = vmatpush2.msra.mxu0 0.0
          %3014 = vmatprep.subr.mxu0 0.0
          %3015 = vmatpush2.msra.mxu0 0.0
          %3016 = vmatprep.subr.mxu0 0.0
          %3017 = vmatpush2.msra.mxu0 0.0
          %3018 = vmatprep.subr.mxu0 0.0
          %3019 = vmatpush2.msra.mxu0 0.0
          %3020 = vmatprep.subr.mxu0 0.0
          %3021 = vmatpush2.msra.mxu0 0.0
          %3022 = vmatprep.subr.mxu0 0.0
          %3023 = vmatpush2.msra.mxu0 0.0
          %3024 = vmatprep.subr.mxu0 0.0
          %3025 = vmatpush2.msra.mxu0 0.0
          %3026 = vmatprep.subr.mxu0 0.0
          %3027 = vmatpush2.msra.mxu0 0.0
          %3028 = vmatprep.subr.mxu0 0.0
          %3029 = vmatpush2.msra.mxu0 0.0
          %3030 = vmatprep.subr.mxu0 0.0
          %3031 = vmatpush2.msra.mxu0 0.0
          %3032 = vmatprep.mubr.f32.mxu0 0.0
          %3033 = vmatmul.mubr.f32.gmra.mxu0 %v2966
          %v3034 = vpop.f32.mrf.mxu0
          %v3035 = vadd.f32 %v2962, %v3034
          %v3036 = vpop.f32.mrf.mxu0
          %3037 = vdwg.mxu0
          %v3039 = vlaneseq
          %v3040 = vshrl.u32 %v3039, 7
          %v3041 = vsub.s32 0, %v3040
          %v3042 = vrot.slane %v956, %v3041
          %3044 = vrot.lane.b32.xlu0 %v992, 104
          %v3045 = vpop.permute.xlu0 %3044
          %v3046 = vsel %vm712, %v3045, 0
          %3048 = vmatprep.subr.mxu0 0.0
          %3049 = vmatpush1.msra.mxu0 0.0
          %3050 = vmatprep.subr.mxu0 0.0
          %3051 = vmatpush1.msra.mxu0 0.0
          %3052 = vmatprep.subr.mxu0 0.0
          %3053 = vmatpush1.msra.mxu0 0.0
          %3054 = vmatprep.subr.mxu0 0.0
          %3055 = vmatpush1.msra.mxu0 0.0
          %3056 = vmatprep.subr.mxu0 0.0
          %3057 = vmatpush1.msra.mxu0 0.0
          %3058 = vmatprep.subr.mxu0 0.0
          %3059 = vmatpush1.msra.mxu0 0.0
          %3060 = vmatprep.subr.mxu0 0.0
          %3061 = vmatpush1.msra.mxu0 0.0
          %3062 = vmatprep.subr.mxu0 0.0
          %3063 = vmatpush1.msra.mxu0 0.0
          %3064 = vmatprep.subr.mxu0 0.0
          %3065 = vmatpush1.msra.mxu0 0.0
          %3066 = vmatprep.subr.mxu0 0.0
          %3067 = vmatpush1.msra.mxu0 0.0
          %3068 = vmatprep.subr.mxu0 0.0
          %3069 = vmatpush1.msra.mxu0 0.0
          %3070 = vmatprep.subr.mxu0 0.0
          %3071 = vmatpush1.msra.mxu0 0.0
          %3072 = vmatprep.subr.mxu0 0.0
          %3073 = vmatpush1.msra.mxu0 0.0
          %3074 = vmatprep.subr.mxu0 0.0
          %3075 = vmatpush1.msra.mxu0 0.0
          %3076 = vmatprep.subr.mxu0 0.0
          %3077 = vmatpush1.msra.mxu0 0.0
          %3078 = vmatprep.subr.mxu0 0.0
          %3079 = vmatpush1.msra.mxu0 %v948
          %3080 = vmatprep.subr.mxu0 0.0
          %3081 = vmatpush2.msra.mxu0 0.0
          %3082 = vmatprep.subr.mxu0 0.0
          %3083 = vmatpush2.msra.mxu0 0.0
          %3084 = vmatprep.subr.mxu0 0.0
          %3085 = vmatpush2.msra.mxu0 0.0
          %3086 = vmatprep.subr.mxu0 0.0
          %3087 = vmatpush2.msra.mxu0 0.0
          %3088 = vmatprep.subr.mxu0 0.0
          %3089 = vmatpush2.msra.mxu0 0.0
          %3090 = vmatprep.subr.mxu0 0.0
          %3091 = vmatpush2.msra.mxu0 0.0
          %3092 = vmatprep.subr.mxu0 0.0
          %3093 = vmatpush2.msra.mxu0 0.0
          %3094 = vmatprep.subr.mxu0 0.0
          %3095 = vmatpush2.msra.mxu0 0.0
          %3096 = vmatprep.subr.mxu0 0.0
          %3097 = vmatpush2.msra.mxu0 0.0
          %3098 = vmatprep.subr.mxu0 0.0
          %3099 = vmatpush2.msra.mxu0 0.0
          %3100 = vmatprep.subr.mxu0 0.0
          %3101 = vmatpush2.msra.mxu0 0.0
          %3102 = vmatprep.subr.mxu0 0.0
          %3103 = vmatpush2.msra.mxu0 0.0
          %3104 = vmatprep.subr.mxu0 0.0
          %3105 = vmatpush2.msra.mxu0 0.0
          %3106 = vmatprep.subr.mxu0 0.0
          %3107 = vmatpush2.msra.mxu0 0.0
          %3108 = vmatprep.subr.mxu0 0.0
          %3109 = vmatpush2.msra.mxu0 0.0
          %3110 = vmatprep.subr.mxu0 0.0
          %3111 = vmatpush2.msra.mxu0 0.0
          %3112 = vmatprep.mubr.f32.mxu0 0.0
          %3113 = vmatmul.mubr.f32.gmra.mxu0 %v3046
          %v3114 = vpop.f32.mrf.mxu0
          %v3115 = vadd.f32 %v3042, %v3114
          %v3116 = vpop.f32.mrf.mxu0
          %3117 = vdwg.mxu0
          %v3118 = vadd.f32 %v3035, %v3115
          %v3119 = vxor.u32 %v3118, 2147483648
          %v3120 = vmul.f32 %v3119, 1.442695
          %v3121 = vpow.pop %v3120
          %v3122 = vadd.f32 %v3121, 1.0
          %v3123 = vrcp.pop %v3122
          %v3124 = vmul.f32 1.0, %v3123
          %3126 = vrot.lane.b32.xlu0 %v3115, 112
          %v3127 = vpop.permute.xlu0 %3126
          %v3129 = vmul.f32 %v3124, %v3127
          %3131 = vrot.lane.b32.xlu0 %v3129, 16
          %v3132 = vpop.permute.xlu0 %3131
          %v3134 = vadd.f32 %v3035, %v3132
          %v3135 = vtanh.pop %v3134
          %v3136 = vsub.f32 1.0, %v3124
          %3138 = vrot.lane.b32.xlu0 %v3135, 120
          %v3139 = vpop.permute.xlu0 %3138
          %v3141 = vmul.f32 %v3136, %v3139
          %v3143 = vmul.f32 %v3124, %v2484
          %v3144 = vadd.f32 %v3141, %v3143
          %3146 = vrot.lane.b32.xlu0 %v3144, 120
          %v3147 = vpop.permute.xlu0 %3146
          %v3149 = vsel %vm1466, %v3147, 0.0
          %3150 = vadd.xlane.f32.xlu0 %v3149
          %v3151 = vpop.xlane.xlu0 %3150
          %v3152 = vmul.f32 %v3151, %v719
          %v3153 = vsub.f32 %v3144, %v3152
          %v3154 = vmul.f32 %v3153, %v3153
          %3156 = vrot.lane.b32.xlu0 %v3154, 120
          %v3157 = vpop.permute.xlu0 %3156
          %v3159 = vsel %vm1466, %v3157, 0.0
          %3160 = vadd.xlane.f32.xlu0 %v3159
          %v3161 = vpop.xlane.xlu0 %3160
          %v3162 = vmul.f32 %v3161, %v719
          %v3163 = vadd.f32 %v3162, 1e-05
          %v3164 = vrsqrt.pop %v3163
          %v3165 = vmul.f32 %v3153, %v3164
          %v3167 = vlaneseq
          %v3168 = vshrl.u32 %v3167, 7
          %v3169 = vsub.s32 0, %v3168
          %v3170 = vrot.slane %v964, %v3169
          %3173 = vrot.lane.b32.xlu0 %v3165, 120
          %v3174 = vpop.permute.xlu0 %3173
          %v3175 = vsel %vm712, %v3174, 0
          %3177 = vmatprep.subr.mxu0 0.0
          %3178 = vmatpush1.msra.mxu0 0.0
          %3179 = vmatprep.subr.mxu0 0.0
          %3180 = vmatpush1.msra.mxu0 0.0
          %3181 = vmatprep.subr.mxu0 0.0
          %3182 = vmatpush1.msra.mxu0 0.0
          %3183 = vmatprep.subr.mxu0 0.0
          %3184 = vmatpush1.msra.mxu0 0.0
          %3185 = vmatprep.subr.mxu0 0.0
          %3186 = vmatpush1.msra.mxu0 0.0
          %3187 = vmatprep.subr.mxu0 0.0
          %3188 = vmatpush1.msra.mxu0 0.0
          %3189 = vmatprep.subr.mxu0 0.0
          %3190 = vmatpush1.msra.mxu0 0.0
          %3191 = vmatprep.subr.mxu0 0.0
          %3192 = vmatpush1.msra.mxu0 0.0
          %3193 = vmatprep.subr.mxu0 0.0
          %3194 = vmatpush1.msra.mxu0 0.0
          %3195 = vmatprep.subr.mxu0 0.0
          %3196 = vmatpush1.msra.mxu0 0.0
          %3197 = vmatprep.subr.mxu0 0.0
          %3198 = vmatpush1.msra.mxu0 0.0
          %3199 = vmatprep.subr.mxu0 0.0
          %3200 = vmatpush1.msra.mxu0 0.0
          %3201 = vmatprep.subr.mxu0 0.0
          %3202 = vmatpush1.msra.mxu0 0.0
          %3203 = vmatprep.subr.mxu0 0.0
          %3204 = vmatpush1.msra.mxu0 0.0
          %3205 = vmatprep.subr.mxu0 0.0
          %3206 = vmatpush1.msra.mxu0 0.0
          %3207 = vmatprep.subr.mxu0 0.0
          %3208 = vmatpush1.msra.mxu0 %v960
          %3209 = vmatprep.subr.mxu0 0.0
          %3210 = vmatpush2.msra.mxu0 0.0
          %3211 = vmatprep.subr.mxu0 0.0
          %3212 = vmatpush2.msra.mxu0 0.0
          %3213 = vmatprep.subr.mxu0 0.0
          %3214 = vmatpush2.msra.mxu0 0.0
          %3215 = vmatprep.subr.mxu0 0.0
          %3216 = vmatpush2.msra.mxu0 0.0
          %3217 = vmatprep.subr.mxu0 0.0
          %3218 = vmatpush2.msra.mxu0 0.0
          %3219 = vmatprep.subr.mxu0 0.0
          %3220 = vmatpush2.msra.mxu0 0.0
          %3221 = vmatprep.subr.mxu0 0.0
          %3222 = vmatpush2.msra.mxu0 0.0
          %3223 = vmatprep.subr.mxu0 0.0
          %3224 = vmatpush2.msra.mxu0 0.0
          %3225 = vmatprep.subr.mxu0 0.0
          %3226 = vmatpush2.msra.mxu0 0.0
          %3227 = vmatprep.subr.mxu0 0.0
          %3228 = vmatpush2.msra.mxu0 0.0
          %3229 = vmatprep.subr.mxu0 0.0
          %3230 = vmatpush2.msra.mxu0 0.0
          %3231 = vmatprep.subr.mxu0 0.0
          %3232 = vmatpush2.msra.mxu0 0.0
          %3233 = vmatprep.subr.mxu0 0.0
          %3234 = vmatpush2.msra.mxu0 0.0
          %3235 = vmatprep.subr.mxu0 0.0
          %3236 = vmatpush2.msra.mxu0 0.0
          %3237 = vmatprep.subr.mxu0 0.0
          %3238 = vmatpush2.msra.mxu0 0.0
          %3239 = vmatprep.subr.mxu0 0.0
          %3240 = vmatpush2.msra.mxu0 0.0
          %3241 = vmatprep.mubr.f32.mxu0 0.0
          %3242 = vmatmul.mubr.f32.gmra.mxu0 %v3175
          %v3243 = vpop.f32.mrf.mxu0
          %v3244 = vadd.f32 %v3170, %v3243
          %v3245 = vpop.f32.mrf.mxu0
          %3246 = vdwg.mxu0
          %v3247 = vmax.f32 %v3244, 0.0
          %v3249 = vsel %vm1029, %v3247, 0
          %3251 = vmatprep.subr.mxu0 0.0
          %3252 = vmatpush1.msra.mxu0 0.0
          %3253 = vmatprep.subr.mxu0 0.0
          %3254 = vmatpush1.msra.mxu0 0.0
          %3255 = vmatprep.subr.mxu0 0.0
          %3256 = vmatpush1.msra.mxu0 0.0
          %3257 = vmatprep.subr.mxu0 0.0
          %3258 = vmatpush1.msra.mxu0 0.0
          %3259 = vmatprep.subr.mxu0 0.0
          %3260 = vmatpush1.msra.mxu0 0.0
          %3261 = vmatprep.subr.mxu0 0.0
          %3262 = vmatpush1.msra.mxu0 0.0
          %3263 = vmatprep.subr.mxu0 0.0
          %3264 = vmatpush1.msra.mxu0 0.0
          %3265 = vmatprep.subr.mxu0 0.0
          %3266 = vmatpush1.msra.mxu0 0.0
          %3267 = vmatprep.subr.mxu0 0.0
          %3268 = vmatpush1.msra.mxu0 0.0
          %3269 = vmatprep.subr.mxu0 0.0
          %3270 = vmatpush1.msra.mxu0 0.0
          %3271 = vmatprep.subr.mxu0 0.0
          %3272 = vmatpush1.msra.mxu0 0.0
          %3273 = vmatprep.subr.mxu0 0.0
          %3274 = vmatpush1.msra.mxu0 0.0
          %3275 = vmatprep.subr.mxu0 0.0
          %3276 = vmatpush1.msra.mxu0 %v980
          %3277 = vmatprep.subr.mxu0 0.0
          %3278 = vmatpush1.msra.mxu0 %v979
          %3279 = vmatprep.subr.mxu0 0.0
          %3280 = vmatpush1.msra.mxu0 %v978
          %3281 = vmatprep.subr.mxu0 0.0
          %3282 = vmatpush1.msra.mxu0 %v977
          %3283 = vmatprep.subr.mxu0 0.0
          %3284 = vmatpush2.msra.mxu0 0.0
          %3285 = vmatprep.subr.mxu0 0.0
          %3286 = vmatpush2.msra.mxu0 0.0
          %3287 = vmatprep.subr.mxu0 0.0
          %3288 = vmatpush2.msra.mxu0 0.0
          %3289 = vmatprep.subr.mxu0 0.0
          %3290 = vmatpush2.msra.mxu0 0.0
          %3291 = vmatprep.subr.mxu0 0.0
          %3292 = vmatpush2.msra.mxu0 0.0
          %3293 = vmatprep.subr.mxu0 0.0
          %3294 = vmatpush2.msra.mxu0 0.0
          %3295 = vmatprep.subr.mxu0 0.0
          %3296 = vmatpush2.msra.mxu0 0.0
          %3297 = vmatprep.subr.mxu0 0.0
          %3298 = vmatpush2.msra.mxu0 0.0
          %3299 = vmatprep.subr.mxu0 0.0
          %3300 = vmatpush2.msra.mxu0 0.0
          %3301 = vmatprep.subr.mxu0 0.0
          %3302 = vmatpush2.msra.mxu0 0.0
          %3303 = vmatprep.subr.mxu0 0.0
          %3304 = vmatpush2.msra.mxu0 0.0
          %3305 = vmatprep.subr.mxu0 0.0
          %3306 = vmatpush2.msra.mxu0 0.0
          %3307 = vmatprep.subr.mxu0 0.0
          %3308 = vmatpush2.msra.mxu0 0.0
          %3309 = vmatprep.subr.mxu0 0.0
          %3310 = vmatpush2.msra.mxu0 0.0
          %3311 = vmatprep.subr.mxu0 0.0
          %3312 = vmatpush2.msra.mxu0 0.0
          %3313 = vmatprep.subr.mxu0 0.0
          %3314 = vmatpush2.msra.mxu0 0.0
          %3315 = vmatprep.mubr.f32.mxu0 0.0
          %3316 = vmatmul.mubr.f32.gmra.mxu0 %v3249
          %v3317 = vpop.f32.mrf.mxu0
          %v3318 = vadd.f32 0.0, %v3317
          %v3319 = vpop.f32.mrf.mxu0
          %3320 = vdwg.mxu0
          %3322 = vrot.lane.b32.xlu0 %v3318, 8
          %v3323 = vpop.permute.xlu0 %3322
          %v3325 = vadd.f32 %v3144, %v3323
          %v3327 = vlaneseq
          %v3328 = vshrl.u32 %v3327, 7
          %v3329 = vsub.s32 0, %v3328
          %v3330 = vrot.slane %v984, %v3329
          %3331 = vrot.lane.b32.xlu0 %v3330, 8
          %v3332 = vpop.permute.xlu0 %3331
          %v3334 = vadd.f32 %v3325, %v3332
          %3336 = vrot.lane.b32.xlu0 %v3334, 120
          %v3337 = vpop.permute.xlu0 %3336
          %v3339 = vsel %vm1466, %v3337, 0.0
          %3340 = vadd.xlane.f32.xlu0 %v3339
          %v3341 = vpop.xlane.xlu0 %3340
          %v3342 = vmul.f32 %v3341, %v719
          %v3343 = vsub.f32 %v3334, %v3342
          %v3344 = vmul.f32 %v3343, %v3343
          %3346 = vrot.lane.b32.xlu0 %v3344, 120
          %v3347 = vpop.permute.xlu0 %3346
          %v3349 = vsel %vm1466, %v3347, 0.0
          %3350 = vadd.xlane.f32.xlu0 %v3349
          %v3351 = vpop.xlane.xlu0 %3350
          %v3352 = vmul.f32 %v3351, %v719
          %v3353 = vadd.f32 %v3352, 1e-05
          %v3354 = vrsqrt.pop %v3353
          %v3355 = vmul.f32 %v3343, %v3354
          %v3356 = vmul.f32 %v3355, 0.35355338
          %3358 = vrot.lane.b32.xlu0 %v3356, 120
          %v3359 = vpop.permute.xlu0 %3358
          %v3360 = vsel %vm712, %v3359, 0
          %v3363 = vsel %vm712, %v933, 0
          %3365 = vmatprep.subr.mxu0 0.0
          %3366 = vmatpush1.xpose.msra.mxu0 0.0
          %3367 = vmatprep.subr.mxu0 0.0
          %3368 = vmatpush1.xpose.msra.mxu0 0.0
          %3369 = vmatprep.subr.mxu0 0.0
          %3370 = vmatpush1.xpose.msra.mxu0 0.0
          %3371 = vmatprep.subr.mxu0 0.0
          %3372 = vmatpush1.xpose.msra.mxu0 0.0
          %3373 = vmatprep.subr.mxu0 0.0
          %3374 = vmatpush1.xpose.msra.mxu0 0.0
          %3375 = vmatprep.subr.mxu0 0.0
          %3376 = vmatpush1.xpose.msra.mxu0 0.0
          %3377 = vmatprep.subr.mxu0 0.0
          %3378 = vmatpush1.xpose.msra.mxu0 0.0
          %3379 = vmatprep.subr.mxu0 0.0
          %3380 = vmatpush1.xpose.msra.mxu0 0.0
          %3381 = vmatprep.subr.mxu0 0.0
          %3382 = vmatpush1.xpose.msra.mxu0 0.0
          %3383 = vmatprep.subr.mxu0 0.0
          %3384 = vmatpush1.xpose.msra.mxu0 0.0
          %3385 = vmatprep.subr.mxu0 0.0
          %3386 = vmatpush1.xpose.msra.mxu0 0.0
          %3387 = vmatprep.subr.mxu0 0.0
          %3388 = vmatpush1.xpose.msra.mxu0 0.0
          %3389 = vmatprep.subr.mxu0 0.0
          %3390 = vmatpush1.xpose.msra.mxu0 0.0
          %3391 = vmatprep.subr.mxu0 0.0
          %3392 = vmatpush1.xpose.msra.mxu0 0.0
          %3393 = vmatprep.subr.mxu0 0.0
          %3394 = vmatpush1.xpose.msra.mxu0 0.0
          %3395 = vmatprep.subr.mxu0 0.0
          %3396 = vmatpush1.xpose.msra.mxu0 %v3363
          %3397 = vmatprep.subr.mxu0 0.0
          %3398 = vmatpush2.xpose.msra.mxu0 0.0
          %3399 = vmatprep.subr.mxu0 0.0
          %3400 = vmatpush2.xpose.msra.mxu0 0.0
          %3401 = vmatprep.subr.mxu0 0.0
          %3402 = vmatpush2.xpose.msra.mxu0 0.0
          %3403 = vmatprep.subr.mxu0 0.0
          %3404 = vmatpush2.xpose.msra.mxu0 0.0
          %3405 = vmatprep.subr.mxu0 0.0
          %3406 = vmatpush2.xpose.msra.mxu0 0.0
          %3407 = vmatprep.subr.mxu0 0.0
          %3408 = vmatpush2.xpose.msra.mxu0 0.0
          %3409 = vmatprep.subr.mxu0 0.0
          %3410 = vmatpush2.xpose.msra.mxu0 0.0
          %3411 = vmatprep.subr.mxu0 0.0
          %3412 = vmatpush2.xpose.msra.mxu0 0.0
          %3413 = vmatprep.subr.mxu0 0.0
          %3414 = vmatpush2.xpose.msra.mxu0 0.0
          %3415 = vmatprep.subr.mxu0 0.0
          %3416 = vmatpush2.xpose.msra.mxu0 0.0
          %3417 = vmatprep.subr.mxu0 0.0
          %3418 = vmatpush2.xpose.msra.mxu0 0.0
          %3419 = vmatprep.subr.mxu0 0.0
          %3420 = vmatpush2.xpose.msra.mxu0 0.0
          %3421 = vmatprep.subr.mxu0 0.0
          %3422 = vmatpush2.xpose.msra.mxu0 0.0
          %3423 = vmatprep.subr.mxu0 0.0
          %3424 = vmatpush2.xpose.msra.mxu0 0.0
          %3425 = vmatprep.subr.mxu0 0.0
          %3426 = vmatpush2.xpose.msra.mxu0 0.0
          %3427 = vmatprep.subr.mxu0 0.0
          %3428 = vmatpush2.xpose.msra.mxu0 0.0
          %3429 = vmatprep.mubr.f32.mxu0 0.0
          %3430 = vmatmul.mubr.f32.gmra.mxu0 %v3360
          %v3431 = vpop.f32.mrf.mxu0
          %v3432 = vadd.f32 0.0, %v3431
          %v3433 = vpop.f32.mrf.mxu0
          %3434 = vdwg.mxu0
          %v3435 = vsel %vm1466, %v3432, -inf
          %3436 = vmax.xlane.f32.xlu0 %v3435
          %v3437 = vpop.xlane.xlu0 %3436
          %v3438 = vsub.f32 %v3432, %v3437
          %v3439 = vmul.f32 %v3438, 1.442695
          %v3440 = vpow.pop %v3439
          %v3441 = vsel %vm1466, %v3440, 0.0
          %3442 = vadd.xlane.f32.xlu0 %v3441
          %v3443 = vpop.xlane.xlu0 %3442
          %v3444 = vrcp.pop %v3443
          %v3445 = vmul.f32 %v3440, %v3444
          %v3447 = vsel %vm712, %v3445, 0
          %3449 = vmatprep.subr.mxu0 0.0
          %3450 = vmatpush1.msra.mxu0 0.0
          %3451 = vmatprep.subr.mxu0 0.0
          %3452 = vmatpush1.msra.mxu0 0.0
          %3453 = vmatprep.subr.mxu0 0.0
          %3454 = vmatpush1.msra.mxu0 0.0
          %3455 = vmatprep.subr.mxu0 0.0
          %3456 = vmatpush1.msra.mxu0 0.0
          %3457 = vmatprep.subr.mxu0 0.0
          %3458 = vmatpush1.msra.mxu0 0.0
          %3459 = vmatprep.subr.mxu0 0.0
          %3460 = vmatpush1.msra.mxu0 0.0
          %3461 = vmatprep.subr.mxu0 0.0
          %3462 = vmatpush1.msra.mxu0 0.0
          %3463 = vmatprep.subr.mxu0 0.0
          %3464 = vmatpush1.msra.mxu0 0.0
          %3465 = vmatprep.subr.mxu0 0.0
          %3466 = vmatpush1.msra.mxu0 0.0
          %3467 = vmatprep.subr.mxu0 0.0
          %3468 = vmatpush1.msra.mxu0 0.0
          %3469 = vmatprep.subr.mxu0 0.0
          %3470 = vmatpush1.msra.mxu0 0.0
          %3471 = vmatprep.subr.mxu0 0.0
          %3472 = vmatpush1.msra.mxu0 0.0
          %3473 = vmatprep.subr.mxu0 0.0
          %3474 = vmatpush1.msra.mxu0 0.0
          %3475 = vmatprep.subr.mxu0 0.0
          %3476 = vmatpush1.msra.mxu0 0.0
          %3477 = vmatprep.subr.mxu0 0.0
          %3478 = vmatpush1.msra.mxu0 0.0
          %3479 = vmatprep.subr.mxu0 0.0
          %3480 = vmatpush1.msra.mxu0 %v933
          %3481 = vmatprep.subr.mxu0 0.0
          %3482 = vmatpush2.msra.mxu0 0.0
          %3483 = vmatprep.subr.mxu0 0.0
          %3484 = vmatpush2.msra.mxu0 0.0
          %3485 = vmatprep.subr.mxu0 0.0
          %3486 = vmatpush2.msra.mxu0 0.0
          %3487 = vmatprep.subr.mxu0 0.0
          %3488 = vmatpush2.msra.mxu0 0.0
          %3489 = vmatprep.subr.mxu0 0.0
          %3490 = vmatpush2.msra.mxu0 0.0
          %3491 = vmatprep.subr.mxu0 0.0
          %3492 = vmatpush2.msra.mxu0 0.0
          %3493 = vmatprep.subr.mxu0 0.0
          %3494 = vmatpush2.msra.mxu0 0.0
          %3495 = vmatprep.subr.mxu0 0.0
          %3496 = vmatpush2.msra.mxu0 0.0
          %3497 = vmatprep.subr.mxu0 0.0
          %3498 = vmatpush2.msra.mxu0 0.0
          %3499 = vmatprep.subr.mxu0 0.0
          %3500 = vmatpush2.msra.mxu0 0.0
          %3501 = vmatprep.subr.mxu0 0.0
          %3502 = vmatpush2.msra.mxu0 0.0
          %3503 = vmatprep.subr.mxu0 0.0
          %3504 = vmatpush2.msra.mxu0 0.0
          %3505 = vmatprep.subr.mxu0 0.0
          %3506 = vmatpush2.msra.mxu0 0.0
          %3507 = vmatprep.subr.mxu0 0.0
          %3508 = vmatpush2.msra.mxu0 0.0
          %3509 = vmatprep.subr.mxu0 0.0
          %3510 = vmatpush2.msra.mxu0 0.0
          %3511 = vmatprep.subr.mxu0 0.0
          %3512 = vmatpush2.msra.mxu0 0.0
          %3513 = vmatprep.mubr.f32.mxu0 0.0
          %3514 = vmatmul.mubr.f32.gmra.mxu0 %v3447
          %v3515 = vpop.f32.mrf.mxu0
          %v3516 = vadd.f32 0.0, %v3515
          %v3517 = vpop.f32.mrf.mxu0
          %3518 = vdwg.mxu0
          %3520 = vrot.lane.b32.xlu0 %v2394, 8
          %v3521 = vpop.permute.xlu0 %3520
          %3524 = vrot.lane.b32.xlu0 %v2955, 16
          %v3525 = vpop.permute.xlu0 %3524
          %3528 = vrot.lane.b32.xlu0 %v3516, 24
          %v3529 = vpop.permute.xlu0 %3528
          %v3531 = vsel %vm712, %v1834, %v3521
          %v3532 = vsel %vm1201, %v3531, %v3525
          %vm3533 = vcmask 195584
          %v3534 = vsel %vm3533, %v3532, %v3529
        $region109: #{sysbinder_forward.3} parent=103 // loop_footer
          %s991 = sadd.s32 1, %s987
        $region110: #{sysbinder_forward.3} parent=103 // loop_footer_branch
          %986 = sbr.rel target = $region106
        $region111: #{sysbinder_forward.3} parent=103 // loop_exit
          _
        %vm3535 = vcmask 257024
        %3536 = vst.msk [vmem:[%s693] sm:$0xf] %vm3535, %v992
        %vm3537 = vcmask 125952
        %3538 = vst.msk [vmem:[%s700] sm:$0xf] %vm3537, %v993
        %s3539 = sand.u32 %s499, 1
        %s3540 = scalar_lea.sflag [#allocation3], %s3539
        %s3541 = sand.u32 %s499, 1
        %s3542 = smul.addr %s3541, 4
        %s3543 = scalar_lea.vmem [#allocation2], %s3542
        %s3544 = sand.u32 %s525, 1
        %s3545 = scalar_lea.sflag [#allocation5], %s3544
        %s3546 = sand.u32 %s525, 1
        %s3547 = smul.addr %s3546, 4
        %s3548 = scalar_lea.vmem [#allocation4], %s3547
        // Predicated region
        $region112: #{sysbinder_forward.3} parent=103 // pred_check
          %p3549 = pneg %p509
        $region113: #{sysbinder_forward.3} parent=103 // pred_check_branch
          %3551 = sbr.rel (%p3549) target = $region115
        $region114: #{sysbinder_forward.3} parent=103 // pred_region
          %s3553 = ssub.s32 64, 64
          %3554 = vsyncadd %s3540, %s3553
          %s3555 = smul.addr %s40, 64
          %s3556 = scalar_lea.hbm %s21, %s3555
          %s3558 = sshll.u32 %s3543, 4
          %s3559 = int_to_ptr.vmem [resolvable:$true] %s3558
          %3561 = dma.vmem_to_hbm [thread:$0]  %s3559, 64, %s3556, %s3540
        $region115: #{sysbinder_forward.3} parent=103 // pred_fallthru
          _
        // Predicated region
        $region116: #{sysbinder_forward.3} parent=103 // pred_check
          %p3562 = pneg %p535
        $region117: #{sysbinder_forward.3} parent=103 // pred_check_branch
          %3564 = sbr.rel (%p3562) target = $region119
        $region118: #{sysbinder_forward.3} parent=103 // pred_region
          %s3566 = ssub.s32 64, 64
          %3567 = vsyncadd %s3545, %s3566
          %s3568 = smul.addr %s40, 64
          %s3569 = scalar_lea.hbm %s22, %s3568
          %s3571 = sshll.u32 %s3548, 4
          %s3572 = int_to_ptr.vmem [resolvable:$true] %s3571
          %3574 = dma.vmem_to_hbm [thread:$0]  %s3572, 64, %s3569, %s3545
        $region119: #{sysbinder_forward.3} parent=103 // pred_fallthru
          _
      $region104: #{sysbinder_forward.3} parent=5 // pred_fallthru
        _
      %p3575 = scmp.le.s32.totalorder 2, %s35
      // Predicated region
      $region120: #{sysbinder_forward.3} parent=5 // pred_check
        %p3576 = pneg %p3575
      $region121: #{sysbinder_forward.3} parent=5 // pred_check_branch
        %3578 = sbr.rel (%p3576) target = $region123
      $region122: #{sysbinder_forward.3} parent=5 // pred_region
        %s3579 = ssub.s32 %s35, 2
        // Predicated region
        $region124: #{sysbinder_forward.3} parent=122 // pred_check
          %p3580 = pneg %p515
        $region125: #{sysbinder_forward.3} parent=122 // pred_check_branch
          %3582 = sbr.rel (%p3580) target = $region127
        $region126: #{sysbinder_forward.3} parent=122 // pred_region
          %s3583 = sand.u32 %s500, 1
          %s3584 = scalar_lea.sflag [#allocation3], %s3583
          %s3585 = sand.u32 %s500, 1
          %s3586 = smul.addr %s3585, 4
          %s3587 = scalar_lea.vmem [#allocation2], %s3586
          %3588 = dma.done %s3584, 64
        $region127: #{sysbinder_forward.3} parent=122 // pred_fallthru
          _
        // Predicated region
        $region128: #{sysbinder_forward.3} parent=122 // pred_check
          %p3589 = pneg %p541
        $region129: #{sysbinder_forward.3} parent=122 // pred_check_branch
          %3591 = sbr.rel (%p3589) target = $region131
        $region130: #{sysbinder_forward.3} parent=122 // pred_region
          %s3592 = sand.u32 %s526, 1
          %s3593 = scalar_lea.sflag [#allocation5], %s3592
          %s3594 = sand.u32 %s526, 1
          %s3595 = smul.addr %s3594, 4
          %s3596 = scalar_lea.vmem [#allocation4], %s3595
          %3597 = dma.done %s3593, 64
        $region131: #{sysbinder_forward.3} parent=122 // pred_fallthru
          _
      $region123: #{sysbinder_forward.3} parent=5 // pred_fallthru
        _
    $region6: #{sysbinder_forward.3} parent=1 // loop_footer
      %s39 = sadd.s32 1, %s35
    $region7: #{sysbinder_forward.3} parent=1 // loop_footer_branch
      %34 = sbr.rel target = $region3
    $region8: #{sysbinder_forward.3} parent=1 // loop_exit
      _
    %3598 = vsyncpa [#allocation3], 1
    %s3599 = scalar_lea.sflag [#allocation3], 1
    %3600 = vsyncpa %s3599, 1
    %3601 = vsyncpa [#allocation5], 1
    %s3602 = scalar_lea.sflag [#allocation5], 1
    %3603 = vsyncpa %s3602, 1

</llo_original>
